<compile_context>
chip_gen: v6e
topology: v6e:2x2x1
jax: 0.10.0
libtpu: 0.0.40
codegen_flags: <defaults>
</compile_context>

<pallas_src>
import jax
import jax.numpy as jnp
from jax import lax
from jax.experimental import pallas as pl
from jax.experimental.pallas import tpu as pltpu

LANE = 128


def _ceil_to(n, m):
    return -(-n // m) * m


# ---------------------------------------------------------------------------
# Kernels
# ---------------------------------------------------------------------------
def _make_downscale_kernel(h, w2, c_real, c_store, kp):
    """4x4 / stride-2 / pad-1 conv on one NHWC image, one MXU dot per image.

    The wrapper delivers the image as a column-pairs view (H, W/2, 2*c_store)
    (free reshape).  Real channels are written (bf16, cast once) into a flat
    zero-padded scratch with padded pair-width WPP = W/2 + 2, so every one of
    the 16 taps is a shifted sublane slice:

      y[oh, ow] = sum_{kh,kw} Pf[2*oh*WPP + ow + kh*WPP + dp(kw), q(kw)*C:+C] @ W[kh, kw]

    All 16 taps concatenate along lanes into a single (MB, kp) bf16 patch
    (K = 16*C padded once to kp=128) feeding one dot; bias is added once.
    MB = (H-1)*WPP covers all band positions o = 2*oh*WPP + ow; junk rows/cols
    are sliced off by the wrapper (lane-dense output store).
    """
    wpp = w2 + 2
    mb = (h - 1) * wpp
    kreal = 16 * c_real
    fill = kp - kreal
    dp = (0, 1, 1, 2)   # pair-column offset per kw (from stride-2 + pad-1 geometry)
    qq = (1, 0, 1, 0)   # even/odd sub-column per kw

    def kernel(x_ref, w_ref, b_ref, o_ref, pf_ref):
        # pf_ref holds only the real channels in bf16 -> zeroing it per step is tiny,
        # and is correct under megacore "parallel" sharding of the batch axis.
        pf_ref[...] = jnp.zeros_like(pf_ref)
        for r in range(h):                                    # static sublane offsets
            base = (r + 1) * wpp + 1
            row = x_ref[0, r]                                 # (w2, 2*c_store) f32
            pf_ref[base:base + w2, 0:c_real] = row[:, 0:c_real].astype(jnp.bfloat16)
            pf_ref[base:base + w2, c_real:2 * c_real] = (
                row[:, c_store:c_store + c_real].astype(jnp.bfloat16))

        pieces = []
        for kh in range(4):
            for kw in range(4):
                off = kh * wpp + dp[kw]
                lane0 = qq[kw] * c_real
                pieces.append(pf_ref[off:off + mb, lane0:lane0 + c_real])
        if fill:
            pieces.append(jnp.zeros((mb, fill), jnp.bfloat16))
        patch = jnp.concatenate(pieces, axis=-1)              # (mb, kp) bf16
        acc = jnp.dot(patch, w_ref[...], preferred_element_type=jnp.float32)
        o_ref[0] = acc + b_ref[...]                           # bias added once

    return kernel


def _make_blocks_kernel(h, w, c_real, c_store, num_blocks, kp3):
    """All ResidualBlocks (+ trailing ReLUs) and the final 3x3 conv, fused.

        for b in range(num_blocks):
            x = relu(x + conv1x1_b(relu(conv3x3_b(relu(x)))))
        out = conv3x3_final(x)

    The residual stream lives in a VMEM f32 scratch in "band" layout (flat
    row-major with padded width WP = W + 2; the two junk columns per row are
    never read back into real outputs).  Each 3x3 conv builds its (MB, kp3)
    bf16 patch (K = 9*C padded once to 128) from a flat zero-padded bf16
    scratch of real channels (cast once on write) and runs ONE MXU dot; the
    1x1 conv is a plain (MB,128)x(128,128) dot on the lane-dense hidden.
    """
    wp = w + 2
    mb = h * wp
    k3 = 9 * c_real
    fill3 = kp3 - k3

    def conv3_patch(a_ref):
        pieces = [a_ref[kh * wp + kw:kh * wp + kw + mb, :]
                  for kh in range(3) for kw in range(3)]
        if fill3:
            pieces.append(jnp.zeros((mb, fill3), jnp.bfloat16))
        return jnp.concatenate(pieces, axis=-1)               # (mb, kp3) bf16

    def kernel(x_ref, w1_ref, b1_ref, w2_ref, b2_ref, wf_ref, bf_ref,
               o_ref, a_ref, act_ref):
        a_ref[...] = jnp.zeros_like(a_ref)                    # tiny (real-channel bf16)
        act_ref[...] = jnp.zeros_like(act_ref)
        for r in range(h):                                    # x -> band layout
            act_ref[r * wp:r * wp + w, 0:c_store] = x_ref[0, r]

        def pad_from_act(apply_relu):
            # write (relu'd) activation into the padded flat scratch, cast once
            for r in range(h):
                row = act_ref[r * wp:r * wp + w, 0:c_real]
                if apply_relu:
                    row = jnp.maximum(row, 0.0)
                a_ref[(r + 1) * wp + 1:(r + 1) * wp + 1 + w, :] = row.astype(jnp.bfloat16)

        def block_body(b, carry):
            pad_from_act(True)                                # ReLU(x), padded, bf16
            patch = conv3_patch(a_ref)
            hid = jnp.dot(patch, w1_ref[b],
                          preferred_element_type=jnp.float32) + b1_ref[b]
            hid = jnp.maximum(hid, 0.0)                       # ReLU
            y = jnp.dot(hid.astype(jnp.bfloat16), w2_ref[b],
                        preferred_element_type=jnp.float32) + b2_ref[b]
            act_ref[...] = jnp.maximum(act_ref[...] + y, 0.0)  # +x, trailing ReLU
            return carry

        lax.fori_loop(0, num_blocks, block_body, 0)

        pad_from_act(False)             # final conv input (already ReLU'd by last block)
        patch = conv3_patch(a_ref)
        out = jnp.dot(patch, wf_ref[...],
                      preferred_element_type=jnp.float32) + bf_ref[...]
        o_ref[0] = out

    return kernel


# ---------------------------------------------------------------------------
# pallas_call wrappers
# ---------------------------------------------------------------------------
def downscale_pallas(x4, w_flat, b_row, *, c_real, c_store, cout_real):
    """x4: (N, H, W/2, 2*c_store) f32 column-pairs view.  Returns (N, H/2, W/2, 128)."""
    n, h, w2, ch2 = x4.shape
    assert ch2 == 2 * c_store
    kp = w_flat.shape[0]
    wpp = w2 + 2
    mb = (h - 1) * wpp
    la = (h + 3) * wpp
    ho, wo = h // 2, w2
    cost = pl.CostEstimate(
        flops=2 * n * ho * wo * (16 * c_real) * cout_real,    # real (unpadded) work
        transcendentals=0,
        bytes_accessed=(x4.size * 4 + w_flat.size * 2 + b_row.size * 4
                        + n * mb * LANE * 4),
    )
    band = pl.pallas_call(
        _make_downscale_kernel(h, w2, c_real, c_store, kp),
        out_shape=jax.ShapeDtypeStruct((n, mb, LANE), jnp.float32),
        grid=(n,),
        in_specs=[
            pl.BlockSpec((1, h, w2, ch2), lambda i: (i, 0, 0, 0)),
            pl.BlockSpec((kp, LANE), lambda i: (0, 0)),
            pl.BlockSpec((1, LANE), lambda i: (0, 0)),
        ],
        out_specs=pl.BlockSpec((1, mb, LANE), lambda i: (i, 0, 0)),
        scratch_shapes=[pltpu.VMEM((la, 2 * c_real), jnp.bfloat16)],
        compiler_params=pltpu.CompilerParams(dimension_semantics=("parallel",)),
        cost_estimate=cost,
    )(x4, w_flat, b_row)
    # keep even band rows (real output rows) and the first Wo columns
    return band.reshape(n, h - 1, wpp, LANE)[:, ::2, :wo, :]


def residual_tail_pallas(x, w1s, b1s, w2s, b2s, wf, bf, *,
                         c_real, mid_real, out_real, num_blocks):
    """x: (N, H, W, c_store) f32.  Fused blocks + final conv.  Returns (N, H, W, 128)."""
    n, h, w, c_store = x.shape
    kp3 = wf.shape[0]
    wp = w + 2
    mb = h * wp
    la = (h + 3) * wp
    flops_block = 2 * h * w * (9 * c_real * mid_real + mid_real * c_real)
    cost = pl.CostEstimate(
        flops=n * (num_blocks * flops_block + 2 * h * w * 9 * c_real * out_real),
        transcendentals=0,
        bytes_accessed=(x.size * 4 + (w1s.size + w2s.size + wf.size) * 2
                        + (b1s.size + b2s.size + bf.size) * 4 + n * mb * LANE * 4),
    )
    band = pl.pallas_call(
        _make_blocks_kernel(h, w, c_real, c_store, num_blocks, kp3),
        out_shape=jax.ShapeDtypeStruct((n, mb, LANE), jnp.float32),
        grid=(n,),
        in_specs=[
            pl.BlockSpec((1, h, w, c_store), lambda i: (i, 0, 0, 0)),
            pl.BlockSpec((num_blocks, kp3, LANE), lambda i: (0, 0, 0)),
            pl.BlockSpec((num_blocks, 1, LANE), lambda i: (0, 0, 0)),
            pl.BlockSpec((num_blocks, LANE, LANE), lambda i: (0, 0, 0)),
            pl.BlockSpec((num_blocks, 1, LANE), lambda i: (0, 0, 0)),
            pl.BlockSpec((kp3, LANE), lambda i: (0, 0)),
            pl.BlockSpec((1, LANE), lambda i: (0, 0)),
        ],
        out_specs=pl.BlockSpec((1, mb, LANE), lambda i: (i, 0, 0)),
        scratch_shapes=[pltpu.VMEM((la, c_real), jnp.bfloat16),
                        pltpu.VMEM((mb, LANE), jnp.float32)],
        compiler_params=pltpu.CompilerParams(dimension_semantics=("parallel",)),
        cost_estimate=cost,
    )(x, w1s, b1s, w2s, b2s, wf, bf)
    return band.reshape(n, h, wp, LANE)[:, :, :w, :]


# ---------------------------------------------------------------------------
# Parameter packing: K flattened (kh, kw, cin) and padded ONCE to 128;
# Cout padded to 128 (lane-dense); weights bf16, biases f32.
# ---------------------------------------------------------------------------
def _pack_conv(w, b, kp=None):
    ksp = w.shape[0] * w.shape[1] * w.shape[2]
    cout = w.shape[3]
    if kp is None:
        kp = _ceil_to(ksp, LANE)
    wf = jnp.zeros((kp, LANE), jnp.float32).at[:ksp, :cout].set(w.reshape(ksp, cout))
    brow = jnp.zeros((1, LANE), jnp.float32).at[0, :cout].set(b)
    return wf.astype(jnp.bfloat16), brow


def pack_params(params):
    packed = {"down_w": [], "down_b": []}
    for w, b in params["down"]:
        wf, br = _pack_conv(w, b)
        packed["down_w"].append(wf)
        packed["down_b"].append(br)
    w1s, b1s, w2s, b2s = [], [], [], []
    for (w1, b1), (w2, b2) in params["blocks"]:
        wf1, br1 = _pack_conv(w1, b1)
        wf2, br2 = _pack_conv(w2, b2)   # 1x1: mid rows embedded in a (128,128) matrix
        w1s.append(wf1)
        b1s.append(br1)
        w2s.append(wf2)
        b2s.append(br2)
    packed["w1"] = jnp.stack(w1s)
    packed["b1"] = jnp.stack(b1s)
    packed["w2"] = jnp.stack(w2s)
    packed["b2"] = jnp.stack(b2s)
    packed["wf"], packed["bf"] = _pack_conv(*params["final"])
    return packed


# ---------------------------------------------------------------------------
# ResidualEncoder: deterministic parameter init + forward
# ---------------------------------------------------------------------------
def _init_conv(key, ksize, cin, cout):
    kw_key, kb_key = jax.random.split(key)
    fan_in = ksize * ksize * cin
    w = jax.random.normal(kw_key, (ksize, ksize, cin, cout), jnp.float32) / jnp.sqrt(
        jnp.float32(fan_in))
    b = jax.random.normal(kb_key, (cout,), jnp.float32) * 0.01
    return w, b


def init_residual_encoder(key, in_channels, out_channels, num_channels,
                          res_channels, num_downscales, num_blocks):
    n_layers = num_downscales + 2 * num_blocks + 1
    keys = iter(jax.random.split(key, n_layers))
    params = {"down": [], "blocks": [], "final": None}
    for i in range(num_downscales):
        cin = num_channels // 2 if i > 0 else in_channels
        cout = num_channels // 2 if i < num_downscales - 1 else num_channels
        params["down"].append(_init_conv(next(keys), 4, cin, cout))
    for _ in range(num_blocks):
        conv3 = _init_conv(next(keys), 3, num_channels, res_channels)
        conv1 = _init_conv(next(keys), 1, res_channels, num_channels)
        params["blocks"].append((conv3, conv1))
    params["final"] = _init_conv(next(keys), 3, num_channels, out_channels)
    return params


def make_forward(in_channels, out_channels, num_channels, res_channels,
                 num_downscales, num_blocks):
    """Static module config is closed over, never traced (fixes the v2 jit bug)."""

    @jax.jit
    def forward(packed, x):
        # x: (N, H, W, in_channels) NHWC f32.  Assumes even H, W (power-of-2 inputs).
        c_real, c_store = in_channels, in_channels
        for i in range(num_downscales):
            cout = num_channels // 2 if i < num_downscales - 1 else num_channels
            n, h, w, _ = x.shape
            # free contiguous view: column pairs folded into channels (s2d done in-kernel)
            x_pairs = x.reshape(n, h, w // 2, 2 * c_store)
            x = downscale_pallas(x_pairs, packed["down_w"][i], packed["down_b"][i],
                                 c_real=c_real, c_store=c_store, cout_real=cout)
            c_real, c_store = cout, LANE
        x = residual_tail_pallas(x, packed["w1"], packed["b1"],
                                 packed["w2"], packed["b2"],
                                 packed["wf"], packed["bf"],
                                 c_real=num_channels, mid_real=res_channels,
                                 out_real=out_channels, num_blocks=num_blocks)
        return x[..., :out_channels]              # drop lane padding

    return forward


# ---------------------------------------------------------------------------
# Pure-JAX reference (f32, verification only)
# ---------------------------------------------------------------------------
def _conv_ref(x, w, b, stride, padding):
    y = lax.conv_general_dilated(
        x, w, (stride, stride), [(padding, padding), (padding, padding)],
        dimension_numbers=("NHWC", "HWIO", "NHWC"))
    return y + b


def residual_encoder_ref(params, x):
    for w, b in params["down"]:
        x = _conv_ref(x, w, b, 2, 1)
    for (w1, b1), (w2, b2) in params["blocks"]:
        hmid = _conv_ref(jax.nn.relu(x), w1, b1, 1, 1)
        x = jax.nn.relu(x + _conv_ref(jax.nn.relu(hmid), w2, b2, 1, 0))
    w, b = params["final"]
    return _conv_ref(x, w, b, 1, 1)


if __name__ == "__main__":
    # Module hyper-parameters (small, consistent with ResidualEncoder.__init__)
    in_channels, out_channels = 4, 6
    num_channels, res_channels = 8, 4
    num_downscales, num_blocks = 2, 2
    batch, spatial = 2, 16

    root = jax.random.PRNGKey(0)
    kx, kparam = jax.random.split(root)

    # PyTorch-equivalent input is (batch, in_channels, 16, 16) NCHW; we work in NHWC.
    x_nchw = jax.random.normal(kx, (batch, in_channels, spatial, spatial), jnp.float32)
    x = jnp.transpose(x_nchw, (0, 2, 3, 1))

    params = init_residual_encoder(kparam, in_channels, out_channels, num_channels,
                                   res_channels, num_downscales, num_blocks)
    packed = pack_params(params)
    forward = make_forward(in_channels, out_channels, num_channels, res_channels,
                           num_downscales, num_blocks)

    out = jax.block_until_ready(forward(packed, x))
    ref = jax.block_until_ready(residual_encoder_ref(params, x))

    assert out.shape == (batch, spatial // (2 ** num_downscales),
                         spatial // (2 ** num_downscales), out_channels), out.shape
    max_err = float(jnp.max(jnp.abs(out - ref)))
    # bf16 MXU operands vs f32 reference -> documented loosened tolerance.
    assert jnp.allclose(out, ref, rtol=5e-2, atol=5e-2), max_err

    print("KERNEL_OK")
</pallas_src>

<mosaic_0001>
module attributes {stable_mosaic.version = 11 : i64} {
  func.func @kernel(%arg0: i32, %arg1: memref<1x16x8x8xf32, #tpu.memory_space<vmem>>, %arg2: memref<128x128xbf16, #tpu.memory_space<vmem>>, %arg3: memref<1x128xf32, #tpu.memory_space<vmem>>, %arg4: memref<1x150x128xf32, #tpu.memory_space<vmem>>, %arg5: memref<190x8xbf16, #tpu.memory_space<vmem>>) attributes {dimension_semantics = [#tpu.dimension_semantics<parallel>], iteration_bounds = array<i64: 2>, scalar_prefetch = 0 : i64, scratch_operands = 1 : i64, tpu.core_type = #tpu.core_type<tc>, window_params = [{transform_indices = @transform_0, window_bounds = array<i64: 1, 16, 8, 8>}, {pipeline_mode = #tpu.pipeline_mode<synchronous>, transform_indices = @transform_1, window_bounds = array<i64: 128, 128>}, {pipeline_mode = #tpu.pipeline_mode<synchronous>, transform_indices = @transform_2, window_bounds = array<i64: 1, 128>}, {transform_indices = @transform_3, window_bounds = array<i64: 1, 150, 128>}]} {
    %cst = arith.constant 0.000000e+00 : bf16
    %0 = vector.broadcast %cst : bf16 to vector<190x8xbf16>
    %c0 = arith.constant 0 : index
    %c0_0 = arith.constant 0 : index
    %1 = vector.load %arg5[%c0, %c0_0] : memref<190x8xbf16, #tpu.memory_space<vmem>>, vector<190x8xbf16>
    tpu.vector_store %arg5[%c0, %c0_0], %0 {strides = array<i32>} : memref<190x8xbf16, #tpu.memory_space<vmem>>, vector<190x8xbf16>,
    %c0_1 = arith.constant 0 : index
    %c0_2 = arith.constant 0 : index
    %c0_3 = arith.constant 0 : index
    %c0_4 = arith.constant 0 : index
    %2 = vector.load %arg1[%c0_1, %c0_2, %c0_3, %c0_4] : memref<1x16x8x8xf32, #tpu.memory_space<vmem>>, vector<1x1x8x8xf32>
    %3 = vector.shape_cast %2 : vector<1x1x8x8xf32> to vector<8x8xf32>
    %4 = vector.extract_strided_slice %3 {offsets = [0, 0], sizes = [8, 4], strides = [1, 1]} : vector<8x8xf32> to vector<8x4xf32>
    %5 = arith.truncf %4 : vector<8x4xf32> to vector<8x4xbf16>
    %c11 = arith.constant 11 : index
    %c0_5 = arith.constant 0 : index
    %6 = vector.load %arg5[%c11, %c0_5] : memref<190x8xbf16, #tpu.memory_space<vmem>>, vector<8x4xbf16>
    tpu.vector_store %arg5[%c11, %c0_5], %5 {strides = array<i32>} : memref<190x8xbf16, #tpu.memory_space<vmem>>, vector<8x4xbf16>,
    %7 = vector.extract_strided_slice %3 {offsets = [0, 4], sizes = [8, 4], strides = [1, 1]} : vector<8x8xf32> to vector<8x4xf32>
    %8 = arith.truncf %7 : vector<8x4xf32> to vector<8x4xbf16>
    %c11_6 = arith.constant 11 : index
    %c4 = arith.constant 4 : index
    %9 = vector.load %arg5[%c11_6, %c4] : memref<190x8xbf16, #tpu.memory_space<vmem>>, vector<8x4xbf16>
    tpu.vector_store %arg5[%c11_6, %c4], %8 {strides = array<i32>} : memref<190x8xbf16, #tpu.memory_space<vmem>>, vector<8x4xbf16>,
    %c0_7 = arith.constant 0 : index
    %c1 = arith.constant 1 : index
    %c0_8 = arith.constant 0 : index
    %c0_9 = arith.constant 0 : index
    %10 = vector.load %arg1[%c0_7, %c1, %c0_8, %c0_9] : memref<1x16x8x8xf32, #tpu.memory_space<vmem>>, vector<1x1x8x8xf32>
    %11 = vector.shape_cast %10 : vector<1x1x8x8xf32> to vector<8x8xf32>
    %12 = vector.extract_strided_slice %11 {offsets = [0, 0], sizes = [8, 4], strides = [1, 1]} : vector<8x8xf32> to vector<8x4xf32>
    %13 = arith.truncf %12 : vector<8x4xf32> to vector<8x4xbf16>
    %c21 = arith.constant 21 : index
    %c0_10 = arith.constant 0 : index
    %14 = vector.load %arg5[%c21, %c0_10] : memref<190x8xbf16, #tpu.memory_space<vmem>>, vector<8x4xbf16>
    tpu.vector_store %arg5[%c21, %c0_10], %13 {strides = array<i32>} : memref<190x8xbf16, #tpu.memory_space<vmem>>, vector<8x4xbf16>,
    %15 = vector.extract_strided_slice %11 {offsets = [0, 4], sizes = [8, 4], strides = [1, 1]} : vector<8x8xf32> to vector<8x4xf32>
    %16 = arith.truncf %15 : vector<8x4xf32> to vector<8x4xbf16>
    %c21_11 = arith.constant 21 : index
    %c4_12 = arith.constant 4 : index
    %17 = vector.load %arg5[%c21_11, %c4_12] : memref<190x8xbf16, #tpu.memory_space<vmem>>, vector<8x4xbf16>
    tpu.vector_store %arg5[%c21_11, %c4_12], %16 {strides = array<i32>} : memref<190x8xbf16, #tpu.memory_space<vmem>>, vector<8x4xbf16>,
    %c0_13 = arith.constant 0 : index
    %c2 = arith.constant 2 : index
    %c0_14 = arith.constant 0 : index
    %c0_15 = arith.constant 0 : index
    %18 = vector.load %arg1[%c0_13, %c2, %c0_14, %c0_15] : memref<1x16x8x8xf32, #tpu.memory_space<vmem>>, vector<1x1x8x8xf32>
    %19 = vector.shape_cast %18 : vector<1x1x8x8xf32> to vector<8x8xf32>
    %20 = vector.extract_strided_slice %19 {offsets = [0, 0], sizes = [8, 4], strides = [1, 1]} : vector<8x8xf32> to vector<8x4xf32>
    %21 = arith.truncf %20 : vector<8x4xf32> to vector<8x4xbf16>
    %c31 = arith.constant 31 : index
    %c0_16 = arith.constant 0 : index
    %22 = vector.load %arg5[%c31, %c0_16] : memref<190x8xbf16, #tpu.memory_space<vmem>>, vector<8x4xbf16>
    tpu.vector_store %arg5[%c31, %c0_16], %21 {strides = array<i32>} : memref<190x8xbf16, #tpu.memory_space<vmem>>, vector<8x4xbf16>,
    %23 = vector.extract_strided_slice %19 {offsets = [0, 4], sizes = [8, 4], strides = [1, 1]} : vector<8x8xf32> to vector<8x4xf32>
    %24 = arith.truncf %23 : vector<8x4xf32> to vector<8x4xbf16>
    %c31_17 = arith.constant 31 : index
    %c4_18 = arith.constant 4 : index
    %25 = vector.load %arg5[%c31_17, %c4_18] : memref<190x8xbf16, #tpu.memory_space<vmem>>, vector<8x4xbf16>
    tpu.vector_store %arg5[%c31_17, %c4_18], %24 {strides = array<i32>} : memref<190x8xbf16, #tpu.memory_space<vmem>>, vector<8x4xbf16>,
    %c0_19 = arith.constant 0 : index
    %c3 = arith.constant 3 : index
    %c0_20 = arith.constant 0 : index
    %c0_21 = arith.constant 0 : index
    %26 = vector.load %arg1[%c0_19, %c3, %c0_20, %c0_21] : memref<1x16x8x8xf32, #tpu.memory_space<vmem>>, vector<1x1x8x8xf32>
    %27 = vector.shape_cast %26 : vector<1x1x8x8xf32> to vector<8x8xf32>
    %28 = vector.extract_strided_slice %27 {offsets = [0, 0], sizes = [8, 4], strides = [1, 1]} : vector<8x8xf32> to vector<8x4xf32>
    %29 = arith.truncf %28 : vector<8x4xf32> to vector<8x4xbf16>
    %c41 = arith.constant 41 : index
    %c0_22 = arith.constant 0 : index
    %30 = vector.load %arg5[%c41, %c0_22] : memref<190x8xbf16, #tpu.memory_space<vmem>>, vector<8x4xbf16>
    tpu.vector_store %arg5[%c41, %c0_22], %29 {strides = array<i32>} : memref<190x8xbf16, #tpu.memory_space<vmem>>, vector<8x4xbf16>,
    %31 = vector.extract_strided_slice %27 {offsets = [0, 4], sizes = [8, 4], strides = [1, 1]} : vector<8x8xf32> to vector<8x4xf32>
    %32 = arith.truncf %31 : vector<8x4xf32> to vector<8x4xbf16>
    %c41_23 = arith.constant 41 : index
    %c4_24 = arith.constant 4 : index
    %33 = vector.load %arg5[%c41_23, %c4_24] : memref<190x8xbf16, #tpu.memory_space<vmem>>, vector<8x4xbf16>
    tpu.vector_store %arg5[%c41_23, %c4_24], %32 {strides = array<i32>} : memref<190x8xbf16, #tpu.memory_space<vmem>>, vector<8x4xbf16>,
    %c0_25 = arith.constant 0 : index
    %c4_26 = arith.constant 4 : index
    %c0_27 = arith.constant 0 : index
    %c0_28 = arith.constant 0 : index
    %34 = vector.load %arg1[%c0_25, %c4_26, %c0_27, %c0_28] : memref<1x16x8x8xf32, #tpu.memory_space<vmem>>, vector<1x1x8x8xf32>
    %35 = vector.shape_cast %34 : vector<1x1x8x8xf32> to vector<8x8xf32>
    %36 = vector.extract_strided_slice %35 {offsets = [0, 0], sizes = [8, 4], strides = [1, 1]} : vector<8x8xf32> to vector<8x4xf32>
    %37 = arith.truncf %36 : vector<8x4xf32> to vector<8x4xbf16>
    %c51 = arith.constant 51 : index
    %c0_29 = arith.constant 0 : index
    %38 = vector.load %arg5[%c51, %c0_29] : memref<190x8xbf16, #tpu.memory_space<vmem>>, vector<8x4xbf16>
    tpu.vector_store %arg5[%c51, %c0_29], %37 {strides = array<i32>} : memref<190x8xbf16, #tpu.memory_space<vmem>>, vector<8x4xbf16>,
    %39 = vector.extract_strided_slice %35 {offsets = [0, 4], sizes = [8, 4], strides = [1, 1]} : vector<8x8xf32> to vector<8x4xf32>
    %40 = arith.truncf %39 : vector<8x4xf32> to vector<8x4xbf16>
    %c51_30 = arith.constant 51 : index
    %c4_31 = arith.constant 4 : index
    %41 = vector.load %arg5[%c51_30, %c4_31] : memref<190x8xbf16, #tpu.memory_space<vmem>>, vector<8x4xbf16>
    tpu.vector_store %arg5[%c51_30, %c4_31], %40 {strides = array<i32>} : memref<190x8xbf16, #tpu.memory_space<vmem>>, vector<8x4xbf16>,
    %c0_32 = arith.constant 0 : index
    %c5 = arith.constant 5 : index
    %c0_33 = arith.constant 0 : index
    %c0_34 = arith.constant 0 : index
    %42 = vector.load %arg1[%c0_32, %c5, %c0_33, %c0_34] : memref<1x16x8x8xf32, #tpu.memory_space<vmem>>, vector<1x1x8x8xf32>
    %43 = vector.shape_cast %42 : vector<1x1x8x8xf32> to vector<8x8xf32>
    %44 = vector.extract_strided_slice %43 {offsets = [0, 0], sizes = [8, 4], strides = [1, 1]} : vector<8x8xf32> to vector<8x4xf32>
    %45 = arith.truncf %44 : vector<8x4xf32> to vector<8x4xbf16>
    %c61 = arith.constant 61 : index
    %c0_35 = arith.constant 0 : index
    %46 = vector.load %arg5[%c61, %c0_35] : memref<190x8xbf16, #tpu.memory_space<vmem>>, vector<8x4xbf16>
    tpu.vector_store %arg5[%c61, %c0_35], %45 {strides = array<i32>} : memref<190x8xbf16, #tpu.memory_space<vmem>>, vector<8x4xbf16>,
    %47 = vector.extract_strided_slice %43 {offsets = [0, 4], sizes = [8, 4], strides = [1, 1]} : vector<8x8xf32> to vector<8x4xf32>
    %48 = arith.truncf %47 : vector<8x4xf32> to vector<8x4xbf16>
    %c61_36 = arith.constant 61 : index
    %c4_37 = arith.constant 4 : index
    %49 = vector.load %arg5[%c61_36, %c4_37] : memref<190x8xbf16, #tpu.memory_space<vmem>>, vector<8x4xbf16>
    tpu.vector_store %arg5[%c61_36, %c4_37], %48 {strides = array<i32>} : memref<190x8xbf16, #tpu.memory_space<vmem>>, vector<8x4xbf16>,
    %c0_38 = arith.constant 0 : index
    %c6 = arith.constant 6 : index
    %c0_39 = arith.constant 0 : index
    %c0_40 = arith.constant 0 : index
    %50 = vector.load %arg1[%c0_38, %c6, %c0_39, %c0_40] : memref<1x16x8x8xf32, #tpu.memory_space<vmem>>, vector<1x1x8x8xf32>
    %51 = vector.shape_cast %50 : vector<1x1x8x8xf32> to vector<8x8xf32>
    %52 = vector.extract_strided_slice %51 {offsets = [0, 0], sizes = [8, 4], strides = [1, 1]} : vector<8x8xf32> to vector<8x4xf32>
    %53 = arith.truncf %52 : vector<8x4xf32> to vector<8x4xbf16>
    %c71 = arith.constant 71 : index
    %c0_41 = arith.constant 0 : index
    %54 = vector.load %arg5[%c71, %c0_41] : memref<190x8xbf16, #tpu.memory_space<vmem>>, vector<8x4xbf16>
    tpu.vector_store %arg5[%c71, %c0_41], %53 {strides = array<i32>} : memref<190x8xbf16, #tpu.memory_space<vmem>>, vector<8x4xbf16>,
    %55 = vector.extract_strided_slice %51 {offsets = [0, 4], sizes = [8, 4], strides = [1, 1]} : vector<8x8xf32> to vector<8x4xf32>
    %56 = arith.truncf %55 : vector<8x4xf32> to vector<8x4xbf16>
    %c71_42 = arith.constant 71 : index
    %c4_43 = arith.constant 4 : index
    %57 = vector.load %arg5[%c71_42, %c4_43] : memref<190x8xbf16, #tpu.memory_space<vmem>>, vector<8x4xbf16>
    tpu.vector_store %arg5[%c71_42, %c4_43], %56 {strides = array<i32>} : memref<190x8xbf16, #tpu.memory_space<vmem>>, vector<8x4xbf16>,
    %c0_44 = arith.constant 0 : index
    %c7 = arith.constant 7 : index
    %c0_45 = arith.constant 0 : index
    %c0_46 = arith.constant 0 : index
    %58 = vector.load %arg1[%c0_44, %c7, %c0_45, %c0_46] : memref<1x16x8x8xf32, #tpu.memory_space<vmem>>, vector<1x1x8x8xf32>
    %59 = vector.shape_cast %58 : vector<1x1x8x8xf32> to vector<8x8xf32>
    %60 = vector.extract_strided_slice %59 {offsets = [0, 0], sizes = [8, 4], strides = [1, 1]} : vector<8x8xf32> to vector<8x4xf32>
    %61 = arith.truncf %60 : vector<8x4xf32> to vector<8x4xbf16>
    %c81 = arith.constant 81 : index
    %c0_47 = arith.constant 0 : index
    %62 = vector.load %arg5[%c81, %c0_47] : memref<190x8xbf16, #tpu.memory_space<vmem>>, vector<8x4xbf16>
    tpu.vector_store %arg5[%c81, %c0_47], %61 {strides = array<i32>} : memref<190x8xbf16, #tpu.memory_space<vmem>>, vector<8x4xbf16>,
    %63 = vector.extract_strided_slice %59 {offsets = [0, 4], sizes = [8, 4], strides = [1, 1]} : vector<8x8xf32> to vector<8x4xf32>
    %64 = arith.truncf %63 : vector<8x4xf32> to vector<8x4xbf16>
    %c81_48 = arith.constant 81 : index
    %c4_49 = arith.constant 4 : index
    %65 = vector.load %arg5[%c81_48, %c4_49] : memref<190x8xbf16, #tpu.memory_space<vmem>>, vector<8x4xbf16>
    tpu.vector_store %arg5[%c81_48, %c4_49], %64 {strides = array<i32>} : memref<190x8xbf16, #tpu.memory_space<vmem>>, vector<8x4xbf16>,
    %c0_50 = arith.constant 0 : index
    %c8 = arith.constant 8 : index
    %c0_51 = arith.constant 0 : index
    %c0_52 = arith.constant 0 : index
    %66 = vector.load %arg1[%c0_50, %c8, %c0_51, %c0_52] : memref<1x16x8x8xf32, #tpu.memory_space<vmem>>, vector<1x1x8x8xf32>
    %67 = vector.shape_cast %66 : vector<1x1x8x8xf32> to vector<8x8xf32>
    %68 = vector.extract_strided_slice %67 {offsets = [0, 0], sizes = [8, 4], strides = [1, 1]} : vector<8x8xf32> to vector<8x4xf32>
    %69 = arith.truncf %68 : vector<8x4xf32> to vector<8x4xbf16>
    %c91 = arith.constant 91 : index
    %c0_53 = arith.constant 0 : index
    %70 = vector.load %arg5[%c91, %c0_53] : memref<190x8xbf16, #tpu.memory_space<vmem>>, vector<8x4xbf16>
    tpu.vector_store %arg5[%c91, %c0_53], %69 {strides = array<i32>} : memref<190x8xbf16, #tpu.memory_space<vmem>>, vector<8x4xbf16>,
    %71 = vector.extract_strided_slice %67 {offsets = [0, 4], sizes = [8, 4], strides = [1, 1]} : vector<8x8xf32> to vector<8x4xf32>
    %72 = arith.truncf %71 : vector<8x4xf32> to vector<8x4xbf16>
    %c91_54 = arith.constant 91 : index
    %c4_55 = arith.constant 4 : index
    %73 = vector.load %arg5[%c91_54, %c4_55] : memref<190x8xbf16, #tpu.memory_space<vmem>>, vector<8x4xbf16>
    tpu.vector_store %arg5[%c91_54, %c4_55], %72 {strides = array<i32>} : memref<190x8xbf16, #tpu.memory_space<vmem>>, vector<8x4xbf16>,
    %c0_56 = arith.constant 0 : index
    %c9 = arith.constant 9 : index
    %c0_57 = arith.constant 0 : index
    %c0_58 = arith.constant 0 : index
    %74 = vector.load %arg1[%c0_56, %c9, %c0_57, %c0_58] : memref<1x16x8x8xf32, #tpu.memory_space<vmem>>, vector<1x1x8x8xf32>
    %75 = vector.shape_cast %74 : vector<1x1x8x8xf32> to vector<8x8xf32>
    %76 = vector.extract_strided_slice %75 {offsets = [0, 0], sizes = [8, 4], strides = [1, 1]} : vector<8x8xf32> to vector<8x4xf32>
    %77 = arith.truncf %76 : vector<8x4xf32> to vector<8x4xbf16>
    %c101 = arith.constant 101 : index
    %c0_59 = arith.constant 0 : index
    %78 = vector.load %arg5[%c101, %c0_59] : memref<190x8xbf16, #tpu.memory_space<vmem>>, vector<8x4xbf16>
    tpu.vector_store %arg5[%c101, %c0_59], %77 {strides = array<i32>} : memref<190x8xbf16, #tpu.memory_space<vmem>>, vector<8x4xbf16>,
    %79 = vector.extract_strided_slice %75 {offsets = [0, 4], sizes = [8, 4], strides = [1, 1]} : vector<8x8xf32> to vector<8x4xf32>
    %80 = arith.truncf %79 : vector<8x4xf32> to vector<8x4xbf16>
    %c101_60 = arith.constant 101 : index
    %c4_61 = arith.constant 4 : index
    %81 = vector.load %arg5[%c101_60, %c4_61] : memref<190x8xbf16, #tpu.memory_space<vmem>>, vector<8x4xbf16>
    tpu.vector_store %arg5[%c101_60, %c4_61], %80 {strides = array<i32>} : memref<190x8xbf16, #tpu.memory_space<vmem>>, vector<8x4xbf16>,
    %c0_62 = arith.constant 0 : index
    %c10 = arith.constant 10 : index
    %c0_63 = arith.constant 0 : index
    %c0_64 = arith.constant 0 : index
    %82 = vector.load %arg1[%c0_62, %c10, %c0_63, %c0_64] : memref<1x16x8x8xf32, #tpu.memory_space<vmem>>, vector<1x1x8x8xf32>
    %83 = vector.shape_cast %82 : vector<1x1x8x8xf32> to vector<8x8xf32>
    %84 = vector.extract_strided_slice %83 {offsets = [0, 0], sizes = [8, 4], strides = [1, 1]} : vector<8x8xf32> to vector<8x4xf32>
    %85 = arith.truncf %84 : vector<8x4xf32> to vector<8x4xbf16>
    %c111 = arith.constant 111 : index
    %c0_65 = arith.constant 0 : index
    %86 = vector.load %arg5[%c111, %c0_65] : memref<190x8xbf16, #tpu.memory_space<vmem>>, vector<8x4xbf16>
    tpu.vector_store %arg5[%c111, %c0_65], %85 {strides = array<i32>} : memref<190x8xbf16, #tpu.memory_space<vmem>>, vector<8x4xbf16>,
    %87 = vector.extract_strided_slice %83 {offsets = [0, 4], sizes = [8, 4], strides = [1, 1]} : vector<8x8xf32> to vector<8x4xf32>
    %88 = arith.truncf %87 : vector<8x4xf32> to vector<8x4xbf16>
    %c111_66 = arith.constant 111 : index
    %c4_67 = arith.constant 4 : index
    %89 = vector.load %arg5[%c111_66, %c4_67] : memref<190x8xbf16, #tpu.memory_space<vmem>>, vector<8x4xbf16>
    tpu.vector_store %arg5[%c111_66, %c4_67], %88 {strides = array<i32>} : memref<190x8xbf16, #tpu.memory_space<vmem>>, vector<8x4xbf16>,
    %c0_68 = arith.constant 0 : index
    %c11_69 = arith.constant 11 : index
    %c0_70 = arith.constant 0 : index
    %c0_71 = arith.constant 0 : index
    %90 = vector.load %arg1[%c0_68, %c11_69, %c0_70, %c0_71] : memref<1x16x8x8xf32, #tpu.memory_space<vmem>>, vector<1x1x8x8xf32>
    %91 = vector.shape_cast %90 : vector<1x1x8x8xf32> to vector<8x8xf32>
    %92 = vector.extract_strided_slice %91 {offsets = [0, 0], sizes = [8, 4], strides = [1, 1]} : vector<8x8xf32> to vector<8x4xf32>
    %93 = arith.truncf %92 : vector<8x4xf32> to vector<8x4xbf16>
    %c121 = arith.constant 121 : index
    %c0_72 = arith.constant 0 : index
    %94 = vector.load %arg5[%c121, %c0_72] : memref<190x8xbf16, #tpu.memory_space<vmem>>, vector<8x4xbf16>
    tpu.vector_store %arg5[%c121, %c0_72], %93 {strides = array<i32>} : memref<190x8xbf16, #tpu.memory_space<vmem>>, vector<8x4xbf16>,
    %95 = vector.extract_strided_slice %91 {offsets = [0, 4], sizes = [8, 4], strides = [1, 1]} : vector<8x8xf32> to vector<8x4xf32>
    %96 = arith.truncf %95 : vector<8x4xf32> to vector<8x4xbf16>
    %c121_73 = arith.constant 121 : index
    %c4_74 = arith.constant 4 : index
    %97 = vector.load %arg5[%c121_73, %c4_74] : memref<190x8xbf16, #tpu.memory_space<vmem>>, vector<8x4xbf16>
    tpu.vector_store %arg5[%c121_73, %c4_74], %96 {strides = array<i32>} : memref<190x8xbf16, #tpu.memory_space<vmem>>, vector<8x4xbf16>,
    %c0_75 = arith.constant 0 : index
    %c12 = arith.constant 12 : index
    %c0_76 = arith.constant 0 : index
    %c0_77 = arith.constant 0 : index
    %98 = vector.load %arg1[%c0_75, %c12, %c0_76, %c0_77] : memref<1x16x8x8xf32, #tpu.memory_space<vmem>>, vector<1x1x8x8xf32>
    %99 = vector.shape_cast %98 : vector<1x1x8x8xf32> to vector<8x8xf32>
    %100 = vector.extract_strided_slice %99 {offsets = [0, 0], sizes = [8, 4], strides = [1, 1]} : vector<8x8xf32> to vector<8x4xf32>
    %101 = arith.truncf %100 : vector<8x4xf32> to vector<8x4xbf16>
    %c131 = arith.constant 131 : index
    %c0_78 = arith.constant 0 : index
    %102 = vector.load %arg5[%c131, %c0_78] : memref<190x8xbf16, #tpu.memory_space<vmem>>, vector<8x4xbf16>
    tpu.vector_store %arg5[%c131, %c0_78], %101 {strides = array<i32>} : memref<190x8xbf16, #tpu.memory_space<vmem>>, vector<8x4xbf16>,
    %103 = vector.extract_strided_slice %99 {offsets = [0, 4], sizes = [8, 4], strides = [1, 1]} : vector<8x8xf32> to vector<8x4xf32>
    %104 = arith.truncf %103 : vector<8x4xf32> to vector<8x4xbf16>
    %c131_79 = arith.constant 131 : index
    %c4_80 = arith.constant 4 : index
    %105 = vector.load %arg5[%c131_79, %c4_80] : memref<190x8xbf16, #tpu.memory_space<vmem>>, vector<8x4xbf16>
    tpu.vector_store %arg5[%c131_79, %c4_80], %104 {strides = array<i32>} : memref<190x8xbf16, #tpu.memory_space<vmem>>, vector<8x4xbf16>,
    %c0_81 = arith.constant 0 : index
    %c13 = arith.constant 13 : index
    %c0_82 = arith.constant 0 : index
    %c0_83 = arith.constant 0 : index
    %106 = vector.load %arg1[%c0_81, %c13, %c0_82, %c0_83] : memref<1x16x8x8xf32, #tpu.memory_space<vmem>>, vector<1x1x8x8xf32>
    %107 = vector.shape_cast %106 : vector<1x1x8x8xf32> to vector<8x8xf32>
    %108 = vector.extract_strided_slice %107 {offsets = [0, 0], sizes = [8, 4], strides = [1, 1]} : vector<8x8xf32> to vector<8x4xf32>
    %109 = arith.truncf %108 : vector<8x4xf32> to vector<8x4xbf16>
    %c141 = arith.constant 141 : index
    %c0_84 = arith.constant 0 : index
    %110 = vector.load %arg5[%c141, %c0_84] : memref<190x8xbf16, #tpu.memory_space<vmem>>, vector<8x4xbf16>
    tpu.vector_store %arg5[%c141, %c0_84], %109 {strides = array<i32>} : memref<190x8xbf16, #tpu.memory_space<vmem>>, vector<8x4xbf16>,
    %111 = vector.extract_strided_slice %107 {offsets = [0, 4], sizes = [8, 4], strides = [1, 1]} : vector<8x8xf32> to vector<8x4xf32>
    %112 = arith.truncf %111 : vector<8x4xf32> to vector<8x4xbf16>
    %c141_85 = arith.constant 141 : index
    %c4_86 = arith.constant 4 : index
    %113 = vector.load %arg5[%c141_85, %c4_86] : memref<190x8xbf16, #tpu.memory_space<vmem>>, vector<8x4xbf16>
    tpu.vector_store %arg5[%c141_85, %c4_86], %112 {strides = array<i32>} : memref<190x8xbf16, #tpu.memory_space<vmem>>, vector<8x4xbf16>,
    %c0_87 = arith.constant 0 : index
    %c14 = arith.constant 14 : index
    %c0_88 = arith.constant 0 : index
    %c0_89 = arith.constant 0 : index
    %114 = vector.load %arg1[%c0_87, %c14, %c0_88, %c0_89] : memref<1x16x8x8xf32, #tpu.memory_space<vmem>>, vector<1x1x8x8xf32>
    %115 = vector.shape_cast %114 : vector<1x1x8x8xf32> to vector<8x8xf32>
    %116 = vector.extract_strided_slice %115 {offsets = [0, 0], sizes = [8, 4], strides = [1, 1]} : vector<8x8xf32> to vector<8x4xf32>
    %117 = arith.truncf %116 : vector<8x4xf32> to vector<8x4xbf16>
    %c151 = arith.constant 151 : index
    %c0_90 = arith.constant 0 : index
    %118 = vector.load %arg5[%c151, %c0_90] : memref<190x8xbf16, #tpu.memory_space<vmem>>, vector<8x4xbf16>
    tpu.vector_store %arg5[%c151, %c0_90], %117 {strides = array<i32>} : memref<190x8xbf16, #tpu.memory_space<vmem>>, vector<8x4xbf16>,
    %119 = vector.extract_strided_slice %115 {offsets = [0, 4], sizes = [8, 4], strides = [1, 1]} : vector<8x8xf32> to vector<8x4xf32>
    %120 = arith.truncf %119 : vector<8x4xf32> to vector<8x4xbf16>
    %c151_91 = arith.constant 151 : index
    %c4_92 = arith.constant 4 : index
    %121 = vector.load %arg5[%c151_91, %c4_92] : memref<190x8xbf16, #tpu.memory_space<vmem>>, vector<8x4xbf16>
    tpu.vector_store %arg5[%c151_91, %c4_92], %120 {strides = array<i32>} : memref<190x8xbf16, #tpu.memory_space<vmem>>, vector<8x4xbf16>,
    %c0_93 = arith.constant 0 : index
    %c15 = arith.constant 15 : index
    %c0_94 = arith.constant 0 : index
    %c0_95 = arith.constant 0 : index
    %122 = vector.load %arg1[%c0_93, %c15, %c0_94, %c0_95] : memref<1x16x8x8xf32, #tpu.memory_space<vmem>>, vector<1x1x8x8xf32>
    %123 = vector.shape_cast %122 : vector<1x1x8x8xf32> to vector<8x8xf32>
    %124 = vector.extract_strided_slice %123 {offsets = [0, 0], sizes = [8, 4], strides = [1, 1]} : vector<8x8xf32> to vector<8x4xf32>
    %125 = arith.truncf %124 : vector<8x4xf32> to vector<8x4xbf16>
    %c161 = arith.constant 161 : index
    %c0_96 = arith.constant 0 : index
    %126 = vector.load %arg5[%c161, %c0_96] : memref<190x8xbf16, #tpu.memory_space<vmem>>, vector<8x4xbf16>
    tpu.vector_store %arg5[%c161, %c0_96], %125 {strides = array<i32>} : memref<190x8xbf16, #tpu.memory_space<vmem>>, vector<8x4xbf16>,
    %127 = vector.extract_strided_slice %123 {offsets = [0, 4], sizes = [8, 4], strides = [1, 1]} : vector<8x8xf32> to vector<8x4xf32>
    %128 = arith.truncf %127 : vector<8x4xf32> to vector<8x4xbf16>
    %c161_97 = arith.constant 161 : index
    %c4_98 = arith.constant 4 : index
    %129 = vector.load %arg5[%c161_97, %c4_98] : memref<190x8xbf16, #tpu.memory_space<vmem>>, vector<8x4xbf16>
    tpu.vector_store %arg5[%c161_97, %c4_98], %128 {strides = array<i32>} : memref<190x8xbf16, #tpu.memory_space<vmem>>, vector<8x4xbf16>,
    %c0_99 = arith.constant 0 : index
    %c4_100 = arith.constant 4 : index
    %130 = vector.load %arg5[%c0_99, %c4_100] : memref<190x8xbf16, #tpu.memory_space<vmem>>, vector<150x4xbf16>
    %c1_101 = arith.constant 1 : index
    %c0_102 = arith.constant 0 : index
    %131 = vector.load %arg5[%c1_101, %c0_102] : memref<190x8xbf16, #tpu.memory_space<vmem>>, vector<150x4xbf16>
    %c1_103 = arith.constant 1 : index
    %c4_104 = arith.constant 4 : index
    %132 = vector.load %arg5[%c1_103, %c4_104] : memref<190x8xbf16, #tpu.memory_space<vmem>>, vector<150x4xbf16>
    %c2_105 = arith.constant 2 : index
    %c0_106 = arith.constant 0 : index
    %133 = vector.load %arg5[%c2_105, %c0_106] : memref<190x8xbf16, #tpu.memory_space<vmem>>, vector<150x4xbf16>
    %c10_107 = arith.constant 10 : index
    %c4_108 = arith.constant 4 : index
    %134 = vector.load %arg5[%c10_107, %c4_108] : memref<190x8xbf16, #tpu.memory_space<vmem>>, vector<150x4xbf16>
    %c11_109 = arith.constant 11 : index
    %c0_110 = arith.constant 0 : index
    %135 = vector.load %arg5[%c11_109, %c0_110] : memref<190x8xbf16, #tpu.memory_space<vmem>>, vector<150x4xbf16>
    %c11_111 = arith.constant 11 : index
    %c4_112 = arith.constant 4 : index
    %136 = vector.load %arg5[%c11_111, %c4_112] : memref<190x8xbf16, #tpu.memory_space<vmem>>, vector<150x4xbf16>
    %c12_113 = arith.constant 12 : index
    %c0_114 = arith.constant 0 : index
    %137 = vector.load %arg5[%c12_113, %c0_114] : memref<190x8xbf16, #tpu.memory_space<vmem>>, vector<150x4xbf16>
    %c20 = arith.constant 20 : index
    %c4_115 = arith.constant 4 : index
    %138 = vector.load %arg5[%c20, %c4_115] : memref<190x8xbf16, #tpu.memory_space<vmem>>, vector<150x4xbf16>
    %c21_116 = arith.constant 21 : index
    %c0_117 = arith.constant 0 : index
    %139 = vector.load %arg5[%c21_116, %c0_117] : memref<190x8xbf16, #tpu.memory_space<vmem>>, vector<150x4xbf16>
    %c21_118 = arith.constant 21 : index
    %c4_119 = arith.constant 4 : index
    %140 = vector.load %arg5[%c21_118, %c4_119] : memref<190x8xbf16, #tpu.memory_space<vmem>>, vector<150x4xbf16>
    %c22 = arith.constant 22 : index
    %c0_120 = arith.constant 0 : index
    %141 = vector.load %arg5[%c22, %c0_120] : memref<190x8xbf16, #tpu.memory_space<vmem>>, vector<150x4xbf16>
    %c30 = arith.constant 30 : index
    %c4_121 = arith.constant 4 : index
    %142 = vector.load %arg5[%c30, %c4_121] : memref<190x8xbf16, #tpu.memory_space<vmem>>, vector<150x4xbf16>
    %c31_122 = arith.constant 31 : index
    %c0_123 = arith.constant 0 : index
    %143 = vector.load %arg5[%c31_122, %c0_123] : memref<190x8xbf16, #tpu.memory_space<vmem>>, vector<150x4xbf16>
    %c31_124 = arith.constant 31 : index
    %c4_125 = arith.constant 4 : index
    %144 = vector.load %arg5[%c31_124, %c4_125] : memref<190x8xbf16, #tpu.memory_space<vmem>>, vector<150x4xbf16>
    %c32 = arith.constant 32 : index
    %c0_126 = arith.constant 0 : index
    %145 = vector.load %arg5[%c32, %c0_126] : memref<190x8xbf16, #tpu.memory_space<vmem>>, vector<150x4xbf16>
    %cst_127 = arith.constant 0.000000e+00 : bf16
    %146 = vector.broadcast %cst_127 : bf16 to vector<150x64xbf16>
    %147 = tpu.concatenate %130, %131, %132, %133, %134, %135, %136, %137, %138, %139, %140, %141, %142, %143, %144, %145 in 1 : vector<150x4xbf16>, vector<150x4xbf16>, vector<150x4xbf16>, vector<150x4xbf16>, vector<150x4xbf16>, vector<150x4xbf16>, vector<150x4xbf16>, vector<150x4xbf16>, vector<150x4xbf16>, vector<150x4xbf16>, vector<150x4xbf16>, vector<150x4xbf16>, vector<150x4xbf16>, vector<150x4xbf16>, vector<150x4xbf16>, vector<150x4xbf16> -> vector<150x64xbf16>
    %148 = tpu.concatenate %147, %146 in 1 : vector<150x64xbf16>, vector<150x64xbf16> -> vector<150x128xbf16>
    %c0_128 = arith.constant 0 : index
    %c0_129 = arith.constant 0 : index
    %149 = vector.load %arg2[%c0_128, %c0_129] : memref<128x128xbf16, #tpu.memory_space<vmem>>, vector<128x128xbf16>
    %cst_130 = arith.constant dense<0.000000e+00> : vector<150x128xf32>
    %150 = tpu.matmul %148, %149, %cst_130 {dimension_numbers = #tpu.dot_dimension_numbers<[1], [0], [0], [1], [0, 0, 1, 1], [], []>} : vector<150x128xbf16>, vector<128x128xbf16>, vector<150x128xf32> -> vector<150x128xf32>
    %c0_131 = arith.constant 0 : index
    %c0_132 = arith.constant 0 : index
    %151 = vector.load %arg3[%c0_131, %c0_132] : memref<1x128xf32, #tpu.memory_space<vmem>>, vector<1x128xf32>
    %152 = vector.broadcast %151 : vector<1x128xf32> to vector<150x128xf32>
    %153 = arith.addf %150, %152 : vector<150x128xf32>
    %c0_133 = arith.constant 0 : index
    %c0_134 = arith.constant 0 : index
    %c0_135 = arith.constant 0 : index
    %154 = vector.load %arg4[%c0_133, %c0_134, %c0_135] : memref<1x150x128xf32, #tpu.memory_space<vmem>>, vector<1x150x128xf32>
    %155 = vector.shape_cast %154 : vector<1x150x128xf32> to vector<150x128xf32>
    %156 = vector.shape_cast %153 : vector<150x128xf32> to vector<1x150x128xf32>
    tpu.vector_store %arg4[%c0_133, %c0_134, %c0_135], %156 {strides = array<i32>} : memref<1x150x128xf32, #tpu.memory_space<vmem>>, vector<1x150x128xf32>,
    return
  }
  func.func @transform_0(%arg0: i32) -> (i32, i32, i32, i32) {
    %c0_i32 = arith.constant 0 : i32
    %c0_i32_0 = arith.constant 0 : i32
    %c0_i32_1 = arith.constant 0 : i32
    %c0_i32_2 = arith.constant 0 : i32
    return %arg0, %c0_i32, %c0_i32_0, %c0_i32_1 : i32, i32, i32, i32
  }
  func.func @transform_1(%arg0: i32) -> (i32, i32) {
    %c0_i32 = arith.constant 0 : i32
    %c0_i32_0 = arith.constant 0 : i32
    %c0_i32_1 = arith.constant 0 : i32
    return %c0_i32, %c0_i32_0 : i32, i32
  }
  func.func @transform_2(%arg0: i32) -> (i32, i32) {
    %c0_i32 = arith.constant 0 : i32
    %c0_i32_0 = arith.constant 0 : i32
    %c0_i32_1 = arith.constant 0 : i32
    return %c0_i32, %c0_i32_0 : i32, i32
  }
  func.func @transform_3(%arg0: i32) -> (i32, i32, i32) {
    %c0_i32 = arith.constant 0 : i32
    %c0_i32_0 = arith.constant 0 : i32
    %c0_i32_1 = arith.constant 0 : i32
    return %arg0, %c0_i32, %c0_i32_0 : i32, i32, i32
  }
}

module attributes {stable_mosaic.version = 11 : i64} {
  func.func @kernel(%arg0: i32, %arg1: memref<1x8x4x256xf32, #tpu.memory_space<vmem>>, %arg2: memref<128x128xbf16, #tpu.memory_space<vmem>>, %arg3: memref<1x128xf32, #tpu.memory_space<vmem>>, %arg4: memref<1x42x128xf32, #tpu.memory_space<vmem>>, %arg5: memref<66x8xbf16, #tpu.memory_space<vmem>>) attributes {dimension_semantics = [#tpu.dimension_semantics<parallel>], iteration_bounds = array<i64: 2>, scalar_prefetch = 0 : i64, scratch_operands = 1 : i64, tpu.core_type = #tpu.core_type<tc>, window_params = [{transform_indices = @transform_0, window_bounds = array<i64: 1, 8, 4, 256>}, {pipeline_mode = #tpu.pipeline_mode<synchronous>, transform_indices = @transform_1, window_bounds = array<i64: 128, 128>}, {pipeline_mode = #tpu.pipeline_mode<synchronous>, transform_indices = @transform_2, window_bounds = array<i64: 1, 128>}, {transform_indices = @transform_3, window_bounds = array<i64: 1, 42, 128>}]} {
    %cst = arith.constant 0.000000e+00 : bf16
    %0 = vector.broadcast %cst : bf16 to vector<66x8xbf16>
    %c0 = arith.constant 0 : index
    %c0_0 = arith.constant 0 : index
    %1 = vector.load %arg5[%c0, %c0_0] : memref<66x8xbf16, #tpu.memory_space<vmem>>, vector<66x8xbf16>
    tpu.vector_store %arg5[%c0, %c0_0], %0 {strides = array<i32>} : memref<66x8xbf16, #tpu.memory_space<vmem>>, vector<66x8xbf16>,
    %c0_1 = arith.constant 0 : index
    %c0_2 = arith.constant 0 : index
    %c0_3 = arith.constant 0 : index
    %c0_4 = arith.constant 0 : index
    %2 = vector.load %arg1[%c0_1, %c0_2, %c0_3, %c0_4] : memref<1x8x4x256xf32, #tpu.memory_space<vmem>>, vector<1x1x4x256xf32>
    %3 = vector.shape_cast %2 : vector<1x1x4x256xf32> to vector<4x256xf32>
    %4 = vector.extract_strided_slice %3 {offsets = [0, 0], sizes = [4, 4], strides = [1, 1]} : vector<4x256xf32> to vector<4x4xf32>
    %5 = arith.truncf %4 : vector<4x4xf32> to vector<4x4xbf16>
    %c7 = arith.constant 7 : index
    %c0_5 = arith.constant 0 : index
    %6 = vector.load %arg5[%c7, %c0_5] : memref<66x8xbf16, #tpu.memory_space<vmem>>, vector<4x4xbf16>
    tpu.vector_store %arg5[%c7, %c0_5], %5 {strides = array<i32>} : memref<66x8xbf16, #tpu.memory_space<vmem>>, vector<4x4xbf16>,
    %7 = vector.extract_strided_slice %3 {offsets = [0, 128], sizes = [4, 4], strides = [1, 1]} : vector<4x256xf32> to vector<4x4xf32>
    %8 = arith.truncf %7 : vector<4x4xf32> to vector<4x4xbf16>
    %c7_6 = arith.constant 7 : index
    %c4 = arith.constant 4 : index
    %9 = vector.load %arg5[%c7_6, %c4] : memref<66x8xbf16, #tpu.memory_space<vmem>>, vector<4x4xbf16>
    tpu.vector_store %arg5[%c7_6, %c4], %8 {strides = array<i32>} : memref<66x8xbf16, #tpu.memory_space<vmem>>, vector<4x4xbf16>,
    %c0_7 = arith.constant 0 : index
    %c1 = arith.constant 1 : index
    %c0_8 = arith.constant 0 : index
    %c0_9 = arith.constant 0 : index
    %10 = vector.load %arg1[%c0_7, %c1, %c0_8, %c0_9] : memref<1x8x4x256xf32, #tpu.memory_space<vmem>>, vector<1x1x4x256xf32>
    %11 = vector.shape_cast %10 : vector<1x1x4x256xf32> to vector<4x256xf32>
    %12 = vector.extract_strided_slice %11 {offsets = [0, 0], sizes = [4, 4], strides = [1, 1]} : vector<4x256xf32> to vector<4x4xf32>
    %13 = arith.truncf %12 : vector<4x4xf32> to vector<4x4xbf16>
    %c13 = arith.constant 13 : index
    %c0_10 = arith.constant 0 : index
    %14 = vector.load %arg5[%c13, %c0_10] : memref<66x8xbf16, #tpu.memory_space<vmem>>, vector<4x4xbf16>
    tpu.vector_store %arg5[%c13, %c0_10], %13 {strides = array<i32>} : memref<66x8xbf16, #tpu.memory_space<vmem>>, vector<4x4xbf16>,
    %15 = vector.extract_strided_slice %11 {offsets = [0, 128], sizes = [4, 4], strides = [1, 1]} : vector<4x256xf32> to vector<4x4xf32>
    %16 = arith.truncf %15 : vector<4x4xf32> to vector<4x4xbf16>
    %c13_11 = arith.constant 13 : index
    %c4_12 = arith.constant 4 : index
    %17 = vector.load %arg5[%c13_11, %c4_12] : memref<66x8xbf16, #tpu.memory_space<vmem>>, vector<4x4xbf16>
    tpu.vector_store %arg5[%c13_11, %c4_12], %16 {strides = array<i32>} : memref<66x8xbf16, #tpu.memory_space<vmem>>, vector<4x4xbf16>,
    %c0_13 = arith.constant 0 : index
    %c2 = arith.constant 2 : index
    %c0_14 = arith.constant 0 : index
    %c0_15 = arith.constant 0 : index
    %18 = vector.load %arg1[%c0_13, %c2, %c0_14, %c0_15] : memref<1x8x4x256xf32, #tpu.memory_space<vmem>>, vector<1x1x4x256xf32>
    %19 = vector.shape_cast %18 : vector<1x1x4x256xf32> to vector<4x256xf32>
    %20 = vector.extract_strided_slice %19 {offsets = [0, 0], sizes = [4, 4], strides = [1, 1]} : vector<4x256xf32> to vector<4x4xf32>
    %21 = arith.truncf %20 : vector<4x4xf32> to vector<4x4xbf16>
    %c19 = arith.constant 19 : index
    %c0_16 = arith.constant 0 : index
    %22 = vector.load %arg5[%c19, %c0_16] : memref<66x8xbf16, #tpu.memory_space<vmem>>, vector<4x4xbf16>
    tpu.vector_store %arg5[%c19, %c0_16], %21 {strides = array<i32>} : memref<66x8xbf16, #tpu.memory_space<vmem>>, vector<4x4xbf16>,
    %23 = vector.extract_strided_slice %19 {offsets = [0, 128], sizes = [4, 4], strides = [1, 1]} : vector<4x256xf32> to vector<4x4xf32>
    %24 = arith.truncf %23 : vector<4x4xf32> to vector<4x4xbf16>
    %c19_17 = arith.constant 19 : index
    %c4_18 = arith.constant 4 : index
    %25 = vector.load %arg5[%c19_17, %c4_18] : memref<66x8xbf16, #tpu.memory_space<vmem>>, vector<4x4xbf16>
    tpu.vector_store %arg5[%c19_17, %c4_18], %24 {strides = array<i32>} : memref<66x8xbf16, #tpu.memory_space<vmem>>, vector<4x4xbf16>,
    %c0_19 = arith.constant 0 : index
    %c3 = arith.constant 3 : index
    %c0_20 = arith.constant 0 : index
    %c0_21 = arith.constant 0 : index
    %26 = vector.load %arg1[%c0_19, %c3, %c0_20, %c0_21] : memref<1x8x4x256xf32, #tpu.memory_space<vmem>>, vector<1x1x4x256xf32>
    %27 = vector.shape_cast %26 : vector<1x1x4x256xf32> to vector<4x256xf32>
    %28 = vector.extract_strided_slice %27 {offsets = [0, 0], sizes = [4, 4], strides = [1, 1]} : vector<4x256xf32> to vector<4x4xf32>
    %29 = arith.truncf %28 : vector<4x4xf32> to vector<4x4xbf16>
    %c25 = arith.constant 25 : index
    %c0_22 = arith.constant 0 : index
    %30 = vector.load %arg5[%c25, %c0_22] : memref<66x8xbf16, #tpu.memory_space<vmem>>, vector<4x4xbf16>
    tpu.vector_store %arg5[%c25, %c0_22], %29 {strides = array<i32>} : memref<66x8xbf16, #tpu.memory_space<vmem>>, vector<4x4xbf16>,
    %31 = vector.extract_strided_slice %27 {offsets = [0, 128], sizes = [4, 4], strides = [1, 1]} : vector<4x256xf32> to vector<4x4xf32>
    %32 = arith.truncf %31 : vector<4x4xf32> to vector<4x4xbf16>
    %c25_23 = arith.constant 25 : index
    %c4_24 = arith.constant 4 : index
    %33 = vector.load %arg5[%c25_23, %c4_24] : memref<66x8xbf16, #tpu.memory_space<vmem>>, vector<4x4xbf16>
    tpu.vector_store %arg5[%c25_23, %c4_24], %32 {strides = array<i32>} : memref<66x8xbf16, #tpu.memory_space<vmem>>, vector<4x4xbf16>,
    %c0_25 = arith.constant 0 : index
    %c4_26 = arith.constant 4 : index
    %c0_27 = arith.constant 0 : index
    %c0_28 = arith.constant 0 : index
    %34 = vector.load %arg1[%c0_25, %c4_26, %c0_27, %c0_28] : memref<1x8x4x256xf32, #tpu.memory_space<vmem>>, vector<1x1x4x256xf32>
    %35 = vector.shape_cast %34 : vector<1x1x4x256xf32> to vector<4x256xf32>
    %36 = vector.extract_strided_slice %35 {offsets = [0, 0], sizes = [4, 4], strides = [1, 1]} : vector<4x256xf32> to vector<4x4xf32>
    %37 = arith.truncf %36 : vector<4x4xf32> to vector<4x4xbf16>
    %c31 = arith.constant 31 : index
    %c0_29 = arith.constant 0 : index
    %38 = vector.load %arg5[%c31, %c0_29] : memref<66x8xbf16, #tpu.memory_space<vmem>>, vector<4x4xbf16>
    tpu.vector_store %arg5[%c31, %c0_29], %37 {strides = array<i32>} : memref<66x8xbf16, #tpu.memory_space<vmem>>, vector<4x4xbf16>,
    %39 = vector.extract_strided_slice %35 {offsets = [0, 128], sizes = [4, 4], strides = [1, 1]} : vector<4x256xf32> to vector<4x4xf32>
    %40 = arith.truncf %39 : vector<4x4xf32> to vector<4x4xbf16>
    %c31_30 = arith.constant 31 : index
    %c4_31 = arith.constant 4 : index
    %41 = vector.load %arg5[%c31_30, %c4_31] : memref<66x8xbf16, #tpu.memory_space<vmem>>, vector<4x4xbf16>
    tpu.vector_store %arg5[%c31_30, %c4_31], %40 {strides = array<i32>} : memref<66x8xbf16, #tpu.memory_space<vmem>>, vector<4x4xbf16>,
    %c0_32 = arith.constant 0 : index
    %c5 = arith.constant 5 : index
    %c0_33 = arith.constant 0 : index
    %c0_34 = arith.constant 0 : index
    %42 = vector.load %arg1[%c0_32, %c5, %c0_33, %c0_34] : memref<1x8x4x256xf32, #tpu.memory_space<vmem>>, vector<1x1x4x256xf32>
    %43 = vector.shape_cast %42 : vector<1x1x4x256xf32> to vector<4x256xf32>
    %44 = vector.extract_strided_slice %43 {offsets = [0, 0], sizes = [4, 4], strides = [1, 1]} : vector<4x256xf32> to vector<4x4xf32>
    %45 = arith.truncf %44 : vector<4x4xf32> to vector<4x4xbf16>
    %c37 = arith.constant 37 : index
    %c0_35 = arith.constant 0 : index
    %46 = vector.load %arg5[%c37, %c0_35] : memref<66x8xbf16, #tpu.memory_space<vmem>>, vector<4x4xbf16>
    tpu.vector_store %arg5[%c37, %c0_35], %45 {strides = array<i32>} : memref<66x8xbf16, #tpu.memory_space<vmem>>, vector<4x4xbf16>,
    %47 = vector.extract_strided_slice %43 {offsets = [0, 128], sizes = [4, 4], strides = [1, 1]} : vector<4x256xf32> to vector<4x4xf32>
    %48 = arith.truncf %47 : vector<4x4xf32> to vector<4x4xbf16>
    %c37_36 = arith.constant 37 : index
    %c4_37 = arith.constant 4 : index
    %49 = vector.load %arg5[%c37_36, %c4_37] : memref<66x8xbf16, #tpu.memory_space<vmem>>, vector<4x4xbf16>
    tpu.vector_store %arg5[%c37_36, %c4_37], %48 {strides = array<i32>} : memref<66x8xbf16, #tpu.memory_space<vmem>>, vector<4x4xbf16>,
    %c0_38 = arith.constant 0 : index
    %c6 = arith.constant 6 : index
    %c0_39 = arith.constant 0 : index
    %c0_40 = arith.constant 0 : index
    %50 = vector.load %arg1[%c0_38, %c6, %c0_39, %c0_40] : memref<1x8x4x256xf32, #tpu.memory_space<vmem>>, vector<1x1x4x256xf32>
    %51 = vector.shape_cast %50 : vector<1x1x4x256xf32> to vector<4x256xf32>
    %52 = vector.extract_strided_slice %51 {offsets = [0, 0], sizes = [4, 4], strides = [1, 1]} : vector<4x256xf32> to vector<4x4xf32>
    %53 = arith.truncf %52 : vector<4x4xf32> to vector<4x4xbf16>
    %c43 = arith.constant 43 : index
    %c0_41 = arith.constant 0 : index
    %54 = vector.load %arg5[%c43, %c0_41] : memref<66x8xbf16, #tpu.memory_space<vmem>>, vector<4x4xbf16>
    tpu.vector_store %arg5[%c43, %c0_41], %53 {strides = array<i32>} : memref<66x8xbf16, #tpu.memory_space<vmem>>, vector<4x4xbf16>,
    %55 = vector.extract_strided_slice %51 {offsets = [0, 128], sizes = [4, 4], strides = [1, 1]} : vector<4x256xf32> to vector<4x4xf32>
    %56 = arith.truncf %55 : vector<4x4xf32> to vector<4x4xbf16>
    %c43_42 = arith.constant 43 : index
    %c4_43 = arith.constant 4 : index
    %57 = vector.load %arg5[%c43_42, %c4_43] : memref<66x8xbf16, #tpu.memory_space<vmem>>, vector<4x4xbf16>
    tpu.vector_store %arg5[%c43_42, %c4_43], %56 {strides = array<i32>} : memref<66x8xbf16, #tpu.memory_space<vmem>>, vector<4x4xbf16>,
    %c0_44 = arith.constant 0 : index
    %c7_45 = arith.constant 7 : index
    %c0_46 = arith.constant 0 : index
    %c0_47 = arith.constant 0 : index
    %58 = vector.load %arg1[%c0_44, %c7_45, %c0_46, %c0_47] : memref<1x8x4x256xf32, #tpu.memory_space<vmem>>, vector<1x1x4x256xf32>
    %59 = vector.shape_cast %58 : vector<1x1x4x256xf32> to vector<4x256xf32>
    %60 = vector.extract_strided_slice %59 {offsets = [0, 0], sizes = [4, 4], strides = [1, 1]} : vector<4x256xf32> to vector<4x4xf32>
    %61 = arith.truncf %60 : vector<4x4xf32> to vector<4x4xbf16>
    %c49 = arith.constant 49 : index
    %c0_48 = arith.constant 0 : index
    %62 = vector.load %arg5[%c49, %c0_48] : memref<66x8xbf16, #tpu.memory_space<vmem>>, vector<4x4xbf16>
    tpu.vector_store %arg5[%c49, %c0_48], %61 {strides = array<i32>} : memref<66x8xbf16, #tpu.memory_space<vmem>>, vector<4x4xbf16>,
    %63 = vector.extract_strided_slice %59 {offsets = [0, 128], sizes = [4, 4], strides = [1, 1]} : vector<4x256xf32> to vector<4x4xf32>
    %64 = arith.truncf %63 : vector<4x4xf32> to vector<4x4xbf16>
    %c49_49 = arith.constant 49 : index
    %c4_50 = arith.constant 4 : index
    %65 = vector.load %arg5[%c49_49, %c4_50] : memref<66x8xbf16, #tpu.memory_space<vmem>>, vector<4x4xbf16>
    tpu.vector_store %arg5[%c49_49, %c4_50], %64 {strides = array<i32>} : memref<66x8xbf16, #tpu.memory_space<vmem>>, vector<4x4xbf16>,
    %c0_51 = arith.constant 0 : index
    %c4_52 = arith.constant 4 : index
    %66 = vector.load %arg5[%c0_51, %c4_52] : memref<66x8xbf16, #tpu.memory_space<vmem>>, vector<42x4xbf16>
    %c1_53 = arith.constant 1 : index
    %c0_54 = arith.constant 0 : index
    %67 = vector.load %arg5[%c1_53, %c0_54] : memref<66x8xbf16, #tpu.memory_space<vmem>>, vector<42x4xbf16>
    %c1_55 = arith.constant 1 : index
    %c4_56 = arith.constant 4 : index
    %68 = vector.load %arg5[%c1_55, %c4_56] : memref<66x8xbf16, #tpu.memory_space<vmem>>, vector<42x4xbf16>
    %c2_57 = arith.constant 2 : index
    %c0_58 = arith.constant 0 : index
    %69 = vector.load %arg5[%c2_57, %c0_58] : memref<66x8xbf16, #tpu.memory_space<vmem>>, vector<42x4xbf16>
    %c6_59 = arith.constant 6 : index
    %c4_60 = arith.constant 4 : index
    %70 = vector.load %arg5[%c6_59, %c4_60] : memref<66x8xbf16, #tpu.memory_space<vmem>>, vector<42x4xbf16>
    %c7_61 = arith.constant 7 : index
    %c0_62 = arith.constant 0 : index
    %71 = vector.load %arg5[%c7_61, %c0_62] : memref<66x8xbf16, #tpu.memory_space<vmem>>, vector<42x4xbf16>
    %c7_63 = arith.constant 7 : index
    %c4_64 = arith.constant 4 : index
    %72 = vector.load %arg5[%c7_63, %c4_64] : memref<66x8xbf16, #tpu.memory_space<vmem>>, vector<42x4xbf16>
    %c8 = arith.constant 8 : index
    %c0_65 = arith.constant 0 : index
    %73 = vector.load %arg5[%c8, %c0_65] : memref<66x8xbf16, #tpu.memory_space<vmem>>, vector<42x4xbf16>
    %c12 = arith.constant 12 : index
    %c4_66 = arith.constant 4 : index
    %74 = vector.load %arg5[%c12, %c4_66] : memref<66x8xbf16, #tpu.memory_space<vmem>>, vector<42x4xbf16>
    %c13_67 = arith.constant 13 : index
    %c0_68 = arith.constant 0 : index
    %75 = vector.load %arg5[%c13_67, %c0_68] : memref<66x8xbf16, #tpu.memory_space<vmem>>, vector<42x4xbf16>
    %c13_69 = arith.constant 13 : index
    %c4_70 = arith.constant 4 : index
    %76 = vector.load %arg5[%c13_69, %c4_70] : memref<66x8xbf16, #tpu.memory_space<vmem>>, vector<42x4xbf16>
    %c14 = arith.constant 14 : index
    %c0_71 = arith.constant 0 : index
    %77 = vector.load %arg5[%c14, %c0_71] : memref<66x8xbf16, #tpu.memory_space<vmem>>, vector<42x4xbf16>
    %c18 = arith.constant 18 : index
    %c4_72 = arith.constant 4 : index
    %78 = vector.load %arg5[%c18, %c4_72] : memref<66x8xbf16, #tpu.memory_space<vmem>>, vector<42x4xbf16>
    %c19_73 = arith.constant 19 : index
    %c0_74 = arith.constant 0 : index
    %79 = vector.load %arg5[%c19_73, %c0_74] : memref<66x8xbf16, #tpu.memory_space<vmem>>, vector<42x4xbf16>
    %c19_75 = arith.constant 19 : index
    %c4_76 = arith.constant 4 : index
    %80 = vector.load %arg5[%c19_75, %c4_76] : memref<66x8xbf16, #tpu.memory_space<vmem>>, vector<42x4xbf16>
    %c20 = arith.constant 20 : index
    %c0_77 = arith.constant 0 : index
    %81 = vector.load %arg5[%c20, %c0_77] : memref<66x8xbf16, #tpu.memory_space<vmem>>, vector<42x4xbf16>
    %cst_78 = arith.constant 0.000000e+00 : bf16
    %82 = vector.broadcast %cst_78 : bf16 to vector<42x64xbf16>
    %83 = tpu.concatenate %66, %67, %68, %69, %70, %71, %72, %73, %74, %75, %76, %77, %78, %79, %80, %81 in 1 : vector<42x4xbf16>, vector<42x4xbf16>, vector<42x4xbf16>, vector<42x4xbf16>, vector<42x4xbf16>, vector<42x4xbf16>, vector<42x4xbf16>, vector<42x4xbf16>, vector<42x4xbf16>, vector<42x4xbf16>, vector<42x4xbf16>, vector<42x4xbf16>, vector<42x4xbf16>, vector<42x4xbf16>, vector<42x4xbf16>, vector<42x4xbf16> -> vector<42x64xbf16>
    %84 = tpu.concatenate %83, %82 in 1 : vector<42x64xbf16>, vector<42x64xbf16> -> vector<42x128xbf16>
    %c0_79 = arith.constant 0 : index
    %c0_80 = arith.constant 0 : index
    %85 = vector.load %arg2[%c0_79, %c0_80] : memref<128x128xbf16, #tpu.memory_space<vmem>>, vector<128x128xbf16>
    %cst_81 = arith.constant dense<0.000000e+00> : vector<42x128xf32>
    %86 = tpu.matmul %84, %85, %cst_81 {dimension_numbers = #tpu.dot_dimension_numbers<[1], [0], [0], [1], [0, 0, 1, 1], [], []>} : vector<42x128xbf16>, vector<128x128xbf16>, vector<42x128xf32> -> vector<42x128xf32>
    %c0_82 = arith.constant 0 : index
    %c0_83 = arith.constant 0 : index
    %87 = vector.load %arg3[%c0_82, %c0_83] : memref<1x128xf32, #tpu.memory_space<vmem>>, vector<1x128xf32>
    %88 = vector.broadcast %87 : vector<1x128xf32> to vector<42x128xf32>
    %89 = arith.addf %86, %88 : vector<42x128xf32>
    %c0_84 = arith.constant 0 : index
    %c0_85 = arith.constant 0 : index
    %c0_86 = arith.constant 0 : index
    %90 = vector.load %arg4[%c0_84, %c0_85, %c0_86] : memref<1x42x128xf32, #tpu.memory_space<vmem>>, vector<1x42x128xf32>
    %91 = vector.shape_cast %90 : vector<1x42x128xf32> to vector<42x128xf32>
    %92 = vector.shape_cast %89 : vector<42x128xf32> to vector<1x42x128xf32>
    tpu.vector_store %arg4[%c0_84, %c0_85, %c0_86], %92 {strides = array<i32>} : memref<1x42x128xf32, #tpu.memory_space<vmem>>, vector<1x42x128xf32>,
    return
  }
  func.func @transform_0(%arg0: i32) -> (i32, i32, i32, i32) {
    %c0_i32 = arith.constant 0 : i32
    %c0_i32_0 = arith.constant 0 : i32
    %c0_i32_1 = arith.constant 0 : i32
    %c0_i32_2 = arith.constant 0 : i32
    return %arg0, %c0_i32, %c0_i32_0, %c0_i32_1 : i32, i32, i32, i32
  }
  func.func @transform_1(%arg0: i32) -> (i32, i32) {
    %c0_i32 = arith.constant 0 : i32
    %c0_i32_0 = arith.constant 0 : i32
    %c0_i32_1 = arith.constant 0 : i32
    return %c0_i32, %c0_i32_0 : i32, i32
  }
  func.func @transform_2(%arg0: i32) -> (i32, i32) {
    %c0_i32 = arith.constant 0 : i32
    %c0_i32_0 = arith.constant 0 : i32
    %c0_i32_1 = arith.constant 0 : i32
    return %c0_i32, %c0_i32_0 : i32, i32
  }
  func.func @transform_3(%arg0: i32) -> (i32, i32, i32) {
    %c0_i32 = arith.constant 0 : i32
    %c0_i32_0 = arith.constant 0 : i32
    %c0_i32_1 = arith.constant 0 : i32
    return %arg0, %c0_i32, %c0_i32_0 : i32, i32, i32
  }
}

module attributes {stable_mosaic.version = 11 : i64} {
  func.func @kernel(%arg0: i32, %arg1: memref<1x4x4x128xf32, #tpu.memory_space<vmem>>, %arg2: memref<2x128x128xbf16, #tpu.memory_space<vmem>>, %arg3: memref<2x1x128xf32, #tpu.memory_space<vmem>>, %arg4: memref<2x128x128xbf16, #tpu.memory_space<vmem>>, %arg5: memref<2x1x128xf32, #tpu.memory_space<vmem>>, %arg6: memref<128x128xbf16, #tpu.memory_space<vmem>>, %arg7: memref<1x128xf32, #tpu.memory_space<vmem>>, %arg8: memref<1x24x128xf32, #tpu.memory_space<vmem>>, %arg9: memref<42x8xbf16, #tpu.memory_space<vmem>>, %arg10: memref<24x128xf32, #tpu.memory_space<vmem>>) attributes {dimension_semantics = [#tpu.dimension_semantics<parallel>], iteration_bounds = array<i64: 2>, scalar_prefetch = 0 : i64, scratch_operands = 2 : i64, tpu.core_type = #tpu.core_type<tc>, window_params = [{transform_indices = @transform_0, window_bounds = array<i64: 1, 4, 4, 128>}, {pipeline_mode = #tpu.pipeline_mode<synchronous>, transform_indices = @transform_1, window_bounds = array<i64: 2, 128, 128>}, {pipeline_mode = #tpu.pipeline_mode<synchronous>, transform_indices = @transform_2, window_bounds = array<i64: 2, 1, 128>}, {pipeline_mode = #tpu.pipeline_mode<synchronous>, transform_indices = @transform_3, window_bounds = array<i64: 2, 128, 128>}, {pipeline_mode = #tpu.pipeline_mode<synchronous>, transform_indices = @transform_4, window_bounds = array<i64: 2, 1, 128>}, {pipeline_mode = #tpu.pipeline_mode<synchronous>, transform_indices = @transform_5, window_bounds = array<i64: 128, 128>}, {pipeline_mode = #tpu.pipeline_mode<synchronous>, transform_indices = @transform_6, window_bounds = array<i64: 1, 128>}, {transform_indices = @transform_7, window_bounds = array<i64: 1, 24, 128>}]} {
    %cst = arith.constant 0.000000e+00 : bf16
    %0 = vector.broadcast %cst : bf16 to vector<42x8xbf16>
    %c0 = arith.constant 0 : index
    %c0_0 = arith.constant 0 : index
    %1 = vector.load %arg9[%c0, %c0_0] : memref<42x8xbf16, #tpu.memory_space<vmem>>, vector<42x8xbf16>
    tpu.vector_store %arg9[%c0, %c0_0], %0 {strides = array<i32>} : memref<42x8xbf16, #tpu.memory_space<vmem>>, vector<42x8xbf16>,
    %cst_1 = arith.constant 0.000000e+00 : f32
    %2 = vector.broadcast %cst_1 : f32 to vector<24x128xf32>
    %c0_2 = arith.constant 0 : index
    %c0_3 = arith.constant 0 : index
    %3 = vector.load %arg10[%c0_2, %c0_3] : memref<24x128xf32, #tpu.memory_space<vmem>>, vector<24x128xf32>
    tpu.vector_store %arg10[%c0_2, %c0_3], %2 {strides = array<i32>} : memref<24x128xf32, #tpu.memory_space<vmem>>, vector<24x128xf32>,
    %c0_4 = arith.constant 0 : index
    %c0_5 = arith.constant 0 : index
    %c0_6 = arith.constant 0 : index
    %c0_7 = arith.constant 0 : index
    %4 = vector.load %arg1[%c0_4, %c0_5, %c0_6, %c0_7] : memref<1x4x4x128xf32, #tpu.memory_space<vmem>>, vector<1x1x4x128xf32>
    %5 = vector.shape_cast %4 : vector<1x1x4x128xf32> to vector<4x128xf32>
    %c0_8 = arith.constant 0 : index
    %c0_9 = arith.constant 0 : index
    %6 = vector.load %arg10[%c0_8, %c0_9] : memref<24x128xf32, #tpu.memory_space<vmem>>, vector<4x128xf32>
    tpu.vector_store %arg10[%c0_8, %c0_9], %5 {strides = array<i32>} : memref<24x128xf32, #tpu.memory_space<vmem>>, vector<4x128xf32>,
    %c0_10 = arith.constant 0 : index
    %c1 = arith.constant 1 : index
    %c0_11 = arith.constant 0 : index
    %c0_12 = arith.constant 0 : index
    %7 = vector.load %arg1[%c0_10, %c1, %c0_11, %c0_12] : memref<1x4x4x128xf32, #tpu.memory_space<vmem>>, vector<1x1x4x128xf32>
    %8 = vector.shape_cast %7 : vector<1x1x4x128xf32> to vector<4x128xf32>
    %c6 = arith.constant 6 : index
    %c0_13 = arith.constant 0 : index
    %9 = vector.load %arg10[%c6, %c0_13] : memref<24x128xf32, #tpu.memory_space<vmem>>, vector<4x128xf32>
    tpu.vector_store %arg10[%c6, %c0_13], %8 {strides = array<i32>} : memref<24x128xf32, #tpu.memory_space<vmem>>, vector<4x128xf32>,
    %c0_14 = arith.constant 0 : index
    %c2 = arith.constant 2 : index
    %c0_15 = arith.constant 0 : index
    %c0_16 = arith.constant 0 : index
    %10 = vector.load %arg1[%c0_14, %c2, %c0_15, %c0_16] : memref<1x4x4x128xf32, #tpu.memory_space<vmem>>, vector<1x1x4x128xf32>
    %11 = vector.shape_cast %10 : vector<1x1x4x128xf32> to vector<4x128xf32>
    %c12 = arith.constant 12 : index
    %c0_17 = arith.constant 0 : index
    %12 = vector.load %arg10[%c12, %c0_17] : memref<24x128xf32, #tpu.memory_space<vmem>>, vector<4x128xf32>
    tpu.vector_store %arg10[%c12, %c0_17], %11 {strides = array<i32>} : memref<24x128xf32, #tpu.memory_space<vmem>>, vector<4x128xf32>,
    %c0_18 = arith.constant 0 : index
    %c3 = arith.constant 3 : index
    %c0_19 = arith.constant 0 : index
    %c0_20 = arith.constant 0 : index
    %13 = vector.load %arg1[%c0_18, %c3, %c0_19, %c0_20] : memref<1x4x4x128xf32, #tpu.memory_space<vmem>>, vector<1x1x4x128xf32>
    %14 = vector.shape_cast %13 : vector<1x1x4x128xf32> to vector<4x128xf32>
    %c18 = arith.constant 18 : index
    %c0_21 = arith.constant 0 : index
    %15 = vector.load %arg10[%c18, %c0_21] : memref<24x128xf32, #tpu.memory_space<vmem>>, vector<4x128xf32>
    tpu.vector_store %arg10[%c18, %c0_21], %14 {strides = array<i32>} : memref<24x128xf32, #tpu.memory_space<vmem>>, vector<4x128xf32>,
    %c0_i32 = arith.constant 0 : i32
    %c2_i32 = arith.constant 2 : i32
    %16 = arith.addi %c0_i32, %c2_i32 : i32
    %c1_i32 = arith.constant 1 : i32
    scf.for %arg11 = %c0_i32 to %16 step %c1_i32  : i32 {
      %c0_60 = arith.constant 0 : index
      %c0_61 = arith.constant 0 : index
      %48 = vector.load %arg10[%c0_60, %c0_61] : memref<24x128xf32, #tpu.memory_space<vmem>>, vector<4x8xf32>
      %cst_62 = arith.constant 0.000000e+00 : f32
      %49 = vector.broadcast %cst_62 : f32 to vector<4x8xf32>
      %50 = arith.maximumf %48, %49 : vector<4x8xf32>
      %51 = arith.truncf %50 : vector<4x8xf32> to vector<4x8xbf16>
      %c7_63 = arith.constant 7 : index
      %c0_64 = arith.constant 0 : index
      %52 = vector.load %arg9[%c7_63, %c0_64] : memref<42x8xbf16, #tpu.memory_space<vmem>>, vector<4x8xbf16>
      tpu.vector_store %arg9[%c7_63, %c0_64], %51 {strides = array<i32>} : memref<42x8xbf16, #tpu.memory_space<vmem>>, vector<4x8xbf16>,
      %c6_65 = arith.constant 6 : index
      %c0_66 = arith.constant 0 : index
      %53 = vector.load %arg10[%c6_65, %c0_66] : memref<24x128xf32, #tpu.memory_space<vmem>>, vector<4x8xf32>
      %cst_67 = arith.constant 0.000000e+00 : f32
      %54 = vector.broadcast %cst_67 : f32 to vector<4x8xf32>
      %55 = arith.maximumf %53, %54 : vector<4x8xf32>
      %56 = arith.truncf %55 : vector<4x8xf32> to vector<4x8xbf16>
      %c13_68 = arith.constant 13 : index
      %c0_69 = arith.constant 0 : index
      %57 = vector.load %arg9[%c13_68, %c0_69] : memref<42x8xbf16, #tpu.memory_space<vmem>>, vector<4x8xbf16>
      tpu.vector_store %arg9[%c13_68, %c0_69], %56 {strides = array<i32>} : memref<42x8xbf16, #tpu.memory_space<vmem>>, vector<4x8xbf16>,
      %c12_70 = arith.constant 12 : index
      %c0_71 = arith.constant 0 : index
      %58 = vector.load %arg10[%c12_70, %c0_71] : memref<24x128xf32, #tpu.memory_space<vmem>>, vector<4x8xf32>
      %cst_72 = arith.constant 0.000000e+00 : f32
      %59 = vector.broadcast %cst_72 : f32 to vector<4x8xf32>
      %60 = arith.maximumf %58, %59 : vector<4x8xf32>
      %61 = arith.truncf %60 : vector<4x8xf32> to vector<4x8xbf16>
      %c19_73 = arith.constant 19 : index
      %c0_74 = arith.constant 0 : index
      %62 = vector.load %arg9[%c19_73, %c0_74] : memref<42x8xbf16, #tpu.memory_space<vmem>>, vector<4x8xbf16>
      tpu.vector_store %arg9[%c19_73, %c0_74], %61 {strides = array<i32>} : memref<42x8xbf16, #tpu.memory_space<vmem>>, vector<4x8xbf16>,
      %c18_75 = arith.constant 18 : index
      %c0_76 = arith.constant 0 : index
      %63 = vector.load %arg10[%c18_75, %c0_76] : memref<24x128xf32, #tpu.memory_space<vmem>>, vector<4x8xf32>
      %cst_77 = arith.constant 0.000000e+00 : f32
      %64 = vector.broadcast %cst_77 : f32 to vector<4x8xf32>
      %65 = arith.maximumf %63, %64 : vector<4x8xf32>
      %66 = arith.truncf %65 : vector<4x8xf32> to vector<4x8xbf16>
      %c25_78 = arith.constant 25 : index
      %c0_79 = arith.constant 0 : index
      %67 = vector.load %arg9[%c25_78, %c0_79] : memref<42x8xbf16, #tpu.memory_space<vmem>>, vector<4x8xbf16>
      tpu.vector_store %arg9[%c25_78, %c0_79], %66 {strides = array<i32>} : memref<42x8xbf16, #tpu.memory_space<vmem>>, vector<4x8xbf16>,
      %c0_80 = arith.constant 0 : index
      %c0_81 = arith.constant 0 : index
      %68 = vector.load %arg9[%c0_80, %c0_81] : memref<42x8xbf16, #tpu.memory_space<vmem>>, vector<24x8xbf16>
      %c1_82 = arith.constant 1 : index
      %c0_83 = arith.constant 0 : index
      %69 = vector.load %arg9[%c1_82, %c0_83] : memref<42x8xbf16, #tpu.memory_space<vmem>>, vector<24x8xbf16>
      %c2_84 = arith.constant 2 : index
      %c0_85 = arith.constant 0 : index
      %70 = vector.load %arg9[%c2_84, %c0_85] : memref<42x8xbf16, #tpu.memory_space<vmem>>, vector<24x8xbf16>
      %c6_86 = arith.constant 6 : index
      %c0_87 = arith.constant 0 : index
      %71 = vector.load %arg9[%c6_86, %c0_87] : memref<42x8xbf16, #tpu.memory_space<vmem>>, vector<24x8xbf16>
      %c7_88 = arith.constant 7 : index
      %c0_89 = arith.constant 0 : index
      %72 = vector.load %arg9[%c7_88, %c0_89] : memref<42x8xbf16, #tpu.memory_space<vmem>>, vector<24x8xbf16>
      %c8_90 = arith.constant 8 : index
      %c0_91 = arith.constant 0 : index
      %73 = vector.load %arg9[%c8_90, %c0_91] : memref<42x8xbf16, #tpu.memory_space<vmem>>, vector<24x8xbf16>
      %c12_92 = arith.constant 12 : index
      %c0_93 = arith.constant 0 : index
      %74 = vector.load %arg9[%c12_92, %c0_93] : memref<42x8xbf16, #tpu.memory_space<vmem>>, vector<24x8xbf16>
      %c13_94 = arith.constant 13 : index
      %c0_95 = arith.constant 0 : index
      %75 = vector.load %arg9[%c13_94, %c0_95] : memref<42x8xbf16, #tpu.memory_space<vmem>>, vector<24x8xbf16>
      %c14_96 = arith.constant 14 : index
      %c0_97 = arith.constant 0 : index
      %76 = vector.load %arg9[%c14_96, %c0_97] : memref<42x8xbf16, #tpu.memory_space<vmem>>, vector<24x8xbf16>
      %cst_98 = arith.constant 0.000000e+00 : bf16
      %77 = vector.broadcast %cst_98 : bf16 to vector<24x56xbf16>
      %78 = tpu.concatenate %68, %69, %70, %71, %72, %73, %74, %75, %76, %77 in 1 : vector<24x8xbf16>, vector<24x8xbf16>, vector<24x8xbf16>, vector<24x8xbf16>, vector<24x8xbf16>, vector<24x8xbf16>, vector<24x8xbf16>, vector<24x8xbf16>, vector<24x8xbf16>, vector<24x56xbf16> -> vector<24x128xbf16>
      %79 = arith.index_cast %arg11 : i32 to index
      %c0_99 = arith.constant 0 : index
      %c0_100 = arith.constant 0 : index
      %80 = vector.load %arg2[%79, %c0_99, %c0_100] : memref<2x128x128xbf16, #tpu.memory_space<vmem>>, vector<1x128x128xbf16>
      %81 = vector.shape_cast %80 : vector<1x128x128xbf16> to vector<128x128xbf16>
      %cst_101 = arith.constant dense<0.000000e+00> : vector<24x128xf32>
      %82 = tpu.matmul %78, %81, %cst_101 {dimension_numbers = #tpu.dot_dimension_numbers<[1], [0], [0], [1], [0, 0, 1, 1], [], []>} : vector<24x128xbf16>, vector<128x128xbf16>, vector<24x128xf32> -> vector<24x128xf32>
      %83 = arith.index_cast %arg11 : i32 to index
      %c0_102 = arith.constant 0 : index
      %c0_103 = arith.constant 0 : index
      %84 = vector.load %arg3[%83, %c0_102, %c0_103] : memref<2x1x128xf32, #tpu.memory_space<vmem>>, vector<1x1x128xf32>
      %85 = vector.shape_cast %84 : vector<1x1x128xf32> to vector<1x128xf32>
      %86 = vector.broadcast %85 : vector<1x128xf32> to vector<24x128xf32>
      %87 = arith.addf %82, %86 : vector<24x128xf32>
      %cst_104 = arith.constant 0.000000e+00 : f32
      %88 = vector.broadcast %cst_104 : f32 to vector<24x128xf32>
      %89 = arith.maximumf %87, %88 : vector<24x128xf32>
      %90 = arith.truncf %89 : vector<24x128xf32> to vector<24x128xbf16>
      %91 = arith.index_cast %arg11 : i32 to index
      %c0_105 = arith.constant 0 : index
      %c0_106 = arith.constant 0 : index
      %92 = vector.load %arg4[%91, %c0_105, %c0_106] : memref<2x128x128xbf16, #tpu.memory_space<vmem>>, vector<1x128x128xbf16>
      %93 = vector.shape_cast %92 : vector<1x128x128xbf16> to vector<128x128xbf16>
      %cst_107 = arith.constant dense<0.000000e+00> : vector<24x128xf32>
      %94 = tpu.matmul %90, %93, %cst_107 {dimension_numbers = #tpu.dot_dimension_numbers<[1], [0], [0], [1], [0, 0, 1, 1], [], []>} : vector<24x128xbf16>, vector<128x128xbf16>, vector<24x128xf32> -> vector<24x128xf32>
      %95 = arith.index_cast %arg11 : i32 to index
      %c0_108 = arith.constant 0 : index
      %c0_109 = arith.constant 0 : index
      %96 = vector.load %arg5[%95, %c0_108, %c0_109] : memref<2x1x128xf32, #tpu.memory_space<vmem>>, vector<1x1x128xf32>
      %97 = vector.shape_cast %96 : vector<1x1x128xf32> to vector<1x128xf32>
      %98 = vector.broadcast %97 : vector<1x128xf32> to vector<24x128xf32>
      %99 = arith.addf %94, %98 : vector<24x128xf32>
      %c0_110 = arith.constant 0 : index
      %c0_111 = arith.constant 0 : index
      %100 = vector.load %arg10[%c0_110, %c0_111] : memref<24x128xf32, #tpu.memory_space<vmem>>, vector<24x128xf32>
      %101 = arith.addf %100, %99 : vector<24x128xf32>
      %cst_112 = arith.constant 0.000000e+00 : f32
      %102 = vector.broadcast %cst_112 : f32 to vector<24x128xf32>
      %103 = arith.maximumf %101, %102 : vector<24x128xf32>
      %c0_113 = arith.constant 0 : index
      %c0_114 = arith.constant 0 : index
      %104 = vector.load %arg10[%c0_113, %c0_114] : memref<24x128xf32, #tpu.memory_space<vmem>>, vector<24x128xf32>
      tpu.vector_store %arg10[%c0_113, %c0_114], %103 {strides = array<i32>} : memref<24x128xf32, #tpu.memory_space<vmem>>, vector<24x128xf32>,
    }
    %c2_i32_22 = arith.constant 2 : i32
    %c0_23 = arith.constant 0 : index
    %c0_24 = arith.constant 0 : index
    %17 = vector.load %arg10[%c0_23, %c0_24] : memref<24x128xf32, #tpu.memory_space<vmem>>, vector<4x8xf32>
    %18 = arith.truncf %17 : vector<4x8xf32> to vector<4x8xbf16>
    %c7 = arith.constant 7 : index
    %c0_25 = arith.constant 0 : index
    %19 = vector.load %arg9[%c7, %c0_25] : memref<42x8xbf16, #tpu.memory_space<vmem>>, vector<4x8xbf16>
    tpu.vector_store %arg9[%c7, %c0_25], %18 {strides = array<i32>} : memref<42x8xbf16, #tpu.memory_space<vmem>>, vector<4x8xbf16>,
    %c6_26 = arith.constant 6 : index
    %c0_27 = arith.constant 0 : index
    %20 = vector.load %arg10[%c6_26, %c0_27] : memref<24x128xf32, #tpu.memory_space<vmem>>, vector<4x8xf32>
    %21 = arith.truncf %20 : vector<4x8xf32> to vector<4x8xbf16>
    %c13 = arith.constant 13 : index
    %c0_28 = arith.constant 0 : index
    %22 = vector.load %arg9[%c13, %c0_28] : memref<42x8xbf16, #tpu.memory_space<vmem>>, vector<4x8xbf16>
    tpu.vector_store %arg9[%c13, %c0_28], %21 {strides = array<i32>} : memref<42x8xbf16, #tpu.memory_space<vmem>>, vector<4x8xbf16>,
    %c12_29 = arith.constant 12 : index
    %c0_30 = arith.constant 0 : index
    %23 = vector.load %arg10[%c12_29, %c0_30] : memref<24x128xf32, #tpu.memory_space<vmem>>, vector<4x8xf32>
    %24 = arith.truncf %23 : vector<4x8xf32> to vector<4x8xbf16>
    %c19 = arith.constant 19 : index
    %c0_31 = arith.constant 0 : index
    %25 = vector.load %arg9[%c19, %c0_31] : memref<42x8xbf16, #tpu.memory_space<vmem>>, vector<4x8xbf16>
    tpu.vector_store %arg9[%c19, %c0_31], %24 {strides = array<i32>} : memref<42x8xbf16, #tpu.memory_space<vmem>>, vector<4x8xbf16>,
    %c18_32 = arith.constant 18 : index
    %c0_33 = arith.constant 0 : index
    %26 = vector.load %arg10[%c18_32, %c0_33] : memref<24x128xf32, #tpu.memory_space<vmem>>, vector<4x8xf32>
    %27 = arith.truncf %26 : vector<4x8xf32> to vector<4x8xbf16>
    %c25 = arith.constant 25 : index
    %c0_34 = arith.constant 0 : index
    %28 = vector.load %arg9[%c25, %c0_34] : memref<42x8xbf16, #tpu.memory_space<vmem>>, vector<4x8xbf16>
    tpu.vector_store %arg9[%c25, %c0_34], %27 {strides = array<i32>} : memref<42x8xbf16, #tpu.memory_space<vmem>>, vector<4x8xbf16>,
    %c0_35 = arith.constant 0 : index
    %c0_36 = arith.constant 0 : index
    %29 = vector.load %arg9[%c0_35, %c0_36] : memref<42x8xbf16, #tpu.memory_space<vmem>>, vector<24x8xbf16>
    %c1_37 = arith.constant 1 : index
    %c0_38 = arith.constant 0 : index
    %30 = vector.load %arg9[%c1_37, %c0_38] : memref<42x8xbf16, #tpu.memory_space<vmem>>, vector<24x8xbf16>
    %c2_39 = arith.constant 2 : index
    %c0_40 = arith.constant 0 : index
    %31 = vector.load %arg9[%c2_39, %c0_40] : memref<42x8xbf16, #tpu.memory_space<vmem>>, vector<24x8xbf16>
    %c6_41 = arith.constant 6 : index
    %c0_42 = arith.constant 0 : index
    %32 = vector.load %arg9[%c6_41, %c0_42] : memref<42x8xbf16, #tpu.memory_space<vmem>>, vector<24x8xbf16>
    %c7_43 = arith.constant 7 : index
    %c0_44 = arith.constant 0 : index
    %33 = vector.load %arg9[%c7_43, %c0_44] : memref<42x8xbf16, #tpu.memory_space<vmem>>, vector<24x8xbf16>
    %c8 = arith.constant 8 : index
    %c0_45 = arith.constant 0 : index
    %34 = vector.load %arg9[%c8, %c0_45] : memref<42x8xbf16, #tpu.memory_space<vmem>>, vector<24x8xbf16>
    %c12_46 = arith.constant 12 : index
    %c0_47 = arith.constant 0 : index
    %35 = vector.load %arg9[%c12_46, %c0_47] : memref<42x8xbf16, #tpu.memory_space<vmem>>, vector<24x8xbf16>
    %c13_48 = arith.constant 13 : index
    %c0_49 = arith.constant 0 : index
    %36 = vector.load %arg9[%c13_48, %c0_49] : memref<42x8xbf16, #tpu.memory_space<vmem>>, vector<24x8xbf16>
    %c14 = arith.constant 14 : index
    %c0_50 = arith.constant 0 : index
    %37 = vector.load %arg9[%c14, %c0_50] : memref<42x8xbf16, #tpu.memory_space<vmem>>, vector<24x8xbf16>
    %cst_51 = arith.constant 0.000000e+00 : bf16
    %38 = vector.broadcast %cst_51 : bf16 to vector<24x56xbf16>
    %39 = tpu.concatenate %29, %30, %31, %32, %33, %34, %35, %36, %37, %38 in 1 : vector<24x8xbf16>, vector<24x8xbf16>, vector<24x8xbf16>, vector<24x8xbf16>, vector<24x8xbf16>, vector<24x8xbf16>, vector<24x8xbf16>, vector<24x8xbf16>, vector<24x8xbf16>, vector<24x56xbf16> -> vector<24x128xbf16>
    %c0_52 = arith.constant 0 : index
    %c0_53 = arith.constant 0 : index
    %40 = vector.load %arg6[%c0_52, %c0_53] : memref<128x128xbf16, #tpu.memory_space<vmem>>, vector<128x128xbf16>
    %cst_54 = arith.constant dense<0.000000e+00> : vector<24x128xf32>
    %41 = tpu.matmul %39, %40, %cst_54 {dimension_numbers = #tpu.dot_dimension_numbers<[1], [0], [0], [1], [0, 0, 1, 1], [], []>} : vector<24x128xbf16>, vector<128x128xbf16>, vector<24x128xf32> -> vector<24x128xf32>
    %c0_55 = arith.constant 0 : index
    %c0_56 = arith.constant 0 : index
    %42 = vector.load %arg7[%c0_55, %c0_56] : memref<1x128xf32, #tpu.memory_space<vmem>>, vector<1x128xf32>
    %43 = vector.broadcast %42 : vector<1x128xf32> to vector<24x128xf32>
    %44 = arith.addf %41, %43 : vector<24x128xf32>
    %c0_57 = arith.constant 0 : index
    %c0_58 = arith.constant 0 : index
    %c0_59 = arith.constant 0 : index
    %45 = vector.load %arg8[%c0_57, %c0_58, %c0_59] : memref<1x24x128xf32, #tpu.memory_space<vmem>>, vector<1x24x128xf32>
    %46 = vector.shape_cast %45 : vector<1x24x128xf32> to vector<24x128xf32>
    %47 = vector.shape_cast %44 : vector<24x128xf32> to vector<1x24x128xf32>
    tpu.vector_store %arg8[%c0_57, %c0_58, %c0_59], %47 {strides = array<i32>} : memref<1x24x128xf32, #tpu.memory_space<vmem>>, vector<1x24x128xf32>,
    return
  }
  func.func @transform_0(%arg0: i32) -> (i32, i32, i32, i32) {
    %c0_i32 = arith.constant 0 : i32
    %c0_i32_0 = arith.constant 0 : i32
    %c0_i32_1 = arith.constant 0 : i32
    %c0_i32_2 = arith.constant 0 : i32
    return %arg0, %c0_i32, %c0_i32_0, %c0_i32_1 : i32, i32, i32, i32
  }
  func.func @transform_1(%arg0: i32) -> (i32, i32, i32) {
    %c0_i32 = arith.constant 0 : i32
    %c0_i32_0 = arith.constant 0 : i32
    %c0_i32_1 = arith.constant 0 : i32
    %c0_i32_2 = arith.constant 0 : i32
    return %c0_i32, %c0_i32_0, %c0_i32_1 : i32, i32, i32
  }
  func.func @transform_2(%arg0: i32) -> (i32, i32, i32) {
    %c0_i32 = arith.constant 0 : i32
    %c0_i32_0 = arith.constant 0 : i32
    %c0_i32_1 = arith.constant 0 : i32
    %c0_i32_2 = arith.constant 0 : i32
    return %c0_i32, %c0_i32_0, %c0_i32_1 : i32, i32, i32
  }
  func.func @transform_3(%arg0: i32) -> (i32, i32, i32) {
    %c0_i32 = arith.constant 0 : i32
    %c0_i32_0 = arith.constant 0 : i32
    %c0_i32_1 = arith.constant 0 : i32
    %c0_i32_2 = arith.constant 0 : i32
    return %c0_i32, %c0_i32_0, %c0_i32_1 : i32, i32, i32
  }
  func.func @transform_4(%arg0: i32) -> (i32, i32, i32) {
    %c0_i32 = arith.constant 0 : i32
    %c0_i32_0 = arith.constant 0 : i32
    %c0_i32_1 = arith.constant 0 : i32
    %c0_i32_2 = arith.constant 0 : i32
    return %c0_i32, %c0_i32_0, %c0_i32_1 : i32, i32, i32
  }
  func.func @transform_5(%arg0: i32) -> (i32, i32) {
    %c0_i32 = arith.constant 0 : i32
    %c0_i32_0 = arith.constant 0 : i32
    %c0_i32_1 = arith.constant 0 : i32
    return %c0_i32, %c0_i32_0 : i32, i32
  }
  func.func @transform_6(%arg0: i32) -> (i32, i32) {
    %c0_i32 = arith.constant 0 : i32
    %c0_i32_0 = arith.constant 0 : i32
    %c0_i32_1 = arith.constant 0 : i32
    return %c0_i32, %c0_i32_0 : i32, i32
  }
  func.func @transform_7(%arg0: i32) -> (i32, i32, i32) {
    %c0_i32 = arith.constant 0 : i32
    %c0_i32_0 = arith.constant 0 : i32
    %c0_i32_1 = arith.constant 0 : i32
    return %arg0, %c0_i32, %c0_i32_0 : i32, i32, i32
  }
}

</mosaic_0001>

<llo_original>
// kernel: forward.4
$region0: #{forward.4}
  #allocation0 [shape = 'u32[]', space=smem, size = 0x4, offset = 0x4, fixed_abs, tag = 'smem constant byte address 0x4 - core index']
  #allocation1 [shape = 'u32[144,128]{1,0:T(1,128)}', space=vmem, size = 0x12000, scoped, tag = 'internal scratch']
  #allocation2 [shape = 'bf16[66,8]{1,0:T(8,128)(2,1)}', space=vmem, size = 0x4800, scoped, tag = 'scratch operand']
  %s0 = inlined_call_operand.vmem [shape: f32[2,8,4,256], index: 0, kind: input, shape index: {}]
  %s1 = inlined_call_operand.vmem [shape: bf16[128,128], index: 1, kind: input, shape index: {}]
  %s2 = inlined_call_operand.vmem [shape: f32[1,128], index: 2, kind: input, shape index: {}]
  %s3 = inlined_call_operand.vmem [shape: f32[2,42,128], index: 3, kind: output, shape index: {}]
  %s4 = sld [smem:[#allocation0]]
  $region45: #{forward.4} parent=0
    _
  %s6 = ssub.s32 1, %s4
  %s7 = scalar_select 0, %s6, %s4
  loop: start=0, step=1, limit=4
  $region2: #{forward.4} parent=0 // loop_pre_header
    _
  $region3: #{forward.4} parent=0 // loop_header
    %s9 = sphi 0, %s13
    %p10 = scmp.ge.s32.totalorder %s9, 4
    %s19 = sphi 0, %s21
    %s22 = sphi 0, %s19
    %s23 = sphi 0, %s22
    %s39 = sphi 0, %s23
    %s43 = sphi 0, %s43
    %s45 = sphi 0, %s43
    %s46 = sphi 0, %s45
    %s60 = sphi 0, %s46
    %s64 = sphi 0, %s64
    %s66 = sphi 0, %s64
    %s67 = sphi 0, %s66
    %s81 = sphi 0, %s67
    %s87 = sphi 0, %s89
    %s90 = sphi 0, %s87
    %s91 = sphi 0, %s90
    %s107 = sphi 0, %s91
  $region4: #{forward.4} parent=0 // loop_header_branch
    %12 = sbr.rel (%p10) target = $region8
  $region5: #{forward.4} parent=0 // loop_body
    %s14 = ssub.s32 %s9, 1
    %s15 = ssub.s32 %s9, 2
    %s16 = sadd.s32 %s9, 1
    %s17 = ssub.s32 %s9, %s16
    %p18 = scmp.eq.s32.totalorder %s17, 0
    %s20 = sadd.s32 %s19, 1
    %s21 = scalar_select %p18, %s19, %s20
    %p24 = pneg %p18
    %p25 = scmp.eq.s32.totalorder %s9, 1
    %p26 = por %p24, %p25
    %p27 = scmp.ne.s32.totalorder %s19, %s22
    %p28 = scmp.eq.s32.totalorder %s9, 0
    %p29 = por %p27, %p28
    %p30 = scmp.ne.s32.totalorder %s19, %s22
    %p31 = scmp.eq.s32.totalorder %s14, 1
    %p32 = por %p30, %p31
    %p33 = scmp.ne.s32.totalorder %s22, %s23
    %p34 = scmp.eq.s32.totalorder %s14, 0
    %p35 = por %p33, %p34
    %p36 = scmp.ne.s32.totalorder %s22, %s23
    %p37 = scmp.eq.s32.totalorder %s15, 1
    %p38 = por %p36, %p37
    %p40 = scmp.ne.s32.totalorder %s23, %s39
    %p41 = scmp.eq.s32.totalorder %s15, 0
    %p42 = por %p40, %p41
    %s44 = sadd.s32 %s43, 1
    %p47 = scmp.eq.s32.totalorder %s9, 1
    %p48 = scmp.ne.s32.totalorder %s43, %s45
    %p49 = scmp.eq.s32.totalorder %s9, 0
    %p50 = por %p48, %p49
    %p51 = scmp.ne.s32.totalorder %s43, %s45
    %p52 = scmp.eq.s32.totalorder %s14, 1
    %p53 = por %p51, %p52
    %p54 = scmp.ne.s32.totalorder %s45, %s46
    %p55 = scmp.eq.s32.totalorder %s14, 0
    %p56 = por %p54, %p55
    %p57 = scmp.ne.s32.totalorder %s45, %s46
    %p58 = scmp.eq.s32.totalorder %s15, 1
    %p59 = por %p57, %p58
    %p61 = scmp.ne.s32.totalorder %s46, %s60
    %p62 = scmp.eq.s32.totalorder %s15, 0
    %p63 = por %p61, %p62
    %s65 = sadd.s32 %s64, 1
    %p68 = scmp.eq.s32.totalorder %s9, 1
    %p69 = scmp.ne.s32.totalorder %s64, %s66
    %p70 = scmp.eq.s32.totalorder %s9, 0
    %p71 = por %p69, %p70
    %p72 = scmp.ne.s32.totalorder %s64, %s66
    %p73 = scmp.eq.s32.totalorder %s14, 1
    %p74 = por %p72, %p73
    %p75 = scmp.ne.s32.totalorder %s66, %s67
    %p76 = scmp.eq.s32.totalorder %s14, 0
    %p77 = por %p75, %p76
    %p78 = scmp.ne.s32.totalorder %s66, %s67
    %p79 = scmp.eq.s32.totalorder %s15, 1
    %p80 = por %p78, %p79
    %p82 = scmp.ne.s32.totalorder %s67, %s81
    %p83 = scmp.eq.s32.totalorder %s15, 0
    %p84 = por %p82, %p83
    %s85 = ssub.s32 %s9, %s16
    %p86 = scmp.eq.s32.totalorder %s85, 0
    %s88 = sadd.s32 %s87, 1
    %s89 = scalar_select %p86, %s87, %s88
    %p92 = pneg %p86
    %p93 = scmp.eq.s32.totalorder %s9, 1
    %p94 = por %p92, %p93
    %p95 = scmp.ne.s32.totalorder %s87, %s90
    %p96 = scmp.eq.s32.totalorder %s9, 0
    %p97 = por %p95, %p96
    %p98 = scmp.ne.s32.totalorder %s87, %s90
    %p99 = scmp.eq.s32.totalorder %s14, 1
    %p100 = por %p98, %p99
    %p101 = scmp.ne.s32.totalorder %s90, %s91
    %p102 = scmp.eq.s32.totalorder %s14, 0
    %p103 = por %p101, %p102
    %p104 = scmp.ne.s32.totalorder %s90, %s91
    %p105 = scmp.eq.s32.totalorder %s15, 1
    %p106 = por %p104, %p105
    %p108 = scmp.ne.s32.totalorder %s91, %s107
    %p109 = scmp.eq.s32.totalorder %s15, 0
    %p110 = por %p108, %p109
    %p111 = scmp.le.s32.totalorder 1, %s9
    %p112 = scmp.lt.s32.totalorder %s9, 3
    %p113 = pnand %p111, %p112
    %p114 = pneg %p113
    // Predicated region
    $region9: #{forward.4} parent=5 // pred_check
      _
    $region10: #{forward.4} parent=5 // pred_check_branch
      %116 = sbr.rel (%p113) target = $region12
    $region11: #{forward.4} parent=5 // pred_region
      %s117 = ssub.s32 %s9, 1
      // Predicated region
      $region13: #{forward.4} parent=11 // pred_check
        %p118 = pneg %p56
      $region14: #{forward.4} parent=11 // pred_check_branch
        %120 = sbr.rel (%p118) target = $region16
      $region15: #{forward.4} parent=11 // pred_region
        _
      $region16: #{forward.4} parent=11 // pred_fallthru
        _
      // Predicated region
      $region17: #{forward.4} parent=11 // pred_check
        %p121 = pneg %p77
      $region18: #{forward.4} parent=11 // pred_check_branch
        %123 = sbr.rel (%p121) target = $region20
      $region19: #{forward.4} parent=11 // pred_region
        _
      $region20: #{forward.4} parent=11 // pred_fallthru
        _
    $region12: #{forward.4} parent=5 // pred_fallthru
      _
    %p124 = scmp.lt.s32.totalorder %s9, 2
    // Predicated region
    $region21: #{forward.4} parent=5 // pred_check
      %p125 = pneg %p124
    $region22: #{forward.4} parent=5 // pred_check_branch
      %127 = sbr.rel (%p125) target = $region24
    $region23: #{forward.4} parent=5 // pred_region
      // Predicated region
      $region25: #{forward.4} parent=23 // pred_check
        %p128 = pneg %p29
      $region26: #{forward.4} parent=23 // pred_check_branch
        %130 = sbr.rel (%p128) target = $region28
      $region27: #{forward.4} parent=23 // pred_region
        %p131 = scmp.lt.s32.totalorder %s9, 1
        %s132 = scalar_select %p131, %s9, 1
        %s133 = smul.addr %s132, 16
        %s134 = smul.addr %s133, 4
        %s135 = scalar_lea.vmem %s0, %s134
      $region28: #{forward.4} parent=23 // pred_fallthru
        _
    $region24: #{forward.4} parent=5 // pred_fallthru
      _
    %p136 = scmp.le.s32.totalorder 1, %s9
    %p137 = scmp.lt.s32.totalorder %s9, 3
    %p138 = pnand %p136, %p137
    %p139 = pneg %p138
    // Predicated region
    $region29: #{forward.4} parent=5 // pred_check
      _
    $region30: #{forward.4} parent=5 // pred_check_branch
      %141 = sbr.rel (%p138) target = $region32
    $region31: #{forward.4} parent=5 // pred_region
      %s142 = ssub.s32 %s9, 1
      %p143 = scmp.lt.s32.totalorder %s14, 1
      %s144 = scalar_select %p143, %s14, 1
      %s145 = smul.addr %s144, 16
      %s146 = smul.addr %s145, 4
      %s147 = scalar_lea.vmem %s0, %s146
      %p148 = pneg %p35
      %p149 = pneg %p32
      %p150 = pneg %p56
      %p151 = pneg %p53
      %p152 = pneg %p77
      %p153 = pneg %p74
      %p154 = pneg %p103
      %p155 = pneg %p100
      %p156 = scmp.lt.s32.totalorder %s14, 1
      %s157 = scalar_select %p156, %s14, 1
      %s158 = smul.addr %s157, 6
      %s159 = smul.addr %s158, 8
      %s160 = scalar_lea.vmem %s3, %s159
      %p161 = scmp.lt.s32.totalorder %s14, 1
      %s162 = scalar_select %p161, %s14, 1
      %s163 = smul.addr %s162, 16
      %s164 = smul.addr %s163, 4
      %s165 = scalar_lea.vmem %s0, %s164
      %p166 = scmp.lt.s32.totalorder %s14, 1
      %s167 = scalar_select %p166, %s14, 1
      %s168 = smul.addr %s167, 6
      %s169 = smul.addr %s168, 8
      %s170 = scalar_lea.vmem %s3, %s169
      %vm172 = vcmask 60416
      %173 = vst.msk [vmem:[#allocation2] sm:$0xf] %vm172, 0
      %174 = vst.msk [vmem:[#allocation2 + $0x4] sm:$0xf] %vm172, 0
      %175 = vst.msk [vmem:[#allocation2 + $0x8] sm:$0xf] %vm172, 0
      %176 = vst.msk [vmem:[#allocation2 + $0xc] sm:$0xf] %vm172, 0
      %177 = vst.msk [vmem:[#allocation2 + $0x10] sm:$0xf] %vm172, 0
      %178 = vst.msk [vmem:[#allocation2 + $0x14] sm:$0xf] %vm172, 0
      %179 = vst.msk [vmem:[#allocation2 + $0x18] sm:$0xf] %vm172, 0
      %180 = vst.msk [vmem:[#allocation2 + $0x1c] sm:$0xf] %vm172, 0
      %vm181 = vcmask 57344
      %182 = vst.msk [vmem:[#allocation2 + $0x20] sm:$0x1] %vm181, 0
      %v183 = vld [vmem:[%s165] sm:$0xff]
      %v184 = vpack.c.bf16 %v183, %v183
      %v186 = vunpack.c.l.b16 %v184
      %v187 = vpack.c.b16 %v186, %v186
      %v189 = vshll.u32 %v187, 16
      %v191 = vrot.slane %v189, 5
      %v192 = vshrl.u32 %v187, 16
      %v194 = vrot.slane %v192, 4
      %v195 = vor.u32 %v194, %v191
      %v196 = vrot.slane %v195, 4
      %vm199 = vcmask 27651
      %vm200 = vsmask.f32 7950
      %vm201 = vmand %vm199, %vm200
      %v202 = vld [vmem:[#allocation2] sm:$0x8]
      %v203 = vsel %vm201, %v191, %v202
      %204 = vst [vmem:[#allocation2] sm:$0x8] %v203
      %vm205 = vcmask 25600
      %vm206 = vsmask.f32 1280
      %vm207 = vmand %vm205, %vm206
      %v208 = vld [vmem:[#allocation2 + $0x4] sm:$0x3]
      %v209 = vsel %vm207, %v196, %v208
      %210 = vst [vmem:[#allocation2 + $0x4] sm:$0x3] %v209
      %v212 = vcombine.high %v183, %v183
      %v214 = vpack.c.bf16 %v212, %v212
      %v216 = vunpack.c.l.b16 %v214
      %v217 = vpack.c.b16 %v216, %v216
      %v219 = vshll.u32 %v217, 16
      %v221 = vrot.slane %v219, 5
      %v222 = vshrl.u32 %v217, 16
      %v224 = vrot.slane %v222, 4
      %v225 = vor.u32 %v224, %v221
      %v226 = vrot.slane %v225, 4
      %227 = vrot.lane.b32.xlu0 %v221, 4
      %v228 = vpop.permute.xlu0 %227
      %229 = vrot.lane.b32.xlu0 %v226, 4
      %v230 = vpop.permute.xlu0 %229
      %vm233 = vcmask 60451
      %vm234 = vmand %vm233, %vm200
      %v235 = vld [vmem:[#allocation2] sm:$0x8]
      %v236 = vsel %vm234, %v228, %v235
      %237 = vst [vmem:[#allocation2] sm:$0x8] %v236
      %vm238 = vcmask 58400
      %vm239 = vmand %vm238, %vm206
      %v240 = vld [vmem:[#allocation2 + $0x4] sm:$0x3]
      %v241 = vsel %vm239, %v230, %v240
      %242 = vst [vmem:[#allocation2 + $0x4] sm:$0x3] %v241
      %s243 = scalar_lea.vmem %s165, 8
      %v244 = vld [vmem:[%s243] sm:$0xff]
      %v245 = vpack.c.bf16 %v244, %v244
      %v247 = vunpack.c.l.b16 %v245
      %v248 = vpack.c.b16 %v247, %v247
      %v250 = vshrl.u32 %v248, 16
      %v252 = vrot.slane %v250, 5
      %v253 = vshll.u32 %v248, 16
      %v255 = vrot.slane %v253, 6
      %v256 = vor.u32 %v252, %v255
      %v257 = vrot.slane %v252, 4
      %vm260 = vcmask 27650
      %vm261 = vsmask.f32 7946
      %vm262 = vmand %vm260, %vm261
      %v263 = vld [vmem:[#allocation2 + $0x4] sm:$0xc]
      %v264 = vsel %vm262, %v256, %v263
      %265 = vst [vmem:[#allocation2 + $0x4] sm:$0xc] %v264
      %vm266 = vcmask 24576
      %vm267 = vsmask.f32 256
      %vm268 = vmand %vm266, %vm267
      %v269 = vld [vmem:[#allocation2 + $0x8] sm:$0x1]
      %v270 = vsel %vm268, %v257, %v269
      %271 = vst [vmem:[#allocation2 + $0x8] sm:$0x1] %v270
      %v273 = vcombine.high %v244, %v244
      %v275 = vpack.c.bf16 %v273, %v273
      %v277 = vunpack.c.l.b16 %v275
      %v278 = vpack.c.b16 %v277, %v277
      %v280 = vshrl.u32 %v278, 16
      %v282 = vrot.slane %v280, 5
      %v283 = vshll.u32 %v278, 16
      %v285 = vrot.slane %v283, 6
      %v286 = vor.u32 %v282, %v285
      %v287 = vrot.slane %v282, 4
      %288 = vrot.lane.b32.xlu0 %v286, 4
      %v289 = vpop.permute.xlu0 %288
      %290 = vrot.lane.b32.xlu0 %v287, 4
      %v291 = vpop.permute.xlu0 %290
      %vm294 = vcmask 60450
      %vm295 = vmand %vm294, %vm261
      %v296 = vld [vmem:[#allocation2 + $0x4] sm:$0xc]
      %v297 = vsel %vm295, %v289, %v296
      %298 = vst [vmem:[#allocation2 + $0x4] sm:$0xc] %v297
      %vm299 = vcmask 57376
      %vm300 = vmand %vm299, %vm267
      %v301 = vld [vmem:[#allocation2 + $0x8] sm:$0x1]
      %v302 = vsel %vm300, %v291, %v301
      %303 = vst [vmem:[#allocation2 + $0x8] sm:$0x1] %v302
      %s304 = scalar_lea.vmem %s165, 16
      %v305 = vld [vmem:[%s304] sm:$0xff]
      %v306 = vpack.c.bf16 %v305, %v305
      %v308 = vunpack.c.l.b16 %v306
      %v309 = vpack.c.b16 %v308, %v308
      %v311 = vshrl.u32 %v309, 16
      %v313 = vrot.slane %v311, 6
      %v314 = vshll.u32 %v309, 16
      %v316 = vrot.slane %v314, 7
      %v317 = vor.u32 %v313, %v316
      %vm319 = vcmask 27649
      %vm320 = vsmask.f32 3334
      %vm321 = vmand %vm319, %vm320
      %v322 = vld [vmem:[#allocation2 + $0x8] sm:$0xe]
      %v323 = vsel %vm321, %v317, %v322
      %324 = vst [vmem:[#allocation2 + $0x8] sm:$0xe] %v323
      %v326 = vcombine.high %v305, %v305
      %v328 = vpack.c.bf16 %v326, %v326
      %v330 = vunpack.c.l.b16 %v328
      %v331 = vpack.c.b16 %v330, %v330
      %v333 = vshrl.u32 %v331, 16
      %v335 = vrot.slane %v333, 6
      %v336 = vshll.u32 %v331, 16
      %v338 = vrot.slane %v336, 7
      %v339 = vor.u32 %v335, %v338
      %340 = vrot.lane.b32.xlu0 %v339, 4
      %v341 = vpop.permute.xlu0 %340
      %vm343 = vcmask 60449
      %vm344 = vmand %vm343, %vm320
      %v345 = vld [vmem:[#allocation2 + $0x8] sm:$0xe]
      %v346 = vsel %vm344, %v341, %v345
      %347 = vst [vmem:[#allocation2 + $0x8] sm:$0xe] %v346
      %s348 = scalar_lea.vmem %s165, 24
      %v349 = vld [vmem:[%s348] sm:$0xff]
      %v350 = vpack.c.bf16 %v349, %v349
      %v352 = vunpack.c.l.b16 %v350
      %v353 = vpack.c.b16 %v352, %v352
      %v355 = vshrl.u32 %v353, 16
      %v357 = vrot.slane %v355, 7
      %v358 = vshll.u32 %v353, 16
      %v360 = vor.u32 %v357, %v358
      %vm362 = vcmask 26624
      %vm363 = vsmask.f32 2306
      %vm364 = vmand %vm362, %vm363
      %v365 = vld [vmem:[#allocation2 + $0xc] sm:$0x7]
      %v366 = vsel %vm364, %v360, %v365
      %367 = vst [vmem:[#allocation2 + $0xc] sm:$0x7] %v366
      %v369 = vcombine.high %v349, %v349
      %v371 = vpack.c.bf16 %v369, %v369
      %v373 = vunpack.c.l.b16 %v371
      %v374 = vpack.c.b16 %v373, %v373
      %v376 = vshrl.u32 %v374, 16
      %v378 = vrot.slane %v376, 7
      %v379 = vshll.u32 %v374, 16
      %v381 = vor.u32 %v378, %v379
      %382 = vrot.lane.b32.xlu0 %v381, 4
      %v383 = vpop.permute.xlu0 %382
      %vm385 = vcmask 59424
      %vm386 = vmand %vm385, %vm363
      %v387 = vld [vmem:[#allocation2 + $0xc] sm:$0x7]
      %v388 = vsel %vm386, %v383, %v387
      %389 = vst [vmem:[#allocation2 + $0xc] sm:$0x7] %v388
      %s390 = scalar_lea.vmem %s165, 32
      %v391 = vld [vmem:[%s390] sm:$0xff]
      %v392 = vpack.c.bf16 %v391, %v391
      %v394 = vunpack.c.l.b16 %v392
      %v395 = vpack.c.b16 %v394, %v394
      %v397 = vshll.u32 %v395, 16
      %v399 = vrot.slane %v397, 5
      %v400 = vshrl.u32 %v395, 16
      %v402 = vrot.slane %v400, 4
      %v403 = vor.u32 %v402, %v399
      %v404 = vrot.slane %v403, 4
      %v407 = vld [vmem:[#allocation2 + $0xc] sm:$0x8]
      %v408 = vsel %vm201, %v399, %v407
      %409 = vst [vmem:[#allocation2 + $0xc] sm:$0x8] %v408
      %v410 = vld [vmem:[#allocation2 + $0x10] sm:$0x3]
      %v411 = vsel %vm207, %v404, %v410
      %412 = vst [vmem:[#allocation2 + $0x10] sm:$0x3] %v411
      %v414 = vcombine.high %v391, %v391
      %v416 = vpack.c.bf16 %v414, %v414
      %v418 = vunpack.c.l.b16 %v416
      %v419 = vpack.c.b16 %v418, %v418
      %v421 = vshll.u32 %v419, 16
      %v423 = vrot.slane %v421, 5
      %v424 = vshrl.u32 %v419, 16
      %v426 = vrot.slane %v424, 4
      %v427 = vor.u32 %v426, %v423
      %v428 = vrot.slane %v427, 4
      %429 = vrot.lane.b32.xlu0 %v423, 4
      %v430 = vpop.permute.xlu0 %429
      %431 = vrot.lane.b32.xlu0 %v428, 4
      %v432 = vpop.permute.xlu0 %431
      %v435 = vld [vmem:[#allocation2 + $0xc] sm:$0x8]
      %v436 = vsel %vm234, %v430, %v435
      %437 = vst [vmem:[#allocation2 + $0xc] sm:$0x8] %v436
      %v438 = vld [vmem:[#allocation2 + $0x10] sm:$0x3]
      %v439 = vsel %vm239, %v432, %v438
      %440 = vst [vmem:[#allocation2 + $0x10] sm:$0x3] %v439
      %s441 = scalar_lea.vmem %s165, 40
      %v442 = vld [vmem:[%s441] sm:$0xff]
      %v443 = vpack.c.bf16 %v442, %v442
      %v445 = vunpack.c.l.b16 %v443
      %v446 = vpack.c.b16 %v445, %v445
      %v448 = vshrl.u32 %v446, 16
      %v450 = vrot.slane %v448, 5
      %v451 = vshll.u32 %v446, 16
      %v453 = vrot.slane %v451, 6
      %v454 = vor.u32 %v450, %v453
      %v455 = vrot.slane %v450, 4
      %v458 = vld [vmem:[#allocation2 + $0x10] sm:$0xc]
      %v459 = vsel %vm262, %v454, %v458
      %460 = vst [vmem:[#allocation2 + $0x10] sm:$0xc] %v459
      %v461 = vld [vmem:[#allocation2 + $0x14] sm:$0x1]
      %v462 = vsel %vm268, %v455, %v461
      %463 = vst [vmem:[#allocation2 + $0x14] sm:$0x1] %v462
      %v465 = vcombine.high %v442, %v442
      %v467 = vpack.c.bf16 %v465, %v465
      %v469 = vunpack.c.l.b16 %v467
      %v470 = vpack.c.b16 %v469, %v469
      %v472 = vshrl.u32 %v470, 16
      %v474 = vrot.slane %v472, 5
      %v475 = vshll.u32 %v470, 16
      %v477 = vrot.slane %v475, 6
      %v478 = vor.u32 %v474, %v477
      %v479 = vrot.slane %v474, 4
      %480 = vrot.lane.b32.xlu0 %v478, 4
      %v481 = vpop.permute.xlu0 %480
      %482 = vrot.lane.b32.xlu0 %v479, 4
      %v483 = vpop.permute.xlu0 %482
      %v486 = vld [vmem:[#allocation2 + $0x10] sm:$0xc]
      %v487 = vsel %vm295, %v481, %v486
      %488 = vst [vmem:[#allocation2 + $0x10] sm:$0xc] %v487
      %v489 = vld [vmem:[#allocation2 + $0x14] sm:$0x1]
      %v490 = vsel %vm300, %v483, %v489
      %491 = vst [vmem:[#allocation2 + $0x14] sm:$0x1] %v490
      %s492 = scalar_lea.vmem %s165, 48
      %v493 = vld [vmem:[%s492] sm:$0xff]
      %v494 = vpack.c.bf16 %v493, %v493
      %v496 = vunpack.c.l.b16 %v494
      %v497 = vpack.c.b16 %v496, %v496
      %v499 = vshrl.u32 %v497, 16
      %v501 = vrot.slane %v499, 6
      %v502 = vshll.u32 %v497, 16
      %v504 = vrot.slane %v502, 7
      %v505 = vor.u32 %v501, %v504
      %v507 = vld [vmem:[#allocation2 + $0x14] sm:$0xe]
      %v508 = vsel %vm321, %v505, %v507
      %509 = vst [vmem:[#allocation2 + $0x14] sm:$0xe] %v508
      %v511 = vcombine.high %v493, %v493
      %v513 = vpack.c.bf16 %v511, %v511
      %v515 = vunpack.c.l.b16 %v513
      %v516 = vpack.c.b16 %v515, %v515
      %v518 = vshrl.u32 %v516, 16
      %v520 = vrot.slane %v518, 6
      %v521 = vshll.u32 %v516, 16
      %v523 = vrot.slane %v521, 7
      %v524 = vor.u32 %v520, %v523
      %525 = vrot.lane.b32.xlu0 %v524, 4
      %v526 = vpop.permute.xlu0 %525
      %v528 = vld [vmem:[#allocation2 + $0x14] sm:$0xe]
      %v529 = vsel %vm344, %v526, %v528
      %530 = vst [vmem:[#allocation2 + $0x14] sm:$0xe] %v529
      %s531 = scalar_lea.vmem %s165, 56
      %v532 = vld [vmem:[%s531] sm:$0xff]
      %v533 = vpack.c.bf16 %v532, %v532
      %v535 = vunpack.c.l.b16 %v533
      %v536 = vpack.c.b16 %v535, %v535
      %v538 = vshrl.u32 %v536, 16
      %v540 = vrot.slane %v538, 7
      %v541 = vshll.u32 %v536, 16
      %v543 = vor.u32 %v540, %v541
      %v545 = vld [vmem:[#allocation2 + $0x18] sm:$0x7]
      %v546 = vsel %vm364, %v543, %v545
      %547 = vst [vmem:[#allocation2 + $0x18] sm:$0x7] %v546
      %v549 = vcombine.high %v532, %v532
      %v551 = vpack.c.bf16 %v549, %v549
      %v553 = vunpack.c.l.b16 %v551
      %v554 = vpack.c.b16 %v553, %v553
      %v556 = vshrl.u32 %v554, 16
      %v558 = vrot.slane %v556, 7
      %v559 = vshll.u32 %v554, 16
      %v561 = vor.u32 %v558, %v559
      %562 = vrot.lane.b32.xlu0 %v561, 4
      %v563 = vpop.permute.xlu0 %562
      %v565 = vld [vmem:[#allocation2 + $0x18] sm:$0x7]
      %v566 = vsel %vm386, %v563, %v565
      %567 = vst [vmem:[#allocation2 + $0x18] sm:$0x7] %v566
      %v568 = vld [vmem:[#allocation2] sm:$0xf]
      %v569 = vld [vmem:[#allocation2 + $0x4] sm:$0xf]
      %v570 = vld [vmem:[#allocation2 + $0x8] sm:$0xf]
      %v571 = vld [vmem:[#allocation2 + $0xc] sm:$0xf]
      %v572 = vld [vmem:[#allocation2 + $0x10] sm:$0xf]
      %v573 = vld [vmem:[#allocation2 + $0x14] sm:$0x1]
      %v574 = vld [vmem:[#allocation2 + $0x14] sm:$0x3]
      %v575 = vld [vmem:[#allocation2] sm:$0xe]
      %v576 = vld [vmem:[#allocation2] sm:$0x8]
      %v577 = vld [vmem:[#allocation2 + $0x14] sm:$0xf]
      %v578 = vld [vmem:[#allocation2 + $0x18] sm:$0x1]
      %v579 = vld [vmem:[#allocation2 + $0x4] sm:$0xc]
      %v580 = vld [vmem:[#allocation2 + $0x18] sm:$0x7]
      %v581 = vld [vmem:[#allocation2 + $0x18] sm:$0xf]
      %v582 = vld [vmem:[#allocation2 + $0x4] sm:$0x8]
      %v583 = vld [vmem:[#allocation2 + $0x8] sm:$0xe]
      %v584 = vld [vmem:[#allocation2 + $0x1c] sm:$0x3]
      %v585 = vld [vmem:[#allocation2 + $0x1c] sm:$0x7]
      %v586 = vld [vmem:[#allocation2 + $0x8] sm:$0xc]
      %v593 = vunpack.c.l.b16 %v568
      %v594 = vunpack.c.l.b16 %v569
      %v595 = vunpack.c.l.b16 %v570
      %v596 = vunpack.c.l.b16 %v571
      %v597 = vunpack.c.l.b16 %v572
      %v598 = vunpack.c.l.b16 %v573
      %v599 = vpack.c.b16 %v594, %v593
      %v600 = vpack.c.b16 %v596, %v595
      %v601 = vpack.c.b16 %v598, %v597
      %602 = vrot.lane.b32.xlu0 %v599, 124
      %v603 = vpop.permute.xlu0 %602
      %604 = vrot.lane.b32.xlu0 %v600, 124
      %v605 = vpop.permute.xlu0 %604
      %606 = vrot.lane.b32.xlu0 %v601, 124
      %v607 = vpop.permute.xlu0 %606
      %v609 = vunpack.c.l.b16 %v574
      %v610 = vpack.c.b16 %v609, %v597
      %vm611 = vsmask.f32 7424
      %v613 = vshrl.u32 %v599, 16
      %v615 = vshll.u32 %v599, 16
      %v617 = vrot.slane %v615, 1
      %v618 = vor.u32 %v613, %v617
      %v620 = vshll.u32 %v600, 16
      %v622 = vrot.slane %v620, 1
      %v623 = vsel %vm611, %v618, %v622
      %v624 = vshrl.u32 %v600, 16
      %v626 = vor.u32 %v624, %v622
      %v628 = vshll.u32 %v610, 16
      %v630 = vrot.slane %v628, 1
      %v631 = vsel %vm611, %v626, %v630
      %v632 = vshrl.u32 %v610, 16
      %v634 = vor.u32 %v632, %v630
      %635 = vrot.lane.b32.xlu0 %v623, 4
      %v636 = vpop.permute.xlu0 %635
      %637 = vrot.lane.b32.xlu0 %v631, 4
      %v638 = vpop.permute.xlu0 %637
      %639 = vrot.lane.b32.xlu0 %v634, 4
      %v640 = vpop.permute.xlu0 %639
      %v642 = vunpack.c.l.b16 %v575
      %v643 = vpack.c.b16 %v594, %v642
      %vm644 = vcmask 1046528
      %v645 = vrot.slane %v643, 1
      %v646 = vrot.slane %v600, 1
      %v647 = vsel %vm644, %v645, %v646
      %v648 = vrot.slane %v610, 1
      %v649 = vsel %vm644, %v646, %v648
      %650 = vrot.lane.b32.xlu0 %v647, 12
      %v651 = vpop.permute.xlu0 %650
      %652 = vrot.lane.b32.xlu0 %v649, 12
      %v653 = vpop.permute.xlu0 %652
      %654 = vrot.lane.b32.xlu0 %v648, 12
      %v655 = vpop.permute.xlu0 %654
      %v658 = vunpack.c.l.b16 %v576
      %v659 = vunpack.c.l.b16 %v577
      %v660 = vpack.c.b16 %v594, %v658
      %v661 = vpack.c.b16 %v659, %v597
      %vm662 = vcmask 1044480
      %v663 = vrot.slane %v660, 3
      %v664 = vrot.slane %v600, 3
      %v665 = vsel %vm662, %v663, %v664
      %v666 = vrot.slane %v661, 3
      %v667 = vsel %vm662, %v664, %v666
      %668 = vrot.lane.b32.xlu0 %v665, 12
      %v669 = vpop.permute.xlu0 %668
      %670 = vrot.lane.b32.xlu0 %v667, 12
      %v671 = vpop.permute.xlu0 %670
      %672 = vrot.lane.b32.xlu0 %v666, 12
      %v673 = vpop.permute.xlu0 %672
      %v675 = vunpack.c.l.b16 %v578
      %v676 = vpack.c.b16 %v675, %v675
      %vm677 = vsmask.f32 4352
      %v679 = vshrl.u32 %v660, 16
      %v681 = vrot.slane %v679, 3
      %v682 = vshll.u32 %v660, 16
      %v684 = vrot.slane %v682, 4
      %v685 = vor.u32 %v681, %v684
      %v686 = vrot.slane %v624, 3
      %v687 = vrot.slane %v620, 4
      %v688 = vor.u32 %v686, %v687
      %v689 = vsel %vm677, %v685, %v688
      %v691 = vshrl.u32 %v661, 16
      %v693 = vrot.slane %v691, 3
      %v694 = vshll.u32 %v661, 16
      %v696 = vrot.slane %v694, 4
      %v697 = vor.u32 %v693, %v696
      %v698 = vsel %vm677, %v688, %v697
      %v700 = vshll.u32 %v676, 16
      %v702 = vrot.slane %v700, 4
      %v703 = vsel %vm677, %v697, %v702
      %704 = vrot.lane.b32.xlu0 %v689, 20
      %v705 = vpop.permute.xlu0 %704
      %706 = vrot.lane.b32.xlu0 %v698, 20
      %v707 = vpop.permute.xlu0 %706
      %708 = vrot.lane.b32.xlu0 %v703, 20
      %v709 = vpop.permute.xlu0 %708
      %v710 = vpack.c.b16 %v595, %v594
      %v711 = vpack.c.b16 %v597, %v596
      %v712 = vpack.c.b16 %v675, %v659
      %713 = vrot.lane.b32.xlu0 %v710, 28
      %v714 = vpop.permute.xlu0 %713
      %715 = vrot.lane.b32.xlu0 %v711, 28
      %v716 = vpop.permute.xlu0 %715
      %717 = vrot.lane.b32.xlu0 %v712, 28
      %v718 = vpop.permute.xlu0 %717
      %v721 = vunpack.c.l.b16 %v579
      %v722 = vunpack.c.l.b16 %v580
      %v723 = vpack.c.b16 %v595, %v721
      %v724 = vpack.c.b16 %v722, %v659
      %vm725 = vcmask 1045504
      %v726 = vrot.slane %v723, 2
      %v727 = vrot.slane %v711, 2
      %v728 = vsel %vm725, %v726, %v727
      %v729 = vrot.slane %v724, 2
      %v730 = vsel %vm725, %v727, %v729
      %731 = vrot.lane.b32.xlu0 %v728, 28
      %v732 = vpop.permute.xlu0 %731
      %733 = vrot.lane.b32.xlu0 %v730, 28
      %v734 = vpop.permute.xlu0 %733
      %735 = vrot.lane.b32.xlu0 %v729, 28
      %v736 = vpop.permute.xlu0 %735
      %v738 = vunpack.c.l.b16 %v581
      %v739 = vpack.c.b16 %v738, %v659
      %vm740 = vsmask.f32 5376
      %v742 = vshrl.u32 %v723, 16
      %v744 = vrot.slane %v742, 2
      %v745 = vshll.u32 %v723, 16
      %v747 = vrot.slane %v745, 3
      %v748 = vor.u32 %v744, %v747
      %v750 = vshrl.u32 %v711, 16
      %v752 = vrot.slane %v750, 2
      %v753 = vshll.u32 %v711, 16
      %v755 = vrot.slane %v753, 3
      %v756 = vor.u32 %v752, %v755
      %v757 = vsel %vm740, %v748, %v756
      %v759 = vshrl.u32 %v739, 16
      %v761 = vrot.slane %v759, 2
      %v762 = vshll.u32 %v739, 16
      %v764 = vrot.slane %v762, 3
      %v765 = vor.u32 %v761, %v764
      %v766 = vsel %vm740, %v756, %v765
      %767 = vrot.lane.b32.xlu0 %v757, 36
      %v768 = vpop.permute.xlu0 %767
      %769 = vrot.lane.b32.xlu0 %v766, 36
      %v770 = vpop.permute.xlu0 %769
      %771 = vrot.lane.b32.xlu0 %v765, 36
      %v772 = vpop.permute.xlu0 %771
      %v774 = vunpack.c.l.b16 %v582
      %v775 = vpack.c.b16 %v595, %v774
      %v776 = vrot.slane %v775, 3
      %v777 = vrot.slane %v711, 3
      %v778 = vsel %vm662, %v776, %v777
      %v779 = vrot.slane %v739, 3
      %v780 = vsel %vm662, %v777, %v779
      %781 = vrot.lane.b32.xlu0 %v778, 44
      %v782 = vpop.permute.xlu0 %781
      %783 = vrot.lane.b32.xlu0 %v780, 44
      %v784 = vpop.permute.xlu0 %783
      %785 = vrot.lane.b32.xlu0 %v779, 44
      %v786 = vpop.permute.xlu0 %785
      %v789 = vunpack.c.l.b16 %v583
      %v790 = vunpack.c.l.b16 %v584
      %v791 = vpack.c.b16 %v596, %v789
      %v792 = vpack.c.b16 %v790, %v738
      %v793 = vrot.slane %v791, 1
      %v794 = vrot.slane %v661, 1
      %v795 = vsel %vm644, %v793, %v794
      %v796 = vrot.slane %v792, 1
      %v797 = vsel %vm644, %v794, %v796
      %798 = vrot.lane.b32.xlu0 %v795, 44
      %v799 = vpop.permute.xlu0 %798
      %800 = vrot.lane.b32.xlu0 %v797, 44
      %v801 = vpop.permute.xlu0 %800
      %802 = vrot.lane.b32.xlu0 %v796, 44
      %v803 = vpop.permute.xlu0 %802
      %v805 = vunpack.c.l.b16 %v585
      %v806 = vpack.c.b16 %v805, %v738
      %vm807 = vsmask.f32 6400
      %v809 = vshrl.u32 %v791, 16
      %v811 = vrot.slane %v809, 1
      %v812 = vshll.u32 %v791, 16
      %v814 = vrot.slane %v812, 2
      %v815 = vor.u32 %v811, %v814
      %v816 = vrot.slane %v691, 1
      %v817 = vrot.slane %v694, 2
      %v818 = vor.u32 %v816, %v817
      %v819 = vsel %vm807, %v815, %v818
      %v821 = vshrl.u32 %v806, 16
      %v823 = vrot.slane %v821, 1
      %v824 = vshll.u32 %v806, 16
      %v826 = vrot.slane %v824, 2
      %v827 = vor.u32 %v823, %v826
      %v828 = vsel %vm807, %v818, %v827
      %829 = vrot.lane.b32.xlu0 %v819, 52
      %v830 = vpop.permute.xlu0 %829
      %831 = vrot.lane.b32.xlu0 %v828, 52
      %v832 = vpop.permute.xlu0 %831
      %833 = vrot.lane.b32.xlu0 %v827, 52
      %v834 = vpop.permute.xlu0 %833
      %v836 = vunpack.c.l.b16 %v586
      %v837 = vpack.c.b16 %v596, %v836
      %v838 = vrot.slane %v837, 2
      %v839 = vrot.slane %v661, 2
      %v840 = vsel %vm725, %v838, %v839
      %v841 = vrot.slane %v806, 2
      %v842 = vsel %vm725, %v839, %v841
      %843 = vrot.lane.b32.xlu0 %v840, 60
      %v844 = vpop.permute.xlu0 %843
      %845 = vrot.lane.b32.xlu0 %v842, 60
      %v846 = vpop.permute.xlu0 %845
      %847 = vrot.lane.b32.xlu0 %v841, 60
      %v848 = vpop.permute.xlu0 %847
      %vm849 = vcmask 31744
      %v852 = vsel %vm849, %v603, %v636
      %v855 = vsel %vm849, %v605, %v638
      %v858 = vsel %vm849, %v607, %v640
      %vm859 = vcmask 64512
      %v860 = vsel %vm859, %v852, %v636
      %v861 = vsel %vm859, %v855, %v638
      %v862 = vsel %vm859, %v858, %v640
      %vm863 = vcmask 97280
      %v865 = vsel %vm863, %v860, %v651
      %v867 = vsel %vm863, %v861, %v653
      %v869 = vsel %vm863, %v862, %v655
      %vm870 = vcmask 130048
      %v872 = vsel %vm870, %v865, %v669
      %v874 = vsel %vm870, %v867, %v671
      %v876 = vsel %vm870, %v869, %v673
      %vm877 = vcmask 162816
      %v879 = vsel %vm877, %v872, %v705
      %v881 = vsel %vm877, %v874, %v707
      %v883 = vsel %vm877, %v876, %v709
      %vm884 = vcmask 195584
      %v885 = vsel %vm884, %v879, %v705
      %v886 = vsel %vm884, %v881, %v707
      %v887 = vsel %vm884, %v883, %v709
      %vm888 = vcmask 228352
      %v890 = vsel %vm888, %v885, %v714
      %v892 = vsel %vm888, %v886, %v716
      %v894 = vsel %vm888, %v887, %v718
      %vm895 = vcmask 261120
      %v897 = vsel %vm895, %v890, %v732
      %v899 = vsel %vm895, %v892, %v734
      %v901 = vsel %vm895, %v894, %v736
      %vm902 = vcmask 293888
      %v904 = vsel %vm902, %v897, %v768
      %v906 = vsel %vm902, %v899, %v770
      %v908 = vsel %vm902, %v901, %v772
      %vm909 = vcmask 326656
      %v910 = vsel %vm909, %v904, %v768
      %v911 = vsel %vm909, %v906, %v770
      %v912 = vsel %vm909, %v908, %v772
      %vm913 = vcmask 359424
      %v915 = vsel %vm913, %v910, %v782
      %v917 = vsel %vm913, %v911, %v784
      %v919 = vsel %vm913, %v912, %v786
      %vm920 = vcmask 392192
      %v922 = vsel %vm920, %v915, %v799
      %v924 = vsel %vm920, %v917, %v801
      %v926 = vsel %vm920, %v919, %v803
      %vm927 = vcmask 424960
      %v929 = vsel %vm927, %v922, %v830
      %v931 = vsel %vm927, %v924, %v832
      %v933 = vsel %vm927, %v926, %v834
      %vm934 = vcmask 457728
      %v935 = vsel %vm934, %v929, %v830
      %v936 = vsel %vm934, %v931, %v832
      %v937 = vsel %vm934, %v933, %v834
      %vm938 = vcmask 490496
      %v940 = vsel %vm938, %v935, %v844
      %v942 = vsel %vm938, %v936, %v846
      %v944 = vsel %vm938, %v937, %v848
      %vm945 = vcmask 523264
      %v947 = vsel %vm945, %v940, 0
      %v949 = vsel %vm945, %v942, 0
      %v951 = vsel %vm945, %v944, 0
      %v953 = vld [vmem:[%s1] sm:$0xf]
      %v954 = vld [vmem:[%s1 + $0x4] sm:$0xf]
      %v955 = vld [vmem:[%s1 + $0x8] sm:$0xf]
      %v956 = vld [vmem:[%s1 + $0xc] sm:$0xf]
      %v957 = vld [vmem:[%s1 + $0x10] sm:$0xf]
      %v958 = vld [vmem:[%s1 + $0x14] sm:$0xf]
      %v959 = vld [vmem:[%s1 + $0x18] sm:$0xf]
      %v960 = vld [vmem:[%s1 + $0x1c] sm:$0xf]
      %v961 = vld [vmem:[%s1 + $0x20] sm:$0xf]
      %v962 = vld [vmem:[%s1 + $0x24] sm:$0xf]
      %v963 = vld [vmem:[%s1 + $0x28] sm:$0xf]
      %v964 = vld [vmem:[%s1 + $0x2c] sm:$0xf]
      %v965 = vld [vmem:[%s1 + $0x30] sm:$0xf]
      %v966 = vld [vmem:[%s1 + $0x34] sm:$0xf]
      %v967 = vld [vmem:[%s1 + $0x38] sm:$0xf]
      %v968 = vld [vmem:[%s1 + $0x3c] sm:$0xf]
      %v969 = vld [vmem:[%s2] sm:$0x1]
      %v971 = vlaneseq
      %v972 = vshrl.u32 %v971, 7
      %v973 = vsub.s32 0, %v972
      %v974 = vrot.slane %v969, %v973
      %v992 = vunpack.c.l.b16 %v953
      %v993 = vunpack.c.l.b16 %v954
      %v994 = vunpack.c.l.b16 %v955
      %v995 = vunpack.c.l.b16 %v956
      %v996 = vunpack.c.l.b16 %v957
      %v997 = vunpack.c.l.b16 %v958
      %v998 = vunpack.c.l.b16 %v959
      %v999 = vunpack.c.l.b16 %v960
      %v1000 = vunpack.c.l.b16 %v961
      %v1001 = vunpack.c.l.b16 %v962
      %v1002 = vunpack.c.l.b16 %v963
      %v1003 = vunpack.c.l.b16 %v964
      %v1004 = vunpack.c.l.b16 %v965
      %v1005 = vunpack.c.l.b16 %v966
      %v1006 = vunpack.c.l.b16 %v967
      %v1007 = vunpack.c.l.b16 %v968
      %v1008 = vpack.c.b16 %v993, %v992
      %v1009 = vpack.c.b16 %v995, %v994
      %v1010 = vpack.c.b16 %v997, %v996
      %v1011 = vpack.c.b16 %v999, %v998
      %v1012 = vpack.c.b16 %v1001, %v1000
      %v1013 = vpack.c.b16 %v1003, %v1002
      %v1014 = vpack.c.b16 %v1005, %v1004
      %v1015 = vpack.c.b16 %v1007, %v1006
      %1024 = vmatprep.subr.bf16.mxu0 0
      %1025 = vmatpush1.bf16.msra.mxu0 %v1015
      %1026 = vmatprep.subr.bf16.mxu0 0
      %1027 = vmatpush1.bf16.msra.mxu0 %v1014
      %1028 = vmatprep.subr.bf16.mxu0 0
      %1029 = vmatpush1.bf16.msra.mxu0 %v1013
      %1030 = vmatprep.subr.bf16.mxu0 0
      %1031 = vmatpush1.bf16.msra.mxu0 %v1012
      %1032 = vmatprep.subr.bf16.mxu0 0
      %1033 = vmatpush1.bf16.msra.mxu0 %v1011
      %1034 = vmatprep.subr.bf16.mxu0 0
      %1035 = vmatpush1.bf16.msra.mxu0 %v1010
      %1036 = vmatprep.subr.bf16.mxu0 0
      %1037 = vmatpush1.bf16.msra.mxu0 %v1009
      %1038 = vmatprep.subr.bf16.mxu0 0
      %1039 = vmatpush1.bf16.msra.mxu0 %v1008
      %1040 = vmatprep.subr.bf16.mxu0 0
      %1041 = vmatpush2.bf16.msra.mxu0 0
      %1042 = vmatprep.subr.bf16.mxu0 0
      %1043 = vmatpush2.bf16.msra.mxu0 0
      %1044 = vmatprep.subr.bf16.mxu0 0
      %1045 = vmatpush2.bf16.msra.mxu0 0
      %1046 = vmatprep.subr.bf16.mxu0 0
      %1047 = vmatpush2.bf16.msra.mxu0 0
      %1048 = vmatprep.subr.bf16.mxu0 0
      %1049 = vmatpush2.bf16.msra.mxu0 0
      %1050 = vmatprep.subr.bf16.mxu0 0
      %1051 = vmatpush2.bf16.msra.mxu0 0
      %1052 = vmatprep.subr.bf16.mxu0 0
      %1053 = vmatpush2.bf16.msra.mxu0 0
      %1054 = vmatprep.subr.bf16.mxu0 0
      %1055 = vmatpush2.bf16.msra.mxu0 0
      %1056 = vmatprep.mubr.bf16.mxu0 0
      %1057 = vmatmul.mubr.bf16.gmra.mxu0 %v947
      %v1058 = vpop.f32.mrf.mxu0
      %v1059 = vadd.f32 %v974, %v1058
      %v1060 = vpop.f32.mrf.mxu0
      %v1061 = vpop.f32.mrf.mxu0
      %v1062 = vadd.f32 %v974, %v1061
      %v1063 = vpop.f32.mrf.mxu0
      %1064 = vmatprep.mubr.bf16.mxu0 0
      %1065 = vmatmul.mubr.bf16.gmra.mxu0 %v949
      %v1066 = vpop.f32.mrf.mxu0
      %v1067 = vadd.f32 %v974, %v1066
      %v1068 = vpop.f32.mrf.mxu0
      %v1069 = vpop.f32.mrf.mxu0
      %v1070 = vadd.f32 %v974, %v1069
      %v1071 = vpop.f32.mrf.mxu0
      %1072 = vmatprep.mubr.bf16.mxu0 0
      %1073 = vmatmul.mubr.bf16.gmra.mxu0 %v951
      %v1074 = vpop.f32.mrf.mxu0
      %v1075 = vadd.f32 %v974, %v1074
      %v1076 = vpop.f32.mrf.mxu0
      %v1077 = vpop.f32.mrf.mxu0
      %v1078 = vadd.f32 %v974, %v1077
      %v1079 = vpop.f32.mrf.mxu0
      %1080 = vdwg.mxu0
      %1081 = vst [vmem:[%s170] sm:$0xff] %v1059
      %1082 = vst [vmem:[%s170 + $0x8] sm:$0xff] %v1062
      %1083 = vst [vmem:[%s170 + $0x10] sm:$0xff] %v1067
      %1084 = vst [vmem:[%s170 + $0x18] sm:$0xff] %v1070
      %1085 = vst [vmem:[%s170 + $0x20] sm:$0xff] %v1075
      %1086 = vst [vmem:[%s170 + $0x28] sm:$0x3] %v1078
      %p1087 = scmp.lt.s32.totalorder %s14, 1
      %s1088 = scalar_select %p1087, %s14, 1
      %s1089 = smul.addr %s1088, 6
      %s1090 = smul.addr %s1089, 8
      %s1091 = scalar_lea.vmem %s3, %s1090
      // Predicated region
      $region33: #{forward.4} parent=31 // pred_check
        %p1092 = pneg %p100
      $region34: #{forward.4} parent=31 // pred_check_branch
        %1094 = sbr.rel (%p1092) target = $region36
      $region35: #{forward.4} parent=31 // pred_region
        _
      $region36: #{forward.4} parent=31 // pred_fallthru
        _
    $region32: #{forward.4} parent=5 // pred_fallthru
      _
    %p1095 = scmp.le.s32.totalorder 2, %s9
    // Predicated region
    $region37: #{forward.4} parent=5 // pred_check
      %p1096 = pneg %p1095
    $region38: #{forward.4} parent=5 // pred_check_branch
      %1098 = sbr.rel (%p1096) target = $region40
    $region39: #{forward.4} parent=5 // pred_region
      %s1099 = ssub.s32 %s9, 2
      // Predicated region
      $region41: #{forward.4} parent=39 // pred_check
        %p1100 = pneg %p106
      $region42: #{forward.4} parent=39 // pred_check_branch
        %1102 = sbr.rel (%p1100) target = $region44
      $region43: #{forward.4} parent=39 // pred_region
        %p1103 = scmp.lt.s32.totalorder %s15, 1
        %s1104 = scalar_select %p1103, %s15, 1
        %s1105 = smul.addr %s1104, 6
        %s1106 = smul.addr %s1105, 8
        %s1107 = scalar_lea.vmem %s3, %s1106
      $region44: #{forward.4} parent=39 // pred_fallthru
        _
    $region40: #{forward.4} parent=5 // pred_fallthru
      _
  $region6: #{forward.4} parent=0 // loop_footer
    %s13 = sadd.s32 1, %s9
  $region7: #{forward.4} parent=0 // loop_footer_branch
    %8 = sbr.rel target = $region3
  $region8: #{forward.4} parent=0 // loop_exit
    _

// kernel: forward.5
$region0: #{forward.5}
  #allocation0 [shape = 'u32[]', space=smem, size = 0x4, offset = 0x4, fixed_abs, tag = 'smem constant byte address 0x4 - core index']
  #allocation1 [shape = 'u32[144,128]{1,0:T(1,128)}', space=vmem, size = 0x12000, scoped, tag = 'internal scratch']
  #allocation2 [shape = 'bf16[42,8]{1,0:T(8,128)(2,1)}', space=vmem, size = 0x3000, scoped, tag = 'scratch operand']
  #allocation3 [shape = 'f32[24,128]{1,0:T(8,128)}', space=vmem, size = 0x3000, scoped, tag = 'scratch operand']
  %s0 = inlined_call_operand.vmem [shape: f32[2,4,4,128], index: 0, kind: input, shape index: {}]
  %s1 = inlined_call_operand.vmem [shape: bf16[2,128,128], index: 1, kind: input, shape index: {}]
  %s2 = inlined_call_operand.vmem [shape: f32[2,1,128], index: 2, kind: input, shape index: {}]
  %s3 = inlined_call_operand.vmem [shape: bf16[2,128,128], index: 3, kind: input, shape index: {}]
  %s4 = inlined_call_operand.vmem [shape: f32[2,1,128], index: 4, kind: input, shape index: {}]
  %s5 = inlined_call_operand.vmem [shape: bf16[128,128], index: 5, kind: input, shape index: {}]
  %s6 = inlined_call_operand.vmem [shape: f32[1,128], index: 6, kind: input, shape index: {}]
  %s7 = inlined_call_operand.vmem [shape: f32[2,24,128], index: 7, kind: output, shape index: {}]
  %s8 = sld [smem:[#allocation0]]
  $region68: #{forward.5} parent=0
    _
  %s10 = ssub.s32 1, %s8
  %s11 = scalar_select 0, %s10, %s8
  loop: start=0, step=1, limit=4
  $region2: #{forward.5} parent=0 // loop_pre_header
    _
  $region3: #{forward.5} parent=0 // loop_header
    %s13 = sphi 0, %s17
    %p14 = scmp.ge.s32.totalorder %s13, 4
    %s23 = sphi 0, %s25
    %s26 = sphi 0, %s23
    %s27 = sphi 0, %s26
    %s43 = sphi 0, %s27
    %s47 = sphi 0, %s47
    %s49 = sphi 0, %s47
    %s50 = sphi 0, %s49
    %s64 = sphi 0, %s50
    %s68 = sphi 0, %s68
    %s70 = sphi 0, %s68
    %s71 = sphi 0, %s70
    %s85 = sphi 0, %s71
    %s89 = sphi 0, %s89
    %s91 = sphi 0, %s89
    %s92 = sphi 0, %s91
    %s106 = sphi 0, %s92
    %s110 = sphi 0, %s110
    %s112 = sphi 0, %s110
    %s113 = sphi 0, %s112
    %s127 = sphi 0, %s113
    %s131 = sphi 0, %s131
    %s133 = sphi 0, %s131
    %s134 = sphi 0, %s133
    %s148 = sphi 0, %s134
    %s152 = sphi 0, %s152
    %s154 = sphi 0, %s152
    %s155 = sphi 0, %s154
    %s169 = sphi 0, %s155
    %s175 = sphi 0, %s177
    %s178 = sphi 0, %s175
    %s179 = sphi 0, %s178
    %s195 = sphi 0, %s179
  $region4: #{forward.5} parent=0 // loop_header_branch
    %16 = sbr.rel (%p14) target = $region8
  $region5: #{forward.5} parent=0 // loop_body
    %s18 = ssub.s32 %s13, 1
    %s19 = ssub.s32 %s13, 2
    %s20 = sadd.s32 %s13, 1
    %s21 = ssub.s32 %s13, %s20
    %p22 = scmp.eq.s32.totalorder %s21, 0
    %s24 = sadd.s32 %s23, 1
    %s25 = scalar_select %p22, %s23, %s24
    %p28 = pneg %p22
    %p29 = scmp.eq.s32.totalorder %s13, 1
    %p30 = por %p28, %p29
    %p31 = scmp.ne.s32.totalorder %s23, %s26
    %p32 = scmp.eq.s32.totalorder %s13, 0
    %p33 = por %p31, %p32
    %p34 = scmp.ne.s32.totalorder %s23, %s26
    %p35 = scmp.eq.s32.totalorder %s18, 1
    %p36 = por %p34, %p35
    %p37 = scmp.ne.s32.totalorder %s26, %s27
    %p38 = scmp.eq.s32.totalorder %s18, 0
    %p39 = por %p37, %p38
    %p40 = scmp.ne.s32.totalorder %s26, %s27
    %p41 = scmp.eq.s32.totalorder %s19, 1
    %p42 = por %p40, %p41
    %p44 = scmp.ne.s32.totalorder %s27, %s43
    %p45 = scmp.eq.s32.totalorder %s19, 0
    %p46 = por %p44, %p45
    %s48 = sadd.s32 %s47, 1
    %p51 = scmp.eq.s32.totalorder %s13, 1
    %p52 = scmp.ne.s32.totalorder %s47, %s49
    %p53 = scmp.eq.s32.totalorder %s13, 0
    %p54 = por %p52, %p53
    %p55 = scmp.ne.s32.totalorder %s47, %s49
    %p56 = scmp.eq.s32.totalorder %s18, 1
    %p57 = por %p55, %p56
    %p58 = scmp.ne.s32.totalorder %s49, %s50
    %p59 = scmp.eq.s32.totalorder %s18, 0
    %p60 = por %p58, %p59
    %p61 = scmp.ne.s32.totalorder %s49, %s50
    %p62 = scmp.eq.s32.totalorder %s19, 1
    %p63 = por %p61, %p62
    %p65 = scmp.ne.s32.totalorder %s50, %s64
    %p66 = scmp.eq.s32.totalorder %s19, 0
    %p67 = por %p65, %p66
    %s69 = sadd.s32 %s68, 1
    %p72 = scmp.eq.s32.totalorder %s13, 1
    %p73 = scmp.ne.s32.totalorder %s68, %s70
    %p74 = scmp.eq.s32.totalorder %s13, 0
    %p75 = por %p73, %p74
    %p76 = scmp.ne.s32.totalorder %s68, %s70
    %p77 = scmp.eq.s32.totalorder %s18, 1
    %p78 = por %p76, %p77
    %p79 = scmp.ne.s32.totalorder %s70, %s71
    %p80 = scmp.eq.s32.totalorder %s18, 0
    %p81 = por %p79, %p80
    %p82 = scmp.ne.s32.totalorder %s70, %s71
    %p83 = scmp.eq.s32.totalorder %s19, 1
    %p84 = por %p82, %p83
    %p86 = scmp.ne.s32.totalorder %s71, %s85
    %p87 = scmp.eq.s32.totalorder %s19, 0
    %p88 = por %p86, %p87
    %s90 = sadd.s32 %s89, 1
    %p93 = scmp.eq.s32.totalorder %s13, 1
    %p94 = scmp.ne.s32.totalorder %s89, %s91
    %p95 = scmp.eq.s32.totalorder %s13, 0
    %p96 = por %p94, %p95
    %p97 = scmp.ne.s32.totalorder %s89, %s91
    %p98 = scmp.eq.s32.totalorder %s18, 1
    %p99 = por %p97, %p98
    %p100 = scmp.ne.s32.totalorder %s91, %s92
    %p101 = scmp.eq.s32.totalorder %s18, 0
    %p102 = por %p100, %p101
    %p103 = scmp.ne.s32.totalorder %s91, %s92
    %p104 = scmp.eq.s32.totalorder %s19, 1
    %p105 = por %p103, %p104
    %p107 = scmp.ne.s32.totalorder %s92, %s106
    %p108 = scmp.eq.s32.totalorder %s19, 0
    %p109 = por %p107, %p108
    %s111 = sadd.s32 %s110, 1
    %p114 = scmp.eq.s32.totalorder %s13, 1
    %p115 = scmp.ne.s32.totalorder %s110, %s112
    %p116 = scmp.eq.s32.totalorder %s13, 0
    %p117 = por %p115, %p116
    %p118 = scmp.ne.s32.totalorder %s110, %s112
    %p119 = scmp.eq.s32.totalorder %s18, 1
    %p120 = por %p118, %p119
    %p121 = scmp.ne.s32.totalorder %s112, %s113
    %p122 = scmp.eq.s32.totalorder %s18, 0
    %p123 = por %p121, %p122
    %p124 = scmp.ne.s32.totalorder %s112, %s113
    %p125 = scmp.eq.s32.totalorder %s19, 1
    %p126 = por %p124, %p125
    %p128 = scmp.ne.s32.totalorder %s113, %s127
    %p129 = scmp.eq.s32.totalorder %s19, 0
    %p130 = por %p128, %p129
    %s132 = sadd.s32 %s131, 1
    %p135 = scmp.eq.s32.totalorder %s13, 1
    %p136 = scmp.ne.s32.totalorder %s131, %s133
    %p137 = scmp.eq.s32.totalorder %s13, 0
    %p138 = por %p136, %p137
    %p139 = scmp.ne.s32.totalorder %s131, %s133
    %p140 = scmp.eq.s32.totalorder %s18, 1
    %p141 = por %p139, %p140
    %p142 = scmp.ne.s32.totalorder %s133, %s134
    %p143 = scmp.eq.s32.totalorder %s18, 0
    %p144 = por %p142, %p143
    %p145 = scmp.ne.s32.totalorder %s133, %s134
    %p146 = scmp.eq.s32.totalorder %s19, 1
    %p147 = por %p145, %p146
    %p149 = scmp.ne.s32.totalorder %s134, %s148
    %p150 = scmp.eq.s32.totalorder %s19, 0
    %p151 = por %p149, %p150
    %s153 = sadd.s32 %s152, 1
    %p156 = scmp.eq.s32.totalorder %s13, 1
    %p157 = scmp.ne.s32.totalorder %s152, %s154
    %p158 = scmp.eq.s32.totalorder %s13, 0
    %p159 = por %p157, %p158
    %p160 = scmp.ne.s32.totalorder %s152, %s154
    %p161 = scmp.eq.s32.totalorder %s18, 1
    %p162 = por %p160, %p161
    %p163 = scmp.ne.s32.totalorder %s154, %s155
    %p164 = scmp.eq.s32.totalorder %s18, 0
    %p165 = por %p163, %p164
    %p166 = scmp.ne.s32.totalorder %s154, %s155
    %p167 = scmp.eq.s32.totalorder %s19, 1
    %p168 = por %p166, %p167
    %p170 = scmp.ne.s32.totalorder %s155, %s169
    %p171 = scmp.eq.s32.totalorder %s19, 0
    %p172 = por %p170, %p171
    %s173 = ssub.s32 %s13, %s20
    %p174 = scmp.eq.s32.totalorder %s173, 0
    %s176 = sadd.s32 %s175, 1
    %s177 = scalar_select %p174, %s175, %s176
    %p180 = pneg %p174
    %p181 = scmp.eq.s32.totalorder %s13, 1
    %p182 = por %p180, %p181
    %p183 = scmp.ne.s32.totalorder %s175, %s178
    %p184 = scmp.eq.s32.totalorder %s13, 0
    %p185 = por %p183, %p184
    %p186 = scmp.ne.s32.totalorder %s175, %s178
    %p187 = scmp.eq.s32.totalorder %s18, 1
    %p188 = por %p186, %p187
    %p189 = scmp.ne.s32.totalorder %s178, %s179
    %p190 = scmp.eq.s32.totalorder %s18, 0
    %p191 = por %p189, %p190
    %p192 = scmp.ne.s32.totalorder %s178, %s179
    %p193 = scmp.eq.s32.totalorder %s19, 1
    %p194 = por %p192, %p193
    %p196 = scmp.ne.s32.totalorder %s179, %s195
    %p197 = scmp.eq.s32.totalorder %s19, 0
    %p198 = por %p196, %p197
    %p199 = scmp.le.s32.totalorder 1, %s13
    %p200 = scmp.lt.s32.totalorder %s13, 3
    %p201 = pnand %p199, %p200
    %p202 = pneg %p201
    // Predicated region
    $region9: #{forward.5} parent=5 // pred_check
      _
    $region10: #{forward.5} parent=5 // pred_check_branch
      %204 = sbr.rel (%p201) target = $region12
    $region11: #{forward.5} parent=5 // pred_region
      %s205 = ssub.s32 %s13, 1
      // Predicated region
      $region13: #{forward.5} parent=11 // pred_check
        %p206 = pneg %p60
      $region14: #{forward.5} parent=11 // pred_check_branch
        %208 = sbr.rel (%p206) target = $region16
      $region15: #{forward.5} parent=11 // pred_region
        _
      $region16: #{forward.5} parent=11 // pred_fallthru
        _
      // Predicated region
      $region17: #{forward.5} parent=11 // pred_check
        %p209 = pneg %p81
      $region18: #{forward.5} parent=11 // pred_check_branch
        %211 = sbr.rel (%p209) target = $region20
      $region19: #{forward.5} parent=11 // pred_region
        _
      $region20: #{forward.5} parent=11 // pred_fallthru
        _
      // Predicated region
      $region21: #{forward.5} parent=11 // pred_check
        %p212 = pneg %p102
      $region22: #{forward.5} parent=11 // pred_check_branch
        %214 = sbr.rel (%p212) target = $region24
      $region23: #{forward.5} parent=11 // pred_region
        _
      $region24: #{forward.5} parent=11 // pred_fallthru
        _
      // Predicated region
      $region25: #{forward.5} parent=11 // pred_check
        %p215 = pneg %p123
      $region26: #{forward.5} parent=11 // pred_check_branch
        %217 = sbr.rel (%p215) target = $region28
      $region27: #{forward.5} parent=11 // pred_region
        _
      $region28: #{forward.5} parent=11 // pred_fallthru
        _
      // Predicated region
      $region29: #{forward.5} parent=11 // pred_check
        %p218 = pneg %p144
      $region30: #{forward.5} parent=11 // pred_check_branch
        %220 = sbr.rel (%p218) target = $region32
      $region31: #{forward.5} parent=11 // pred_region
        _
      $region32: #{forward.5} parent=11 // pred_fallthru
        _
      // Predicated region
      $region33: #{forward.5} parent=11 // pred_check
        %p221 = pneg %p165
      $region34: #{forward.5} parent=11 // pred_check_branch
        %223 = sbr.rel (%p221) target = $region36
      $region35: #{forward.5} parent=11 // pred_region
        _
      $region36: #{forward.5} parent=11 // pred_fallthru
        _
    $region12: #{forward.5} parent=5 // pred_fallthru
      _
    %p224 = scmp.lt.s32.totalorder %s13, 2
    // Predicated region
    $region37: #{forward.5} parent=5 // pred_check
      %p225 = pneg %p224
    $region38: #{forward.5} parent=5 // pred_check_branch
      %227 = sbr.rel (%p225) target = $region40
    $region39: #{forward.5} parent=5 // pred_region
      // Predicated region
      $region41: #{forward.5} parent=39 // pred_check
        %p228 = pneg %p33
      $region42: #{forward.5} parent=39 // pred_check_branch
        %230 = sbr.rel (%p228) target = $region44
      $region43: #{forward.5} parent=39 // pred_region
        %p231 = scmp.lt.s32.totalorder %s13, 1
        %s232 = scalar_select %p231, %s13, 1
        %s233 = smul.addr %s232, 4
        %s234 = smul.addr %s233, 4
        %s235 = scalar_lea.vmem %s0, %s234
      $region44: #{forward.5} parent=39 // pred_fallthru
        _
    $region40: #{forward.5} parent=5 // pred_fallthru
      _
    %p236 = scmp.le.s32.totalorder 1, %s13
    %p237 = scmp.lt.s32.totalorder %s13, 3
    %p238 = pnand %p236, %p237
    %p239 = pneg %p238
    // Predicated region
    $region45: #{forward.5} parent=5 // pred_check
      _
    $region46: #{forward.5} parent=5 // pred_check_branch
      %241 = sbr.rel (%p238) target = $region48
    $region47: #{forward.5} parent=5 // pred_region
      %s242 = ssub.s32 %s13, 1
      %p243 = scmp.lt.s32.totalorder %s18, 1
      %s244 = scalar_select %p243, %s18, 1
      %s245 = smul.addr %s244, 4
      %s246 = smul.addr %s245, 4
      %s247 = scalar_lea.vmem %s0, %s246
      %p248 = pneg %p39
      %p249 = pneg %p36
      %p250 = pneg %p60
      %p251 = pneg %p57
      %p252 = pneg %p81
      %p253 = pneg %p78
      %p254 = pneg %p102
      %p255 = pneg %p99
      %p256 = pneg %p123
      %p257 = pneg %p120
      %p258 = pneg %p144
      %p259 = pneg %p141
      %p260 = pneg %p165
      %p261 = pneg %p162
      %p262 = pneg %p191
      %p263 = pneg %p188
      %p264 = scmp.lt.s32.totalorder %s18, 1
      %s265 = scalar_select %p264, %s18, 1
      %s266 = smul.addr %s265, 3
      %s267 = smul.addr %s266, 8
      %s268 = scalar_lea.vmem %s7, %s267
      %p269 = scmp.lt.s32.totalorder %s18, 1
      %s270 = scalar_select %p269, %s18, 1
      %s271 = smul.addr %s270, 4
      %s272 = smul.addr %s271, 4
      %s273 = scalar_lea.vmem %s0, %s272
      %p274 = scmp.lt.s32.totalorder %s18, 1
      %s275 = scalar_select %p274, %s18, 1
      %s276 = smul.addr %s275, 3
      %s277 = smul.addr %s276, 8
      %s278 = scalar_lea.vmem %s7, %s277
      %vm280 = vcmask 60416
      %281 = vst.msk [vmem:[#allocation2] sm:$0xf] %vm280, 0
      %282 = vst.msk [vmem:[#allocation2 + $0x4] sm:$0xf] %vm280, 0
      %283 = vst.msk [vmem:[#allocation2 + $0x8] sm:$0xf] %vm280, 0
      %284 = vst.msk [vmem:[#allocation2 + $0xc] sm:$0xf] %vm280, 0
      %285 = vst.msk [vmem:[#allocation2 + $0x10] sm:$0xf] %vm280, 0
      %vm286 = vcmask 57344
      %287 = vst.msk [vmem:[#allocation2 + $0x14] sm:$0x1] %vm286, 0
      %288 = vst [vmem:[#allocation3] sm:$0xff] 0.0
      %289 = vst [vmem:[#allocation3 + $0x8] sm:$0xff] 0.0
      %290 = vst [vmem:[#allocation3 + $0x10] sm:$0xff] 0.0
      %v291 = vld [vmem:[%s273] sm:$0xf]
      %292 = vst [vmem:[#allocation3] sm:$0xf] %v291
      %s293 = scalar_lea.vmem %s273, 4
      %v294 = vld [vmem:[%s293] sm:$0xf]
      %295 = vst [vmem:[#allocation3 + $0x6] sm:$0xf] %v294
      %s296 = scalar_lea.vmem %s273, 8
      %v297 = vld [vmem:[%s296] sm:$0xf]
      %298 = vst [vmem:[#allocation3 + $0xc] sm:$0xf] %v297
      %s299 = scalar_lea.vmem %s273, 12
      %v300 = vld [vmem:[%s299] sm:$0xf]
      %301 = vst [vmem:[#allocation3 + $0x12] sm:$0xf] %v300
      loop: start=0, step=1, limit=2
      $region49: #{forward.5} parent=47 // loop_pre_header
        _
      $region50: #{forward.5} parent=47 // loop_header
        %s303 = sphi 0, %s307
        %p304 = scmp.ge.s32.totalorder %s303, 2
      $region51: #{forward.5} parent=47 // loop_header_branch
        %306 = sbr.rel (%p304) target = $region55
      $region52: #{forward.5} parent=47 // loop_body
        %v308 = vld [vmem:[#allocation3] sm:$0xf]
        %v309 = vmax.f32 %v308, 0.0
        %v310 = vpack.c.bf16 %v309, %v309
        %v312 = vunpack.c.l.b16 %v310
        %v313 = vpack.c.b16 %v312, %v312
        %v315 = vshll.u32 %v313, 16
        %v317 = vrot.slane %v315, 5
        %v318 = vshrl.u32 %v313, 16
        %v320 = vrot.slane %v318, 4
        %v321 = vor.u32 %v320, %v317
        %v322 = vrot.slane %v321, 4
        %vm325 = vcmask 60419
        %vm326 = vsmask.f32 7950
        %vm327 = vmand %vm325, %vm326
        %v328 = vld [vmem:[#allocation2] sm:$0x8]
        %v329 = vsel %vm327, %v317, %v328
        %330 = vst [vmem:[#allocation2] sm:$0x8] %v329
        %vm331 = vcmask 58368
        %vm332 = vsmask.f32 1280
        %vm333 = vmand %vm331, %vm332
        %v334 = vld [vmem:[#allocation2 + $0x4] sm:$0x3]
        %v335 = vsel %vm333, %v322, %v334
        %336 = vst [vmem:[#allocation2 + $0x4] sm:$0x3] %v335
        %v337 = vld [vmem:[#allocation3 + $0x6] sm:$0xf]
        %v338 = vmax.f32 %v337, 0.0
        %v339 = vpack.c.bf16 %v338, %v338
        %v341 = vunpack.c.l.b16 %v339
        %v342 = vpack.c.b16 %v341, %v341
        %v344 = vshrl.u32 %v342, 16
        %v346 = vrot.slane %v344, 5
        %v347 = vshll.u32 %v342, 16
        %v349 = vrot.slane %v347, 6
        %v350 = vor.u32 %v346, %v349
        %v351 = vrot.slane %v346, 4
        %vm354 = vcmask 60418
        %vm355 = vsmask.f32 7946
        %vm356 = vmand %vm354, %vm355
        %v357 = vld [vmem:[#allocation2 + $0x4] sm:$0xc]
        %v358 = vsel %vm356, %v350, %v357
        %359 = vst [vmem:[#allocation2 + $0x4] sm:$0xc] %v358
        %vm360 = vcmask 57344
        %vm361 = vsmask.f32 256
        %vm362 = vmand %vm360, %vm361
        %v363 = vld [vmem:[#allocation2 + $0x8] sm:$0x1]
        %v364 = vsel %vm362, %v351, %v363
        %365 = vst [vmem:[#allocation2 + $0x8] sm:$0x1] %v364
        %v366 = vld [vmem:[#allocation3 + $0xc] sm:$0xf]
        %v367 = vmax.f32 %v366, 0.0
        %v368 = vpack.c.bf16 %v367, %v367
        %v370 = vunpack.c.l.b16 %v368
        %v371 = vpack.c.b16 %v370, %v370
        %v373 = vshrl.u32 %v371, 16
        %v375 = vrot.slane %v373, 6
        %v376 = vshll.u32 %v371, 16
        %v378 = vrot.slane %v376, 7
        %v379 = vor.u32 %v375, %v378
        %vm381 = vcmask 60417
        %vm382 = vsmask.f32 3334
        %vm383 = vmand %vm381, %vm382
        %v384 = vld [vmem:[#allocation2 + $0x8] sm:$0xe]
        %v385 = vsel %vm383, %v379, %v384
        %386 = vst [vmem:[#allocation2 + $0x8] sm:$0xe] %v385
        %v387 = vld [vmem:[#allocation3 + $0x12] sm:$0xf]
        %v388 = vmax.f32 %v387, 0.0
        %v389 = vpack.c.bf16 %v388, %v388
        %v391 = vunpack.c.l.b16 %v389
        %v392 = vpack.c.b16 %v391, %v391
        %v394 = vshrl.u32 %v392, 16
        %v396 = vrot.slane %v394, 7
        %v397 = vshll.u32 %v392, 16
        %v399 = vor.u32 %v396, %v397
        %vm401 = vcmask 59392
        %vm402 = vsmask.f32 2306
        %vm403 = vmand %vm401, %vm402
        %v404 = vld [vmem:[#allocation2 + $0xc] sm:$0x7]
        %v405 = vsel %vm403, %v399, %v404
        %406 = vst [vmem:[#allocation2 + $0xc] sm:$0x7] %v405
        %v407 = vld [vmem:[#allocation2] sm:$0xf]
        %v408 = vld [vmem:[#allocation2 + $0x4] sm:$0xf]
        %v409 = vld [vmem:[#allocation2 + $0x8] sm:$0xf]
        %v410 = vld [vmem:[#allocation2 + $0xc] sm:$0x1]
        %v411 = vld [vmem:[#allocation2] sm:$0xe]
        %v412 = vld [vmem:[#allocation2] sm:$0x8]
        %v413 = vld [vmem:[#allocation2 + $0xc] sm:$0x7]
        %v414 = vld [vmem:[#allocation2 + $0xc] sm:$0xf]
        %v415 = vld [vmem:[#allocation2 + $0x4] sm:$0xc]
        %v416 = vld [vmem:[#allocation2 + $0x10] sm:$0x3]
        %v417 = vld [vmem:[#allocation2 + $0x10] sm:$0x7]
        %v418 = vld [vmem:[#allocation2 + $0x4] sm:$0x8]
        %v422 = vunpack.c.l.b16 %v407
        %v423 = vunpack.c.l.b16 %v408
        %v424 = vunpack.c.l.b16 %v409
        %v425 = vpack.c.b16 %v423, %v422
        %v426 = vpack.c.b16 %v424, %v424
        %v428 = vunpack.c.l.b16 %v410
        %v429 = vpack.c.b16 %v428, %v424
        %vm430 = vsmask.f32 7424
        %v432 = vshrl.u32 %v425, 16
        %v434 = vshll.u32 %v425, 16
        %v436 = vrot.slane %v434, 1
        %v437 = vor.u32 %v432, %v436
        %v439 = vshll.u32 %v429, 16
        %v441 = vrot.slane %v439, 1
        %v442 = vsel %vm430, %v437, %v441
        %v443 = vshrl.u32 %v429, 16
        %v445 = vor.u32 %v443, %v441
        %446 = vrot.lane.b32.xlu0 %v442, 8
        %v447 = vpop.permute.xlu0 %446
        %448 = vrot.lane.b32.xlu0 %v445, 8
        %v449 = vpop.permute.xlu0 %448
        %v451 = vunpack.c.l.b16 %v411
        %v452 = vpack.c.b16 %v423, %v451
        %vm453 = vcmask 1046528
        %v454 = vrot.slane %v452, 1
        %v455 = vrot.slane %v429, 1
        %v456 = vsel %vm453, %v454, %v455
        %457 = vrot.lane.b32.xlu0 %v456, 16
        %v458 = vpop.permute.xlu0 %457
        %459 = vrot.lane.b32.xlu0 %v455, 16
        %v460 = vpop.permute.xlu0 %459
        %v463 = vunpack.c.l.b16 %v412
        %v464 = vunpack.c.l.b16 %v413
        %v465 = vpack.c.b16 %v423, %v463
        %v466 = vpack.c.b16 %v464, %v424
        %vm467 = vcmask 1044480
        %v468 = vrot.slane %v465, 3
        %v469 = vrot.slane %v466, 3
        %v470 = vsel %vm467, %v468, %v469
        %471 = vrot.lane.b32.xlu0 %v470, 24
        %v472 = vpop.permute.xlu0 %471
        %473 = vrot.lane.b32.xlu0 %v469, 24
        %v474 = vpop.permute.xlu0 %473
        %v476 = vunpack.c.l.b16 %v414
        %v477 = vpack.c.b16 %v476, %v424
        %vm478 = vsmask.f32 4352
        %v480 = vshrl.u32 %v465, 16
        %v482 = vrot.slane %v480, 3
        %v483 = vshll.u32 %v465, 16
        %v485 = vrot.slane %v483, 4
        %v486 = vor.u32 %v482, %v485
        %v488 = vshrl.u32 %v477, 16
        %v490 = vrot.slane %v488, 3
        %v491 = vshll.u32 %v477, 16
        %v493 = vrot.slane %v491, 4
        %v494 = vor.u32 %v490, %v493
        %v495 = vsel %vm478, %v486, %v494
        %496 = vrot.lane.b32.xlu0 %v495, 32
        %v497 = vpop.permute.xlu0 %496
        %498 = vrot.lane.b32.xlu0 %v494, 32
        %v499 = vpop.permute.xlu0 %498
        %v500 = vpack.c.b16 %v424, %v423
        %v501 = vpack.c.b16 %v476, %v476
        %502 = vrot.lane.b32.xlu0 %v500, 40
        %v503 = vpop.permute.xlu0 %502
        %504 = vrot.lane.b32.xlu0 %v501, 40
        %v505 = vpop.permute.xlu0 %504
        %v508 = vunpack.c.l.b16 %v415
        %v509 = vunpack.c.l.b16 %v416
        %v510 = vpack.c.b16 %v424, %v508
        %v511 = vpack.c.b16 %v509, %v476
        %vm512 = vcmask 1045504
        %v513 = vrot.slane %v510, 2
        %v514 = vrot.slane %v511, 2
        %v515 = vsel %vm512, %v513, %v514
        %516 = vrot.lane.b32.xlu0 %v515, 48
        %v517 = vpop.permute.xlu0 %516
        %518 = vrot.lane.b32.xlu0 %v514, 48
        %v519 = vpop.permute.xlu0 %518
        %v521 = vunpack.c.l.b16 %v417
        %v522 = vpack.c.b16 %v521, %v476
        %vm523 = vsmask.f32 5376
        %v525 = vshrl.u32 %v510, 16
        %v527 = vrot.slane %v525, 2
        %v528 = vshll.u32 %v510, 16
        %v530 = vrot.slane %v528, 3
        %v531 = vor.u32 %v527, %v530
        %v533 = vshrl.u32 %v522, 16
        %v535 = vrot.slane %v533, 2
        %v536 = vshll.u32 %v522, 16
        %v538 = vrot.slane %v536, 3
        %v539 = vor.u32 %v535, %v538
        %v540 = vsel %vm523, %v531, %v539
        %541 = vrot.lane.b32.xlu0 %v540, 56
        %v542 = vpop.permute.xlu0 %541
        %543 = vrot.lane.b32.xlu0 %v539, 56
        %v544 = vpop.permute.xlu0 %543
        %v546 = vunpack.c.l.b16 %v418
        %v547 = vpack.c.b16 %v424, %v546
        %v548 = vrot.slane %v547, 3
        %v549 = vrot.slane %v522, 3
        %v550 = vsel %vm467, %v548, %v549
        %551 = vrot.lane.b32.xlu0 %v550, 64
        %v552 = vpop.permute.xlu0 %551
        %553 = vrot.lane.b32.xlu0 %v549, 64
        %v554 = vpop.permute.xlu0 %553
        %vm555 = vcmask 64512
        %v557 = vsel %vm555, %v425, %v447
        %v560 = vsel %vm555, %v426, %v449
        %vm561 = vcmask 130048
        %v563 = vsel %vm561, %v557, %v458
        %v565 = vsel %vm561, %v560, %v460
        %vm566 = vcmask 195584
        %v568 = vsel %vm566, %v563, %v472
        %v570 = vsel %vm566, %v565, %v474
        %vm571 = vcmask 261120
        %v573 = vsel %vm571, %v568, %v497
        %v575 = vsel %vm571, %v570, %v499
        %vm576 = vcmask 326656
        %v578 = vsel %vm576, %v573, %v503
        %v580 = vsel %vm576, %v575, %v505
        %vm581 = vcmask 392192
        %v583 = vsel %vm581, %v578, %v517
        %v585 = vsel %vm581, %v580, %v519
        %vm586 = vcmask 457728
        %v588 = vsel %vm586, %v583, %v542
        %v590 = vsel %vm586, %v585, %v544
        %vm591 = vcmask 523264
        %v593 = vsel %vm591, %v588, %v552
        %v595 = vsel %vm591, %v590, %v554
        %vm596 = vcmask 588800
        %v598 = vsel %vm596, %v593, 0
        %v600 = vsel %vm596, %v595, 0
        %s602 = smul.u32 %s303, 16
        %s603 = smul.addr %s602, 4
        %s604 = scalar_lea.vmem %s1, %s603
        %v605 = vld [vmem:[%s604] sm:$0xf]
        %v606 = vld [vmem:[%s604 + $0x4] sm:$0xf]
        %v607 = vld [vmem:[%s604 + $0x8] sm:$0xf]
        %v608 = vld [vmem:[%s604 + $0xc] sm:$0xf]
        %v609 = vld [vmem:[%s604 + $0x10] sm:$0xf]
        %v610 = vld [vmem:[%s604 + $0x14] sm:$0xf]
        %v611 = vld [vmem:[%s604 + $0x18] sm:$0xf]
        %v612 = vld [vmem:[%s604 + $0x1c] sm:$0xf]
        %v613 = vld [vmem:[%s604 + $0x20] sm:$0xf]
        %v614 = vld [vmem:[%s604 + $0x24] sm:$0xf]
        %v615 = vld [vmem:[%s604 + $0x28] sm:$0xf]
        %v616 = vld [vmem:[%s604 + $0x2c] sm:$0xf]
        %v617 = vld [vmem:[%s604 + $0x30] sm:$0xf]
        %v618 = vld [vmem:[%s604 + $0x34] sm:$0xf]
        %v619 = vld [vmem:[%s604 + $0x38] sm:$0xf]
        %v620 = vld [vmem:[%s604 + $0x3c] sm:$0xf]
        %s621 = scalar_lea.vmem %s2, %s303
        %v622 = vld [vmem:[%s621] sm:$0x1]
        %v624 = vlaneseq
        %v625 = vshrl.u32 %v624, 7
        %v626 = vsub.s32 0, %v625
        %v627 = vrot.slane %v622, %v626
        %v645 = vunpack.c.l.b16 %v605
        %v646 = vunpack.c.l.b16 %v606
        %v647 = vunpack.c.l.b16 %v607
        %v648 = vunpack.c.l.b16 %v608
        %v649 = vunpack.c.l.b16 %v609
        %v650 = vunpack.c.l.b16 %v610
        %v651 = vunpack.c.l.b16 %v611
        %v652 = vunpack.c.l.b16 %v612
        %v653 = vunpack.c.l.b16 %v613
        %v654 = vunpack.c.l.b16 %v614
        %v655 = vunpack.c.l.b16 %v615
        %v656 = vunpack.c.l.b16 %v616
        %v657 = vunpack.c.l.b16 %v617
        %v658 = vunpack.c.l.b16 %v618
        %v659 = vunpack.c.l.b16 %v619
        %v660 = vunpack.c.l.b16 %v620
        %v661 = vpack.c.b16 %v646, %v645
        %v662 = vpack.c.b16 %v648, %v647
        %v663 = vpack.c.b16 %v650, %v649
        %v664 = vpack.c.b16 %v652, %v651
        %v665 = vpack.c.b16 %v654, %v653
        %v666 = vpack.c.b16 %v656, %v655
        %v667 = vpack.c.b16 %v658, %v657
        %v668 = vpack.c.b16 %v660, %v659
        %677 = vmatprep.subr.bf16.mxu0 0
        %678 = vmatpush1.bf16.msra.mxu0 %v668
        %679 = vmatprep.subr.bf16.mxu0 0
        %680 = vmatpush1.bf16.msra.mxu0 %v667
        %681 = vmatprep.subr.bf16.mxu0 0
        %682 = vmatpush1.bf16.msra.mxu0 %v666
        %683 = vmatprep.subr.bf16.mxu0 0
        %684 = vmatpush1.bf16.msra.mxu0 %v665
        %685 = vmatprep.subr.bf16.mxu0 0
        %686 = vmatpush1.bf16.msra.mxu0 %v664
        %687 = vmatprep.subr.bf16.mxu0 0
        %688 = vmatpush1.bf16.msra.mxu0 %v663
        %689 = vmatprep.subr.bf16.mxu0 0
        %690 = vmatpush1.bf16.msra.mxu0 %v662
        %691 = vmatprep.subr.bf16.mxu0 0
        %692 = vmatpush1.bf16.msra.mxu0 %v661
        %693 = vmatprep.subr.bf16.mxu0 0
        %694 = vmatpush2.bf16.msra.mxu0 0
        %695 = vmatprep.subr.bf16.mxu0 0
        %696 = vmatpush2.bf16.msra.mxu0 0
        %697 = vmatprep.subr.bf16.mxu0 0
        %698 = vmatpush2.bf16.msra.mxu0 0
        %699 = vmatprep.subr.bf16.mxu0 0
        %700 = vmatpush2.bf16.msra.mxu0 0
        %701 = vmatprep.subr.bf16.mxu0 0
        %702 = vmatpush2.bf16.msra.mxu0 0
        %703 = vmatprep.subr.bf16.mxu0 0
        %704 = vmatpush2.bf16.msra.mxu0 0
        %705 = vmatprep.subr.bf16.mxu0 0
        %706 = vmatpush2.bf16.msra.mxu0 0
        %707 = vmatprep.subr.bf16.mxu0 0
        %708 = vmatpush2.bf16.msra.mxu0 0
        %709 = vmatprep.mubr.bf16.mxu0 0
        %710 = vmatmul.mubr.bf16.gmra.mxu0 %v598
        %v711 = vpop.f32.mrf.mxu0
        %v712 = vadd.f32 %v627, %v711
        %v713 = vpop.f32.mrf.mxu0
        %v714 = vpop.f32.mrf.mxu0
        %v715 = vadd.f32 %v627, %v714
        %v716 = vpop.f32.mrf.mxu0
        %717 = vmatprep.mubr.bf16.mxu0 0
        %718 = vmatmul.mubr.bf16.gmra.mxu0 %v600
        %v719 = vpop.f32.mrf.mxu0
        %v720 = vadd.f32 %v627, %v719
        %v721 = vpop.f32.mrf.mxu0
        %v722 = vpop.f32.mrf.mxu0
        %v723 = vpop.f32.mrf.mxu0
        %724 = vdwg.mxu0
        %v725 = vmax.f32 %v712, 0.0
        %v726 = vmax.f32 %v715, 0.0
        %v727 = vmax.f32 %v720, 0.0
        %v728 = vpack.c.bf16 %v726, %v725
        %v729 = vpack.c.bf16 %v727, %v727
        %s730 = smul.addr %s602, 4
        %s731 = scalar_lea.vmem %s3, %s730
        %v732 = vld [vmem:[%s731] sm:$0xf]
        %v733 = vld [vmem:[%s731 + $0x4] sm:$0xf]
        %v734 = vld [vmem:[%s731 + $0x8] sm:$0xf]
        %v735 = vld [vmem:[%s731 + $0xc] sm:$0xf]
        %v736 = vld [vmem:[%s731 + $0x10] sm:$0xf]
        %v737 = vld [vmem:[%s731 + $0x14] sm:$0xf]
        %v738 = vld [vmem:[%s731 + $0x18] sm:$0xf]
        %v739 = vld [vmem:[%s731 + $0x1c] sm:$0xf]
        %v740 = vld [vmem:[%s731 + $0x20] sm:$0xf]
        %v741 = vld [vmem:[%s731 + $0x24] sm:$0xf]
        %v742 = vld [vmem:[%s731 + $0x28] sm:$0xf]
        %v743 = vld [vmem:[%s731 + $0x2c] sm:$0xf]
        %v744 = vld [vmem:[%s731 + $0x30] sm:$0xf]
        %v745 = vld [vmem:[%s731 + $0x34] sm:$0xf]
        %v746 = vld [vmem:[%s731 + $0x38] sm:$0xf]
        %v747 = vld [vmem:[%s731 + $0x3c] sm:$0xf]
        %s748 = scalar_lea.vmem %s4, %s303
        %v749 = vld [vmem:[%s748] sm:$0x1]
        %v751 = vlaneseq
        %v752 = vshrl.u32 %v751, 7
        %v753 = vsub.s32 0, %v752
        %v754 = vrot.slane %v749, %v753
        %v772 = vunpack.c.l.b16 %v732
        %v773 = vunpack.c.l.b16 %v733
        %v774 = vunpack.c.l.b16 %v734
        %v775 = vunpack.c.l.b16 %v735
        %v776 = vunpack.c.l.b16 %v736
        %v777 = vunpack.c.l.b16 %v737
        %v778 = vunpack.c.l.b16 %v738
        %v779 = vunpack.c.l.b16 %v739
        %v780 = vunpack.c.l.b16 %v740
        %v781 = vunpack.c.l.b16 %v741
        %v782 = vunpack.c.l.b16 %v742
        %v783 = vunpack.c.l.b16 %v743
        %v784 = vunpack.c.l.b16 %v744
        %v785 = vunpack.c.l.b16 %v745
        %v786 = vunpack.c.l.b16 %v746
        %v787 = vunpack.c.l.b16 %v747
        %v788 = vpack.c.b16 %v773, %v772
        %v789 = vpack.c.b16 %v775, %v774
        %v790 = vpack.c.b16 %v777, %v776
        %v791 = vpack.c.b16 %v779, %v778
        %v792 = vpack.c.b16 %v781, %v780
        %v793 = vpack.c.b16 %v783, %v782
        %v794 = vpack.c.b16 %v785, %v784
        %v795 = vpack.c.b16 %v787, %v786
        %804 = vmatprep.subr.bf16.mxu0 0
        %805 = vmatpush1.bf16.msra.mxu0 %v795
        %806 = vmatprep.subr.bf16.mxu0 0
        %807 = vmatpush1.bf16.msra.mxu0 %v794
        %808 = vmatprep.subr.bf16.mxu0 0
        %809 = vmatpush1.bf16.msra.mxu0 %v793
        %810 = vmatprep.subr.bf16.mxu0 0
        %811 = vmatpush1.bf16.msra.mxu0 %v792
        %812 = vmatprep.subr.bf16.mxu0 0
        %813 = vmatpush1.bf16.msra.mxu0 %v791
        %814 = vmatprep.subr.bf16.mxu0 0
        %815 = vmatpush1.bf16.msra.mxu0 %v790
        %816 = vmatprep.subr.bf16.mxu0 0
        %817 = vmatpush1.bf16.msra.mxu0 %v789
        %818 = vmatprep.subr.bf16.mxu0 0
        %819 = vmatpush1.bf16.msra.mxu0 %v788
        %820 = vmatprep.subr.bf16.mxu0 0
        %821 = vmatpush2.bf16.msra.mxu0 0
        %822 = vmatprep.subr.bf16.mxu0 0
        %823 = vmatpush2.bf16.msra.mxu0 0
        %824 = vmatprep.subr.bf16.mxu0 0
        %825 = vmatpush2.bf16.msra.mxu0 0
        %826 = vmatprep.subr.bf16.mxu0 0
        %827 = vmatpush2.bf16.msra.mxu0 0
        %828 = vmatprep.subr.bf16.mxu0 0
        %829 = vmatpush2.bf16.msra.mxu0 0
        %830 = vmatprep.subr.bf16.mxu0 0
        %831 = vmatpush2.bf16.msra.mxu0 0
        %832 = vmatprep.subr.bf16.mxu0 0
        %833 = vmatpush2.bf16.msra.mxu0 0
        %834 = vmatprep.subr.bf16.mxu0 0
        %835 = vmatpush2.bf16.msra.mxu0 0
        %836 = vmatprep.mubr.bf16.mxu0 0
        %837 = vmatmul.mubr.bf16.gmra.mxu0 %v728
        %v838 = vpop.f32.mrf.mxu0
        %v839 = vadd.f32 %v754, %v838
        %v840 = vpop.f32.mrf.mxu0
        %v841 = vpop.f32.mrf.mxu0
        %v842 = vadd.f32 %v754, %v841
        %v843 = vpop.f32.mrf.mxu0
        %844 = vmatprep.mubr.bf16.mxu0 0
        %845 = vmatmul.mubr.bf16.gmra.mxu0 %v729
        %v846 = vpop.f32.mrf.mxu0
        %v847 = vadd.f32 %v754, %v846
        %v848 = vpop.f32.mrf.mxu0
        %v849 = vpop.f32.mrf.mxu0
        %v850 = vpop.f32.mrf.mxu0
        %851 = vdwg.mxu0
        %v852 = vld [vmem:[#allocation3] sm:$0xff]
        %v853 = vld [vmem:[#allocation3 + $0x8] sm:$0xff]
        %v854 = vld [vmem:[#allocation3 + $0x10] sm:$0xff]
        %v855 = vadd.f32 %v852, %v839
        %v856 = vadd.f32 %v853, %v842
        %v857 = vadd.f32 %v854, %v847
        %v858 = vmax.f32 %v855, 0.0
        %v859 = vmax.f32 %v856, 0.0
        %v860 = vmax.f32 %v857, 0.0
        %861 = vst [vmem:[#allocation3] sm:$0xff] %v858
        %862 = vst [vmem:[#allocation3 + $0x8] sm:$0xff] %v859
        %863 = vst [vmem:[#allocation3 + $0x10] sm:$0xff] %v860
      $region53: #{forward.5} parent=47 // loop_footer
        %s307 = sadd.s32 1, %s303
      $region54: #{forward.5} parent=47 // loop_footer_branch
        %302 = sbr.rel target = $region50
      $region55: #{forward.5} parent=47 // loop_exit
        _
      %v864 = vld [vmem:[#allocation3] sm:$0xf]
      %v865 = vpack.c.bf16 %v864, %v864
      %v867 = vunpack.c.l.b16 %v865
      %v868 = vpack.c.b16 %v867, %v867
      %v870 = vshll.u32 %v868, 16
      %v872 = vrot.slane %v870, 5
      %v873 = vshrl.u32 %v868, 16
      %v875 = vrot.slane %v873, 4
      %v876 = vor.u32 %v875, %v872
      %v877 = vrot.slane %v876, 4
      %vm880 = vcmask 60419
      %vm881 = vsmask.f32 7950
      %vm882 = vmand %vm880, %vm881
      %v883 = vld [vmem:[#allocation2] sm:$0x8]
      %v884 = vsel %vm882, %v872, %v883
      %885 = vst [vmem:[#allocation2] sm:$0x8] %v884
      %vm886 = vcmask 58368
      %vm887 = vsmask.f32 1280
      %vm888 = vmand %vm886, %vm887
      %v889 = vld [vmem:[#allocation2 + $0x4] sm:$0x3]
      %v890 = vsel %vm888, %v877, %v889
      %891 = vst [vmem:[#allocation2 + $0x4] sm:$0x3] %v890
      %v892 = vld [vmem:[#allocation3 + $0x6] sm:$0xf]
      %v893 = vpack.c.bf16 %v892, %v892
      %v895 = vunpack.c.l.b16 %v893
      %v896 = vpack.c.b16 %v895, %v895
      %v898 = vshrl.u32 %v896, 16
      %v900 = vrot.slane %v898, 5
      %v901 = vshll.u32 %v896, 16
      %v903 = vrot.slane %v901, 6
      %v904 = vor.u32 %v900, %v903
      %v905 = vrot.slane %v900, 4
      %vm908 = vcmask 60418
      %vm909 = vsmask.f32 7946
      %vm910 = vmand %vm908, %vm909
      %v911 = vld [vmem:[#allocation2 + $0x4] sm:$0xc]
      %v912 = vsel %vm910, %v904, %v911
      %913 = vst [vmem:[#allocation2 + $0x4] sm:$0xc] %v912
      %vm914 = vcmask 57344
      %vm915 = vsmask.f32 256
      %vm916 = vmand %vm914, %vm915
      %v917 = vld [vmem:[#allocation2 + $0x8] sm:$0x1]
      %v918 = vsel %vm916, %v905, %v917
      %919 = vst [vmem:[#allocation2 + $0x8] sm:$0x1] %v918
      %v920 = vld [vmem:[#allocation3 + $0xc] sm:$0xf]
      %v921 = vpack.c.bf16 %v920, %v920
      %v923 = vunpack.c.l.b16 %v921
      %v924 = vpack.c.b16 %v923, %v923
      %v926 = vshrl.u32 %v924, 16
      %v928 = vrot.slane %v926, 6
      %v929 = vshll.u32 %v924, 16
      %v931 = vrot.slane %v929, 7
      %v932 = vor.u32 %v928, %v931
      %vm934 = vcmask 60417
      %vm935 = vsmask.f32 3334
      %vm936 = vmand %vm934, %vm935
      %v937 = vld [vmem:[#allocation2 + $0x8] sm:$0xe]
      %v938 = vsel %vm936, %v932, %v937
      %939 = vst [vmem:[#allocation2 + $0x8] sm:$0xe] %v938
      %v940 = vld [vmem:[#allocation3 + $0x12] sm:$0xf]
      %v941 = vpack.c.bf16 %v940, %v940
      %v943 = vunpack.c.l.b16 %v941
      %v944 = vpack.c.b16 %v943, %v943
      %v946 = vshrl.u32 %v944, 16
      %v948 = vrot.slane %v946, 7
      %v949 = vshll.u32 %v944, 16
      %v951 = vor.u32 %v948, %v949
      %vm953 = vcmask 59392
      %vm954 = vsmask.f32 2306
      %vm955 = vmand %vm953, %vm954
      %v956 = vld [vmem:[#allocation2 + $0xc] sm:$0x7]
      %v957 = vsel %vm955, %v951, %v956
      %958 = vst [vmem:[#allocation2 + $0xc] sm:$0x7] %v957
      %v959 = vld [vmem:[#allocation2] sm:$0xf]
      %v960 = vld [vmem:[#allocation2 + $0x4] sm:$0xf]
      %v961 = vld [vmem:[#allocation2 + $0x8] sm:$0xf]
      %v962 = vld [vmem:[#allocation2 + $0xc] sm:$0x1]
      %v963 = vld [vmem:[#allocation2] sm:$0xe]
      %v964 = vld [vmem:[#allocation2] sm:$0x8]
      %v965 = vld [vmem:[#allocation2 + $0xc] sm:$0x7]
      %v966 = vld [vmem:[#allocation2 + $0xc] sm:$0xf]
      %v967 = vld [vmem:[#allocation2 + $0x4] sm:$0xc]
      %v968 = vld [vmem:[#allocation2 + $0x10] sm:$0x3]
      %v969 = vld [vmem:[#allocation2 + $0x10] sm:$0x7]
      %v970 = vld [vmem:[#allocation2 + $0x4] sm:$0x8]
      %v974 = vunpack.c.l.b16 %v959
      %v975 = vunpack.c.l.b16 %v960
      %v976 = vunpack.c.l.b16 %v961
      %v977 = vpack.c.b16 %v975, %v974
      %v978 = vpack.c.b16 %v976, %v976
      %v980 = vunpack.c.l.b16 %v962
      %v981 = vpack.c.b16 %v980, %v976
      %vm982 = vsmask.f32 7424
      %v984 = vshrl.u32 %v977, 16
      %v986 = vshll.u32 %v977, 16
      %v988 = vrot.slane %v986, 1
      %v989 = vor.u32 %v984, %v988
      %v991 = vshll.u32 %v981, 16
      %v993 = vrot.slane %v991, 1
      %v994 = vsel %vm982, %v989, %v993
      %v995 = vshrl.u32 %v981, 16
      %v997 = vor.u32 %v995, %v993
      %998 = vrot.lane.b32.xlu0 %v994, 8
      %v999 = vpop.permute.xlu0 %998
      %1000 = vrot.lane.b32.xlu0 %v997, 8
      %v1001 = vpop.permute.xlu0 %1000
      %v1003 = vunpack.c.l.b16 %v963
      %v1004 = vpack.c.b16 %v975, %v1003
      %vm1005 = vcmask 1046528
      %v1006 = vrot.slane %v1004, 1
      %v1007 = vrot.slane %v981, 1
      %v1008 = vsel %vm1005, %v1006, %v1007
      %1009 = vrot.lane.b32.xlu0 %v1008, 16
      %v1010 = vpop.permute.xlu0 %1009
      %1011 = vrot.lane.b32.xlu0 %v1007, 16
      %v1012 = vpop.permute.xlu0 %1011
      %v1015 = vunpack.c.l.b16 %v964
      %v1016 = vunpack.c.l.b16 %v965
      %v1017 = vpack.c.b16 %v975, %v1015
      %v1018 = vpack.c.b16 %v1016, %v976
      %vm1019 = vcmask 1044480
      %v1020 = vrot.slane %v1017, 3
      %v1021 = vrot.slane %v1018, 3
      %v1022 = vsel %vm1019, %v1020, %v1021
      %1023 = vrot.lane.b32.xlu0 %v1022, 24
      %v1024 = vpop.permute.xlu0 %1023
      %1025 = vrot.lane.b32.xlu0 %v1021, 24
      %v1026 = vpop.permute.xlu0 %1025
      %v1028 = vunpack.c.l.b16 %v966
      %v1029 = vpack.c.b16 %v1028, %v976
      %vm1030 = vsmask.f32 4352
      %v1032 = vshrl.u32 %v1017, 16
      %v1034 = vrot.slane %v1032, 3
      %v1035 = vshll.u32 %v1017, 16
      %v1037 = vrot.slane %v1035, 4
      %v1038 = vor.u32 %v1034, %v1037
      %v1040 = vshrl.u32 %v1029, 16
      %v1042 = vrot.slane %v1040, 3
      %v1043 = vshll.u32 %v1029, 16
      %v1045 = vrot.slane %v1043, 4
      %v1046 = vor.u32 %v1042, %v1045
      %v1047 = vsel %vm1030, %v1038, %v1046
      %1048 = vrot.lane.b32.xlu0 %v1047, 32
      %v1049 = vpop.permute.xlu0 %1048
      %1050 = vrot.lane.b32.xlu0 %v1046, 32
      %v1051 = vpop.permute.xlu0 %1050
      %v1052 = vpack.c.b16 %v976, %v975
      %v1053 = vpack.c.b16 %v1028, %v1028
      %1054 = vrot.lane.b32.xlu0 %v1052, 40
      %v1055 = vpop.permute.xlu0 %1054
      %1056 = vrot.lane.b32.xlu0 %v1053, 40
      %v1057 = vpop.permute.xlu0 %1056
      %v1060 = vunpack.c.l.b16 %v967
      %v1061 = vunpack.c.l.b16 %v968
      %v1062 = vpack.c.b16 %v976, %v1060
      %v1063 = vpack.c.b16 %v1061, %v1028
      %vm1064 = vcmask 1045504
      %v1065 = vrot.slane %v1062, 2
      %v1066 = vrot.slane %v1063, 2
      %v1067 = vsel %vm1064, %v1065, %v1066
      %1068 = vrot.lane.b32.xlu0 %v1067, 48
      %v1069 = vpop.permute.xlu0 %1068
      %1070 = vrot.lane.b32.xlu0 %v1066, 48
      %v1071 = vpop.permute.xlu0 %1070
      %v1073 = vunpack.c.l.b16 %v969
      %v1074 = vpack.c.b16 %v1073, %v1028
      %vm1075 = vsmask.f32 5376
      %v1077 = vshrl.u32 %v1062, 16
      %v1079 = vrot.slane %v1077, 2
      %v1080 = vshll.u32 %v1062, 16
      %v1082 = vrot.slane %v1080, 3
      %v1083 = vor.u32 %v1079, %v1082
      %v1085 = vshrl.u32 %v1074, 16
      %v1087 = vrot.slane %v1085, 2
      %v1088 = vshll.u32 %v1074, 16
      %v1090 = vrot.slane %v1088, 3
      %v1091 = vor.u32 %v1087, %v1090
      %v1092 = vsel %vm1075, %v1083, %v1091
      %1093 = vrot.lane.b32.xlu0 %v1092, 56
      %v1094 = vpop.permute.xlu0 %1093
      %1095 = vrot.lane.b32.xlu0 %v1091, 56
      %v1096 = vpop.permute.xlu0 %1095
      %v1098 = vunpack.c.l.b16 %v970
      %v1099 = vpack.c.b16 %v976, %v1098
      %v1100 = vrot.slane %v1099, 3
      %v1101 = vrot.slane %v1074, 3
      %v1102 = vsel %vm1019, %v1100, %v1101
      %1103 = vrot.lane.b32.xlu0 %v1102, 64
      %v1104 = vpop.permute.xlu0 %1103
      %1105 = vrot.lane.b32.xlu0 %v1101, 64
      %v1106 = vpop.permute.xlu0 %1105
      %vm1107 = vcmask 64512
      %v1109 = vsel %vm1107, %v977, %v999
      %v1112 = vsel %vm1107, %v978, %v1001
      %vm1113 = vcmask 130048
      %v1115 = vsel %vm1113, %v1109, %v1010
      %v1117 = vsel %vm1113, %v1112, %v1012
      %vm1118 = vcmask 195584
      %v1120 = vsel %vm1118, %v1115, %v1024
      %v1122 = vsel %vm1118, %v1117, %v1026
      %vm1123 = vcmask 261120
      %v1125 = vsel %vm1123, %v1120, %v1049
      %v1127 = vsel %vm1123, %v1122, %v1051
      %vm1128 = vcmask 326656
      %v1130 = vsel %vm1128, %v1125, %v1055
      %v1132 = vsel %vm1128, %v1127, %v1057
      %vm1133 = vcmask 392192
      %v1135 = vsel %vm1133, %v1130, %v1069
      %v1137 = vsel %vm1133, %v1132, %v1071
      %vm1138 = vcmask 457728
      %v1140 = vsel %vm1138, %v1135, %v1094
      %v1142 = vsel %vm1138, %v1137, %v1096
      %vm1143 = vcmask 523264
      %v1145 = vsel %vm1143, %v1140, %v1104
      %v1147 = vsel %vm1143, %v1142, %v1106
      %vm1148 = vcmask 588800
      %v1150 = vsel %vm1148, %v1145, 0
      %v1152 = vsel %vm1148, %v1147, 0
      %v1154 = vld [vmem:[%s5] sm:$0xf]
      %v1155 = vld [vmem:[%s5 + $0x4] sm:$0xf]
      %v1156 = vld [vmem:[%s5 + $0x8] sm:$0xf]
      %v1157 = vld [vmem:[%s5 + $0xc] sm:$0xf]
      %v1158 = vld [vmem:[%s5 + $0x10] sm:$0xf]
      %v1159 = vld [vmem:[%s5 + $0x14] sm:$0xf]
      %v1160 = vld [vmem:[%s5 + $0x18] sm:$0xf]
      %v1161 = vld [vmem:[%s5 + $0x1c] sm:$0xf]
      %v1162 = vld [vmem:[%s5 + $0x20] sm:$0xf]
      %v1163 = vld [vmem:[%s5 + $0x24] sm:$0xf]
      %v1164 = vld [vmem:[%s5 + $0x28] sm:$0xf]
      %v1165 = vld [vmem:[%s5 + $0x2c] sm:$0xf]
      %v1166 = vld [vmem:[%s5 + $0x30] sm:$0xf]
      %v1167 = vld [vmem:[%s5 + $0x34] sm:$0xf]
      %v1168 = vld [vmem:[%s5 + $0x38] sm:$0xf]
      %v1169 = vld [vmem:[%s5 + $0x3c] sm:$0xf]
      %v1170 = vld [vmem:[%s6] sm:$0x1]
      %v1172 = vlaneseq
      %v1173 = vshrl.u32 %v1172, 7
      %v1174 = vsub.s32 0, %v1173
      %v1175 = vrot.slane %v1170, %v1174
      %v1193 = vunpack.c.l.b16 %v1154
      %v1194 = vunpack.c.l.b16 %v1155
      %v1195 = vunpack.c.l.b16 %v1156
      %v1196 = vunpack.c.l.b16 %v1157
      %v1197 = vunpack.c.l.b16 %v1158
      %v1198 = vunpack.c.l.b16 %v1159
      %v1199 = vunpack.c.l.b16 %v1160
      %v1200 = vunpack.c.l.b16 %v1161
      %v1201 = vunpack.c.l.b16 %v1162
      %v1202 = vunpack.c.l.b16 %v1163
      %v1203 = vunpack.c.l.b16 %v1164
      %v1204 = vunpack.c.l.b16 %v1165
      %v1205 = vunpack.c.l.b16 %v1166
      %v1206 = vunpack.c.l.b16 %v1167
      %v1207 = vunpack.c.l.b16 %v1168
      %v1208 = vunpack.c.l.b16 %v1169
      %v1209 = vpack.c.b16 %v1194, %v1193
      %v1210 = vpack.c.b16 %v1196, %v1195
      %v1211 = vpack.c.b16 %v1198, %v1197
      %v1212 = vpack.c.b16 %v1200, %v1199
      %v1213 = vpack.c.b16 %v1202, %v1201
      %v1214 = vpack.c.b16 %v1204, %v1203
      %v1215 = vpack.c.b16 %v1206, %v1205
      %v1216 = vpack.c.b16 %v1208, %v1207
      %1225 = vmatprep.subr.bf16.mxu0 0
      %1226 = vmatpush1.bf16.msra.mxu0 %v1216
      %1227 = vmatprep.subr.bf16.mxu0 0
      %1228 = vmatpush1.bf16.msra.mxu0 %v1215
      %1229 = vmatprep.subr.bf16.mxu0 0
      %1230 = vmatpush1.bf16.msra.mxu0 %v1214
      %1231 = vmatprep.subr.bf16.mxu0 0
      %1232 = vmatpush1.bf16.msra.mxu0 %v1213
      %1233 = vmatprep.subr.bf16.mxu0 0
      %1234 = vmatpush1.bf16.msra.mxu0 %v1212
      %1235 = vmatprep.subr.bf16.mxu0 0
      %1236 = vmatpush1.bf16.msra.mxu0 %v1211
      %1237 = vmatprep.subr.bf16.mxu0 0
      %1238 = vmatpush1.bf16.msra.mxu0 %v1210
      %1239 = vmatprep.subr.bf16.mxu0 0
      %1240 = vmatpush1.bf16.msra.mxu0 %v1209
      %1241 = vmatprep.subr.bf16.mxu0 0
      %1242 = vmatpush2.bf16.msra.mxu0 0
      %1243 = vmatprep.subr.bf16.mxu0 0
      %1244 = vmatpush2.bf16.msra.mxu0 0
      %1245 = vmatprep.subr.bf16.mxu0 0
      %1246 = vmatpush2.bf16.msra.mxu0 0
      %1247 = vmatprep.subr.bf16.mxu0 0
      %1248 = vmatpush2.bf16.msra.mxu0 0
      %1249 = vmatprep.subr.bf16.mxu0 0
      %1250 = vmatpush2.bf16.msra.mxu0 0
      %1251 = vmatprep.subr.bf16.mxu0 0
      %1252 = vmatpush2.bf16.msra.mxu0 0
      %1253 = vmatprep.subr.bf16.mxu0 0
      %1254 = vmatpush2.bf16.msra.mxu0 0
      %1255 = vmatprep.subr.bf16.mxu0 0
      %1256 = vmatpush2.bf16.msra.mxu0 0
      %1257 = vmatprep.mubr.bf16.mxu0 0
      %1258 = vmatmul.mubr.bf16.gmra.mxu0 %v1150
      %v1259 = vpop.f32.mrf.mxu0
      %v1260 = vadd.f32 %v1175, %v1259
      %v1261 = vpop.f32.mrf.mxu0
      %v1262 = vpop.f32.mrf.mxu0
      %v1263 = vadd.f32 %v1175, %v1262
      %v1264 = vpop.f32.mrf.mxu0
      %1265 = vmatprep.mubr.bf16.mxu0 0
      %1266 = vmatmul.mubr.bf16.gmra.mxu0 %v1152
      %v1267 = vpop.f32.mrf.mxu0
      %v1268 = vadd.f32 %v1175, %v1267
      %v1269 = vpop.f32.mrf.mxu0
      %v1270 = vpop.f32.mrf.mxu0
      %v1271 = vpop.f32.mrf.mxu0
      %1272 = vdwg.mxu0
      %1273 = vst [vmem:[%s278] sm:$0xff] %v1260
      %1274 = vst [vmem:[%s278 + $0x8] sm:$0xff] %v1263
      %1275 = vst [vmem:[%s278 + $0x10] sm:$0xff] %v1268
      %p1276 = scmp.lt.s32.totalorder %s18, 1
      %s1277 = scalar_select %p1276, %s18, 1
      %s1278 = smul.addr %s1277, 3
      %s1279 = smul.addr %s1278, 8
      %s1280 = scalar_lea.vmem %s7, %s1279
      // Predicated region
      $region56: #{forward.5} parent=47 // pred_check
        %p1281 = pneg %p188
      $region57: #{forward.5} parent=47 // pred_check_branch
        %1283 = sbr.rel (%p1281) target = $region59
      $region58: #{forward.5} parent=47 // pred_region
        _
      $region59: #{forward.5} parent=47 // pred_fallthru
        _
    $region48: #{forward.5} parent=5 // pred_fallthru
      _
    %p1284 = scmp.le.s32.totalorder 2, %s13
    // Predicated region
    $region60: #{forward.5} parent=5 // pred_check
      %p1285 = pneg %p1284
    $region61: #{forward.5} parent=5 // pred_check_branch
      %1287 = sbr.rel (%p1285) target = $region63
    $region62: #{forward.5} parent=5 // pred_region
      %s1288 = ssub.s32 %s13, 2
      // Predicated region
      $region64: #{forward.5} parent=62 // pred_check
        %p1289 = pneg %p194
      $region65: #{forward.5} parent=62 // pred_check_branch
        %1291 = sbr.rel (%p1289) target = $region67
      $region66: #{forward.5} parent=62 // pred_region
        %p1292 = scmp.lt.s32.totalorder %s19, 1
        %s1293 = scalar_select %p1292, %s19, 1
        %s1294 = smul.addr %s1293, 3
        %s1295 = smul.addr %s1294, 8
        %s1296 = scalar_lea.vmem %s7, %s1295
      $region67: #{forward.5} parent=62 // pred_fallthru
        _
    $region63: #{forward.5} parent=5 // pred_fallthru
      _
  $region6: #{forward.5} parent=0 // loop_footer
    %s17 = sadd.s32 1, %s13
  $region7: #{forward.5} parent=0 // loop_footer_branch
    %12 = sbr.rel target = $region3
  $region8: #{forward.5} parent=0 // loop_exit
    _

// kernel: forward.3
$region0: #{forward.3}
  #allocation0 [shape = 'u32[]', space=smem, size = 0x4, offset = 0x4, fixed_abs, tag = 'smem constant byte address 0x4 - core index']
  #allocation1 [shape = 'u32[144,128]{1,0:T(1,128)}', space=vmem, size = 0x12000, scoped, tag = 'internal scratch']
  #allocation2 [shape = 'bf16[190,8]{1,0:T(8,128)(2,1)}', space=vmem, size = 0xc000, scoped, tag = 'scratch operand']
  %s0 = inlined_call_operand.vmem [shape: f32[2,16,8,8], index: 0, kind: input, shape index: {}]
  %s1 = inlined_call_operand.vmem [shape: bf16[128,128], index: 1, kind: input, shape index: {}]
  %s2 = inlined_call_operand.vmem [shape: f32[1,128], index: 2, kind: input, shape index: {}]
  %s3 = inlined_call_operand.vmem [shape: f32[2,150,128], index: 3, kind: output, shape index: {}]
  %s4 = sld [smem:[#allocation0]]
  $region45: #{forward.3} parent=0
    _
  %s6 = ssub.s32 1, %s4
  %s7 = scalar_select 0, %s6, %s4
  loop: start=0, step=1, limit=4
  $region2: #{forward.3} parent=0 // loop_pre_header
    _
  $region3: #{forward.3} parent=0 // loop_header
    %s9 = sphi 0, %s13
    %p10 = scmp.ge.s32.totalorder %s9, 4
    %s19 = sphi 0, %s21
    %s22 = sphi 0, %s19
    %s23 = sphi 0, %s22
    %s39 = sphi 0, %s23
    %s43 = sphi 0, %s43
    %s45 = sphi 0, %s43
    %s46 = sphi 0, %s45
    %s60 = sphi 0, %s46
    %s64 = sphi 0, %s64
    %s66 = sphi 0, %s64
    %s67 = sphi 0, %s66
    %s81 = sphi 0, %s67
    %s87 = sphi 0, %s89
    %s90 = sphi 0, %s87
    %s91 = sphi 0, %s90
    %s107 = sphi 0, %s91
  $region4: #{forward.3} parent=0 // loop_header_branch
    %12 = sbr.rel (%p10) target = $region8
  $region5: #{forward.3} parent=0 // loop_body
    %s14 = ssub.s32 %s9, 1
    %s15 = ssub.s32 %s9, 2
    %s16 = sadd.s32 %s9, 1
    %s17 = ssub.s32 %s9, %s16
    %p18 = scmp.eq.s32.totalorder %s17, 0
    %s20 = sadd.s32 %s19, 1
    %s21 = scalar_select %p18, %s19, %s20
    %p24 = pneg %p18
    %p25 = scmp.eq.s32.totalorder %s9, 1
    %p26 = por %p24, %p25
    %p27 = scmp.ne.s32.totalorder %s19, %s22
    %p28 = scmp.eq.s32.totalorder %s9, 0
    %p29 = por %p27, %p28
    %p30 = scmp.ne.s32.totalorder %s19, %s22
    %p31 = scmp.eq.s32.totalorder %s14, 1
    %p32 = por %p30, %p31
    %p33 = scmp.ne.s32.totalorder %s22, %s23
    %p34 = scmp.eq.s32.totalorder %s14, 0
    %p35 = por %p33, %p34
    %p36 = scmp.ne.s32.totalorder %s22, %s23
    %p37 = scmp.eq.s32.totalorder %s15, 1
    %p38 = por %p36, %p37
    %p40 = scmp.ne.s32.totalorder %s23, %s39
    %p41 = scmp.eq.s32.totalorder %s15, 0
    %p42 = por %p40, %p41
    %s44 = sadd.s32 %s43, 1
    %p47 = scmp.eq.s32.totalorder %s9, 1
    %p48 = scmp.ne.s32.totalorder %s43, %s45
    %p49 = scmp.eq.s32.totalorder %s9, 0
    %p50 = por %p48, %p49
    %p51 = scmp.ne.s32.totalorder %s43, %s45
    %p52 = scmp.eq.s32.totalorder %s14, 1
    %p53 = por %p51, %p52
    %p54 = scmp.ne.s32.totalorder %s45, %s46
    %p55 = scmp.eq.s32.totalorder %s14, 0
    %p56 = por %p54, %p55
    %p57 = scmp.ne.s32.totalorder %s45, %s46
    %p58 = scmp.eq.s32.totalorder %s15, 1
    %p59 = por %p57, %p58
    %p61 = scmp.ne.s32.totalorder %s46, %s60
    %p62 = scmp.eq.s32.totalorder %s15, 0
    %p63 = por %p61, %p62
    %s65 = sadd.s32 %s64, 1
    %p68 = scmp.eq.s32.totalorder %s9, 1
    %p69 = scmp.ne.s32.totalorder %s64, %s66
    %p70 = scmp.eq.s32.totalorder %s9, 0
    %p71 = por %p69, %p70
    %p72 = scmp.ne.s32.totalorder %s64, %s66
    %p73 = scmp.eq.s32.totalorder %s14, 1
    %p74 = por %p72, %p73
    %p75 = scmp.ne.s32.totalorder %s66, %s67
    %p76 = scmp.eq.s32.totalorder %s14, 0
    %p77 = por %p75, %p76
    %p78 = scmp.ne.s32.totalorder %s66, %s67
    %p79 = scmp.eq.s32.totalorder %s15, 1
    %p80 = por %p78, %p79
    %p82 = scmp.ne.s32.totalorder %s67, %s81
    %p83 = scmp.eq.s32.totalorder %s15, 0
    %p84 = por %p82, %p83
    %s85 = ssub.s32 %s9, %s16
    %p86 = scmp.eq.s32.totalorder %s85, 0
    %s88 = sadd.s32 %s87, 1
    %s89 = scalar_select %p86, %s87, %s88
    %p92 = pneg %p86
    %p93 = scmp.eq.s32.totalorder %s9, 1
    %p94 = por %p92, %p93
    %p95 = scmp.ne.s32.totalorder %s87, %s90
    %p96 = scmp.eq.s32.totalorder %s9, 0
    %p97 = por %p95, %p96
    %p98 = scmp.ne.s32.totalorder %s87, %s90
    %p99 = scmp.eq.s32.totalorder %s14, 1
    %p100 = por %p98, %p99
    %p101 = scmp.ne.s32.totalorder %s90, %s91
    %p102 = scmp.eq.s32.totalorder %s14, 0
    %p103 = por %p101, %p102
    %p104 = scmp.ne.s32.totalorder %s90, %s91
    %p105 = scmp.eq.s32.totalorder %s15, 1
    %p106 = por %p104, %p105
    %p108 = scmp.ne.s32.totalorder %s91, %s107
    %p109 = scmp.eq.s32.totalorder %s15, 0
    %p110 = por %p108, %p109
    %p111 = scmp.le.s32.totalorder 1, %s9
    %p112 = scmp.lt.s32.totalorder %s9, 3
    %p113 = pnand %p111, %p112
    %p114 = pneg %p113
    // Predicated region
    $region9: #{forward.3} parent=5 // pred_check
      _
    $region10: #{forward.3} parent=5 // pred_check_branch
      %116 = sbr.rel (%p113) target = $region12
    $region11: #{forward.3} parent=5 // pred_region
      %s117 = ssub.s32 %s9, 1
      // Predicated region
      $region13: #{forward.3} parent=11 // pred_check
        %p118 = pneg %p56
      $region14: #{forward.3} parent=11 // pred_check_branch
        %120 = sbr.rel (%p118) target = $region16
      $region15: #{forward.3} parent=11 // pred_region
        _
      $region16: #{forward.3} parent=11 // pred_fallthru
        _
      // Predicated region
      $region17: #{forward.3} parent=11 // pred_check
        %p121 = pneg %p77
      $region18: #{forward.3} parent=11 // pred_check_branch
        %123 = sbr.rel (%p121) target = $region20
      $region19: #{forward.3} parent=11 // pred_region
        _
      $region20: #{forward.3} parent=11 // pred_fallthru
        _
    $region12: #{forward.3} parent=5 // pred_fallthru
      _
    %p124 = scmp.lt.s32.totalorder %s9, 2
    // Predicated region
    $region21: #{forward.3} parent=5 // pred_check
      %p125 = pneg %p124
    $region22: #{forward.3} parent=5 // pred_check_branch
      %127 = sbr.rel (%p125) target = $region24
    $region23: #{forward.3} parent=5 // pred_region
      // Predicated region
      $region25: #{forward.3} parent=23 // pred_check
        %p128 = pneg %p29
      $region26: #{forward.3} parent=23 // pred_check_branch
        %130 = sbr.rel (%p128) target = $region28
      $region27: #{forward.3} parent=23 // pred_region
        %p131 = scmp.lt.s32.totalorder %s9, 1
        %s132 = scalar_select %p131, %s9, 1
        %s133 = smul.addr %s132, 16
        %s134 = smul.addr %s133, 8
        %s135 = scalar_lea.vmem %s0, %s134
      $region28: #{forward.3} parent=23 // pred_fallthru
        _
    $region24: #{forward.3} parent=5 // pred_fallthru
      _
    %p136 = scmp.le.s32.totalorder 1, %s9
    %p137 = scmp.lt.s32.totalorder %s9, 3
    %p138 = pnand %p136, %p137
    %p139 = pneg %p138
    // Predicated region
    $region29: #{forward.3} parent=5 // pred_check
      _
    $region30: #{forward.3} parent=5 // pred_check_branch
      %141 = sbr.rel (%p138) target = $region32
    $region31: #{forward.3} parent=5 // pred_region
      %s142 = ssub.s32 %s9, 1
      %p143 = scmp.lt.s32.totalorder %s14, 1
      %s144 = scalar_select %p143, %s14, 1
      %s145 = smul.addr %s144, 16
      %s146 = smul.addr %s145, 8
      %s147 = scalar_lea.vmem %s0, %s146
      %p148 = pneg %p35
      %p149 = pneg %p32
      %p150 = pneg %p56
      %p151 = pneg %p53
      %p152 = pneg %p77
      %p153 = pneg %p74
      %p154 = pneg %p103
      %p155 = pneg %p100
      %p156 = scmp.lt.s32.totalorder %s14, 1
      %s157 = scalar_select %p156, %s14, 1
      %s158 = smul.addr %s157, 19
      %s159 = smul.addr %s158, 8
      %s160 = scalar_lea.vmem %s3, %s159
      %p161 = scmp.lt.s32.totalorder %s14, 1
      %s162 = scalar_select %p161, %s14, 1
      %s163 = smul.addr %s162, 16
      %s164 = smul.addr %s163, 8
      %s165 = scalar_lea.vmem %s0, %s164
      %p166 = scmp.lt.s32.totalorder %s14, 1
      %s167 = scalar_select %p166, %s14, 1
      %s168 = smul.addr %s167, 19
      %s169 = smul.addr %s168, 8
      %s170 = scalar_lea.vmem %s3, %s169
      %vm172 = vcmask 60416
      %173 = vst.msk [vmem:[#allocation2] sm:$0xf] %vm172, 0
      %174 = vst.msk [vmem:[#allocation2 + $0x4] sm:$0xf] %vm172, 0
      %175 = vst.msk [vmem:[#allocation2 + $0x8] sm:$0xf] %vm172, 0
      %176 = vst.msk [vmem:[#allocation2 + $0xc] sm:$0xf] %vm172, 0
      %177 = vst.msk [vmem:[#allocation2 + $0x10] sm:$0xf] %vm172, 0
      %178 = vst.msk [vmem:[#allocation2 + $0x14] sm:$0xf] %vm172, 0
      %179 = vst.msk [vmem:[#allocation2 + $0x18] sm:$0xf] %vm172, 0
      %180 = vst.msk [vmem:[#allocation2 + $0x1c] sm:$0xf] %vm172, 0
      %181 = vst.msk [vmem:[#allocation2 + $0x20] sm:$0xf] %vm172, 0
      %182 = vst.msk [vmem:[#allocation2 + $0x24] sm:$0xf] %vm172, 0
      %183 = vst.msk [vmem:[#allocation2 + $0x28] sm:$0xf] %vm172, 0
      %184 = vst.msk [vmem:[#allocation2 + $0x2c] sm:$0xf] %vm172, 0
      %185 = vst.msk [vmem:[#allocation2 + $0x30] sm:$0xf] %vm172, 0
      %186 = vst.msk [vmem:[#allocation2 + $0x34] sm:$0xf] %vm172, 0
      %187 = vst.msk [vmem:[#allocation2 + $0x38] sm:$0xf] %vm172, 0
      %188 = vst.msk [vmem:[#allocation2 + $0x3c] sm:$0xf] %vm172, 0
      %189 = vst.msk [vmem:[#allocation2 + $0x40] sm:$0xf] %vm172, 0
      %190 = vst.msk [vmem:[#allocation2 + $0x44] sm:$0xf] %vm172, 0
      %191 = vst.msk [vmem:[#allocation2 + $0x48] sm:$0xf] %vm172, 0
      %192 = vst.msk [vmem:[#allocation2 + $0x4c] sm:$0xf] %vm172, 0
      %193 = vst.msk [vmem:[#allocation2 + $0x50] sm:$0xf] %vm172, 0
      %194 = vst.msk [vmem:[#allocation2 + $0x54] sm:$0xf] %vm172, 0
      %195 = vst.msk [vmem:[#allocation2 + $0x58] sm:$0xf] %vm172, 0
      %vm196 = vcmask 59392
      %197 = vst.msk [vmem:[#allocation2 + $0x5c] sm:$0x7] %vm196, 0
      %v198 = vld [vmem:[%s165] sm:$0xff]
      %v199 = vpack.c.bf16 %v198, %v198
      %v201 = vunpack.c.l.b16 %v199
      %v202 = vpack.c.b16 %v201, %v201
      %v204 = vshrl.u32 %v202, 16
      %v206 = vrot.slane %v204, 6
      %v207 = vshll.u32 %v202, 16
      %v209 = vrot.slane %v207, 7
      %v210 = vor.u32 %v206, %v209
      %v211 = vrot.slane %v210, 4
      %vm214 = vcmask 27649
      %vm215 = vsmask.f32 7942
      %vm216 = vmand %vm214, %vm215
      %v217 = vld [vmem:[#allocation2 + $0x4] sm:$0xe]
      %v218 = vsel %vm216, %v210, %v217
      %219 = vst [vmem:[#allocation2 + $0x4] sm:$0xe] %v218
      %vm220 = vcmask 25600
      %vm221 = vsmask.f32 1280
      %vm222 = vmand %vm220, %vm221
      %v223 = vld [vmem:[#allocation2 + $0x8] sm:$0x3]
      %v224 = vsel %vm222, %v211, %v223
      %225 = vst [vmem:[#allocation2 + $0x8] sm:$0x3] %v224
      %vm226 = vcmask 60449
      %vm227 = vmand %vm226, %vm215
      %v228 = vld [vmem:[#allocation2 + $0x4] sm:$0xe]
      %v229 = vsel %vm227, %v210, %v228
      %230 = vst [vmem:[#allocation2 + $0x4] sm:$0xe] %v229
      %vm231 = vcmask 58400
      %vm232 = vmand %vm231, %vm221
      %v233 = vld [vmem:[#allocation2 + $0x8] sm:$0x3]
      %v234 = vsel %vm232, %v211, %v233
      %235 = vst [vmem:[#allocation2 + $0x8] sm:$0x3] %v234
      %s236 = scalar_lea.vmem %s165, 8
      %v237 = vld [vmem:[%s236] sm:$0xff]
      %v238 = vpack.c.bf16 %v237, %v237
      %v240 = vunpack.c.l.b16 %v238
      %v241 = vpack.c.b16 %v240, %v240
      %v243 = vshrl.u32 %v241, 16
      %v245 = vrot.slane %v243, 5
      %v246 = vshll.u32 %v241, 16
      %v248 = vrot.slane %v246, 6
      %v249 = vor.u32 %v245, %v248
      %v250 = vrot.slane %v249, 4
      %vm253 = vcmask 27650
      %vm254 = vsmask.f32 7946
      %vm255 = vmand %vm253, %vm254
      %v256 = vld [vmem:[#allocation2 + $0x8] sm:$0xc]
      %v257 = vsel %vm255, %v249, %v256
      %258 = vst [vmem:[#allocation2 + $0x8] sm:$0xc] %v257
      %vm259 = vcmask 26624
      %vm260 = vsmask.f32 2304
      %vm261 = vmand %vm259, %vm260
      %v262 = vld [vmem:[#allocation2 + $0xc] sm:$0x7]
      %v263 = vsel %vm261, %v250, %v262
      %264 = vst [vmem:[#allocation2 + $0xc] sm:$0x7] %v263
      %vm265 = vcmask 60450
      %vm266 = vmand %vm265, %vm254
      %v267 = vld [vmem:[#allocation2 + $0x8] sm:$0xc]
      %v268 = vsel %vm266, %v249, %v267
      %269 = vst [vmem:[#allocation2 + $0x8] sm:$0xc] %v268
      %vm270 = vcmask 59424
      %vm271 = vmand %vm270, %vm260
      %v272 = vld [vmem:[#allocation2 + $0xc] sm:$0x7]
      %v273 = vsel %vm271, %v250, %v272
      %274 = vst [vmem:[#allocation2 + $0xc] sm:$0x7] %v273
      %s275 = scalar_lea.vmem %s165, 16
      %v276 = vld [vmem:[%s275] sm:$0xff]
      %v277 = vpack.c.bf16 %v276, %v276
      %v279 = vunpack.c.l.b16 %v277
      %v280 = vpack.c.b16 %v279, %v279
      %v282 = vshll.u32 %v280, 16
      %v284 = vrot.slane %v282, 5
      %v285 = vshrl.u32 %v280, 16
      %v287 = vrot.slane %v285, 4
      %v288 = vor.u32 %v287, %v284
      %v289 = vrot.slane %v288, 4
      %vm292 = vcmask 27651
      %vm293 = vsmask.f32 7950
      %vm294 = vmand %vm292, %vm293
      %v295 = vld [vmem:[#allocation2 + $0xc] sm:$0x8]
      %v296 = vsel %vm294, %v284, %v295
      %297 = vst [vmem:[#allocation2 + $0xc] sm:$0x8] %v296
      %vm298 = vcmask 27648
      %vm299 = vsmask.f32 3328
      %vm300 = vmand %vm298, %vm299
      %v301 = vld [vmem:[#allocation2 + $0x10] sm:$0xf]
      %v302 = vsel %vm300, %v289, %v301
      %303 = vst [vmem:[#allocation2 + $0x10] sm:$0xf] %v302
      %vm304 = vcmask 60451
      %vm305 = vmand %vm304, %vm293
      %v306 = vld [vmem:[#allocation2 + $0xc] sm:$0x8]
      %v307 = vsel %vm305, %v284, %v306
      %308 = vst [vmem:[#allocation2 + $0xc] sm:$0x8] %v307
      %vm309 = vcmask 60448
      %vm310 = vmand %vm309, %vm299
      %v311 = vld [vmem:[#allocation2 + $0x10] sm:$0xf]
      %v312 = vsel %vm310, %v289, %v311
      %313 = vst [vmem:[#allocation2 + $0x10] sm:$0xf] %v312
      %s314 = scalar_lea.vmem %s165, 24
      %v315 = vld [vmem:[%s314] sm:$0xff]
      %v316 = vpack.c.bf16 %v315, %v315
      %v318 = vunpack.c.l.b16 %v316
      %v319 = vpack.c.b16 %v318, %v318
      %v321 = vshrl.u32 %v319, 16
      %v323 = vrot.slane %v321, 7
      %v324 = vshll.u32 %v319, 16
      %v326 = vor.u32 %v323, %v324
      %v327 = vrot.slane %v323, 4
      %vm330 = vsmask.f32 7938
      %vm331 = vmand %vm298, %vm330
      %v332 = vld [vmem:[#allocation2 + $0x14] sm:$0xf]
      %v333 = vsel %vm331, %v326, %v332
      %334 = vst [vmem:[#allocation2 + $0x14] sm:$0xf] %v333
      %vm335 = vcmask 24576
      %vm336 = vsmask.f32 256
      %vm337 = vmand %vm335, %vm336
      %v338 = vld [vmem:[#allocation2 + $0x18] sm:$0x1]
      %v339 = vsel %vm337, %v327, %v338
      %340 = vst [vmem:[#allocation2 + $0x18] sm:$0x1] %v339
      %vm341 = vmand %vm309, %vm330
      %v342 = vld [vmem:[#allocation2 + $0x14] sm:$0xf]
      %v343 = vsel %vm341, %v326, %v342
      %344 = vst [vmem:[#allocation2 + $0x14] sm:$0xf] %v343
      %vm345 = vcmask 57376
      %vm346 = vmand %vm345, %vm336
      %v347 = vld [vmem:[#allocation2 + $0x18] sm:$0x1]
      %v348 = vsel %vm346, %v327, %v347
      %349 = vst [vmem:[#allocation2 + $0x18] sm:$0x1] %v348
      %s350 = scalar_lea.vmem %s165, 32
      %v351 = vld [vmem:[%s350] sm:$0xff]
      %v352 = vpack.c.bf16 %v351, %v351
      %v354 = vunpack.c.l.b16 %v352
      %v355 = vpack.c.b16 %v354, %v354
      %v357 = vshrl.u32 %v355, 16
      %v359 = vrot.slane %v357, 6
      %v360 = vshll.u32 %v355, 16
      %v362 = vrot.slane %v360, 7
      %v363 = vor.u32 %v359, %v362
      %v364 = vrot.slane %v363, 4
      %v367 = vld [vmem:[#allocation2 + $0x18] sm:$0xe]
      %v368 = vsel %vm216, %v363, %v367
      %369 = vst [vmem:[#allocation2 + $0x18] sm:$0xe] %v368
      %v370 = vld [vmem:[#allocation2 + $0x1c] sm:$0x3]
      %v371 = vsel %vm222, %v364, %v370
      %372 = vst [vmem:[#allocation2 + $0x1c] sm:$0x3] %v371
      %v373 = vld [vmem:[#allocation2 + $0x18] sm:$0xe]
      %v374 = vsel %vm227, %v363, %v373
      %375 = vst [vmem:[#allocation2 + $0x18] sm:$0xe] %v374
      %v376 = vld [vmem:[#allocation2 + $0x1c] sm:$0x3]
      %v377 = vsel %vm232, %v364, %v376
      %378 = vst [vmem:[#allocation2 + $0x1c] sm:$0x3] %v377
      %s379 = scalar_lea.vmem %s165, 40
      %v380 = vld [vmem:[%s379] sm:$0xff]
      %v381 = vpack.c.bf16 %v380, %v380
      %v383 = vunpack.c.l.b16 %v381
      %v384 = vpack.c.b16 %v383, %v383
      %v386 = vshrl.u32 %v384, 16
      %v388 = vrot.slane %v386, 5
      %v389 = vshll.u32 %v384, 16
      %v391 = vrot.slane %v389, 6
      %v392 = vor.u32 %v388, %v391
      %v393 = vrot.slane %v392, 4
      %v396 = vld [vmem:[#allocation2 + $0x1c] sm:$0xc]
      %v397 = vsel %vm255, %v392, %v396
      %398 = vst [vmem:[#allocation2 + $0x1c] sm:$0xc] %v397
      %v399 = vld [vmem:[#allocation2 + $0x20] sm:$0x7]
      %v400 = vsel %vm261, %v393, %v399
      %401 = vst [vmem:[#allocation2 + $0x20] sm:$0x7] %v400
      %v402 = vld [vmem:[#allocation2 + $0x1c] sm:$0xc]
      %v403 = vsel %vm266, %v392, %v402
      %404 = vst [vmem:[#allocation2 + $0x1c] sm:$0xc] %v403
      %v405 = vld [vmem:[#allocation2 + $0x20] sm:$0x7]
      %v406 = vsel %vm271, %v393, %v405
      %407 = vst [vmem:[#allocation2 + $0x20] sm:$0x7] %v406
      %s408 = scalar_lea.vmem %s165, 48
      %v409 = vld [vmem:[%s408] sm:$0xff]
      %v410 = vpack.c.bf16 %v409, %v409
      %v412 = vunpack.c.l.b16 %v410
      %v413 = vpack.c.b16 %v412, %v412
      %v415 = vshll.u32 %v413, 16
      %v417 = vrot.slane %v415, 5
      %v418 = vshrl.u32 %v413, 16
      %v420 = vrot.slane %v418, 4
      %v421 = vor.u32 %v420, %v417
      %v422 = vrot.slane %v421, 4
      %v425 = vld [vmem:[#allocation2 + $0x20] sm:$0x8]
      %v426 = vsel %vm294, %v417, %v425
      %427 = vst [vmem:[#allocation2 + $0x20] sm:$0x8] %v426
      %v428 = vld [vmem:[#allocation2 + $0x24] sm:$0xf]
      %v429 = vsel %vm300, %v422, %v428
      %430 = vst [vmem:[#allocation2 + $0x24] sm:$0xf] %v429
      %v431 = vld [vmem:[#allocation2 + $0x20] sm:$0x8]
      %v432 = vsel %vm305, %v417, %v431
      %433 = vst [vmem:[#allocation2 + $0x20] sm:$0x8] %v432
      %v434 = vld [vmem:[#allocation2 + $0x24] sm:$0xf]
      %v435 = vsel %vm310, %v422, %v434
      %436 = vst [vmem:[#allocation2 + $0x24] sm:$0xf] %v435
      %s437 = scalar_lea.vmem %s165, 56
      %v438 = vld [vmem:[%s437] sm:$0xff]
      %v439 = vpack.c.bf16 %v438, %v438
      %v441 = vunpack.c.l.b16 %v439
      %v442 = vpack.c.b16 %v441, %v441
      %v444 = vshrl.u32 %v442, 16
      %v446 = vrot.slane %v444, 7
      %v447 = vshll.u32 %v442, 16
      %v449 = vor.u32 %v446, %v447
      %v450 = vrot.slane %v446, 4
      %v453 = vld [vmem:[#allocation2 + $0x28] sm:$0xf]
      %v454 = vsel %vm331, %v449, %v453
      %455 = vst [vmem:[#allocation2 + $0x28] sm:$0xf] %v454
      %v456 = vld [vmem:[#allocation2 + $0x2c] sm:$0x1]
      %v457 = vsel %vm337, %v450, %v456
      %458 = vst [vmem:[#allocation2 + $0x2c] sm:$0x1] %v457
      %v459 = vld [vmem:[#allocation2 + $0x28] sm:$0xf]
      %v460 = vsel %vm341, %v449, %v459
      %461 = vst [vmem:[#allocation2 + $0x28] sm:$0xf] %v460
      %v462 = vld [vmem:[#allocation2 + $0x2c] sm:$0x1]
      %v463 = vsel %vm346, %v450, %v462
      %464 = vst [vmem:[#allocation2 + $0x2c] sm:$0x1] %v463
      %s465 = scalar_lea.vmem %s165, 64
      %v466 = vld [vmem:[%s465] sm:$0xff]
      %v467 = vpack.c.bf16 %v466, %v466
      %v469 = vunpack.c.l.b16 %v467
      %v470 = vpack.c.b16 %v469, %v469
      %v472 = vshrl.u32 %v470, 16
      %v474 = vrot.slane %v472, 6
      %v475 = vshll.u32 %v470, 16
      %v477 = vrot.slane %v475, 7
      %v478 = vor.u32 %v474, %v477
      %v479 = vrot.slane %v478, 4
      %v482 = vld [vmem:[#allocation2 + $0x2c] sm:$0xe]
      %v483 = vsel %vm216, %v478, %v482
      %484 = vst [vmem:[#allocation2 + $0x2c] sm:$0xe] %v483
      %v485 = vld [vmem:[#allocation2 + $0x30] sm:$0x3]
      %v486 = vsel %vm222, %v479, %v485
      %487 = vst [vmem:[#allocation2 + $0x30] sm:$0x3] %v486
      %v488 = vld [vmem:[#allocation2 + $0x2c] sm:$0xe]
      %v489 = vsel %vm227, %v478, %v488
      %490 = vst [vmem:[#allocation2 + $0x2c] sm:$0xe] %v489
      %v491 = vld [vmem:[#allocation2 + $0x30] sm:$0x3]
      %v492 = vsel %vm232, %v479, %v491
      %493 = vst [vmem:[#allocation2 + $0x30] sm:$0x3] %v492
      %s494 = scalar_lea.vmem %s165, 72
      %v495 = vld [vmem:[%s494] sm:$0xff]
      %v496 = vpack.c.bf16 %v495, %v495
      %v498 = vunpack.c.l.b16 %v496
      %v499 = vpack.c.b16 %v498, %v498
      %v501 = vshrl.u32 %v499, 16
      %v503 = vrot.slane %v501, 5
      %v504 = vshll.u32 %v499, 16
      %v506 = vrot.slane %v504, 6
      %v507 = vor.u32 %v503, %v506
      %v508 = vrot.slane %v507, 4
      %v511 = vld [vmem:[#allocation2 + $0x30] sm:$0xc]
      %v512 = vsel %vm255, %v507, %v511
      %513 = vst [vmem:[#allocation2 + $0x30] sm:$0xc] %v512
      %v514 = vld [vmem:[#allocation2 + $0x34] sm:$0x7]
      %v515 = vsel %vm261, %v508, %v514
      %516 = vst [vmem:[#allocation2 + $0x34] sm:$0x7] %v515
      %v517 = vld [vmem:[#allocation2 + $0x30] sm:$0xc]
      %v518 = vsel %vm266, %v507, %v517
      %519 = vst [vmem:[#allocation2 + $0x30] sm:$0xc] %v518
      %v520 = vld [vmem:[#allocation2 + $0x34] sm:$0x7]
      %v521 = vsel %vm271, %v508, %v520
      %522 = vst [vmem:[#allocation2 + $0x34] sm:$0x7] %v521
      %s523 = scalar_lea.vmem %s165, 80
      %v524 = vld [vmem:[%s523] sm:$0xff]
      %v525 = vpack.c.bf16 %v524, %v524
      %v527 = vunpack.c.l.b16 %v525
      %v528 = vpack.c.b16 %v527, %v527
      %v530 = vshll.u32 %v528, 16
      %v532 = vrot.slane %v530, 5
      %v533 = vshrl.u32 %v528, 16
      %v535 = vrot.slane %v533, 4
      %v536 = vor.u32 %v535, %v532
      %v537 = vrot.slane %v536, 4
      %v540 = vld [vmem:[#allocation2 + $0x34] sm:$0x8]
      %v541 = vsel %vm294, %v532, %v540
      %542 = vst [vmem:[#allocation2 + $0x34] sm:$0x8] %v541
      %v543 = vld [vmem:[#allocation2 + $0x38] sm:$0xf]
      %v544 = vsel %vm300, %v537, %v543
      %545 = vst [vmem:[#allocation2 + $0x38] sm:$0xf] %v544
      %v546 = vld [vmem:[#allocation2 + $0x34] sm:$0x8]
      %v547 = vsel %vm305, %v532, %v546
      %548 = vst [vmem:[#allocation2 + $0x34] sm:$0x8] %v547
      %v549 = vld [vmem:[#allocation2 + $0x38] sm:$0xf]
      %v550 = vsel %vm310, %v537, %v549
      %551 = vst [vmem:[#allocation2 + $0x38] sm:$0xf] %v550
      %s552 = scalar_lea.vmem %s165, 88
      %v553 = vld [vmem:[%s552] sm:$0xff]
      %v554 = vpack.c.bf16 %v553, %v553
      %v556 = vunpack.c.l.b16 %v554
      %v557 = vpack.c.b16 %v556, %v556
      %v559 = vshrl.u32 %v557, 16
      %v561 = vrot.slane %v559, 7
      %v562 = vshll.u32 %v557, 16
      %v564 = vor.u32 %v561, %v562
      %v565 = vrot.slane %v561, 4
      %v568 = vld [vmem:[#allocation2 + $0x3c] sm:$0xf]
      %v569 = vsel %vm331, %v564, %v568
      %570 = vst [vmem:[#allocation2 + $0x3c] sm:$0xf] %v569
      %v571 = vld [vmem:[#allocation2 + $0x40] sm:$0x1]
      %v572 = vsel %vm337, %v565, %v571
      %573 = vst [vmem:[#allocation2 + $0x40] sm:$0x1] %v572
      %v574 = vld [vmem:[#allocation2 + $0x3c] sm:$0xf]
      %v575 = vsel %vm341, %v564, %v574
      %576 = vst [vmem:[#allocation2 + $0x3c] sm:$0xf] %v575
      %v577 = vld [vmem:[#allocation2 + $0x40] sm:$0x1]
      %v578 = vsel %vm346, %v565, %v577
      %579 = vst [vmem:[#allocation2 + $0x40] sm:$0x1] %v578
      %s580 = scalar_lea.vmem %s165, 96
      %v581 = vld [vmem:[%s580] sm:$0xff]
      %v582 = vpack.c.bf16 %v581, %v581
      %v584 = vunpack.c.l.b16 %v582
      %v585 = vpack.c.b16 %v584, %v584
      %v587 = vshrl.u32 %v585, 16
      %v589 = vrot.slane %v587, 6
      %v590 = vshll.u32 %v585, 16
      %v592 = vrot.slane %v590, 7
      %v593 = vor.u32 %v589, %v592
      %v594 = vrot.slane %v593, 4
      %v597 = vld [vmem:[#allocation2 + $0x40] sm:$0xe]
      %v598 = vsel %vm216, %v593, %v597
      %599 = vst [vmem:[#allocation2 + $0x40] sm:$0xe] %v598
      %v600 = vld [vmem:[#allocation2 + $0x44] sm:$0x3]
      %v601 = vsel %vm222, %v594, %v600
      %602 = vst [vmem:[#allocation2 + $0x44] sm:$0x3] %v601
      %v603 = vld [vmem:[#allocation2 + $0x40] sm:$0xe]
      %v604 = vsel %vm227, %v593, %v603
      %605 = vst [vmem:[#allocation2 + $0x40] sm:$0xe] %v604
      %v606 = vld [vmem:[#allocation2 + $0x44] sm:$0x3]
      %v607 = vsel %vm232, %v594, %v606
      %608 = vst [vmem:[#allocation2 + $0x44] sm:$0x3] %v607
      %s609 = scalar_lea.vmem %s165, 104
      %v610 = vld [vmem:[%s609] sm:$0xff]
      %v611 = vpack.c.bf16 %v610, %v610
      %v613 = vunpack.c.l.b16 %v611
      %v614 = vpack.c.b16 %v613, %v613
      %v616 = vshrl.u32 %v614, 16
      %v618 = vrot.slane %v616, 5
      %v619 = vshll.u32 %v614, 16
      %v621 = vrot.slane %v619, 6
      %v622 = vor.u32 %v618, %v621
      %v623 = vrot.slane %v622, 4
      %v626 = vld [vmem:[#allocation2 + $0x44] sm:$0xc]
      %v627 = vsel %vm255, %v622, %v626
      %628 = vst [vmem:[#allocation2 + $0x44] sm:$0xc] %v627
      %v629 = vld [vmem:[#allocation2 + $0x48] sm:$0x7]
      %v630 = vsel %vm261, %v623, %v629
      %631 = vst [vmem:[#allocation2 + $0x48] sm:$0x7] %v630
      %v632 = vld [vmem:[#allocation2 + $0x44] sm:$0xc]
      %v633 = vsel %vm266, %v622, %v632
      %634 = vst [vmem:[#allocation2 + $0x44] sm:$0xc] %v633
      %v635 = vld [vmem:[#allocation2 + $0x48] sm:$0x7]
      %v636 = vsel %vm271, %v623, %v635
      %637 = vst [vmem:[#allocation2 + $0x48] sm:$0x7] %v636
      %s638 = scalar_lea.vmem %s165, 112
      %v639 = vld [vmem:[%s638] sm:$0xff]
      %v640 = vpack.c.bf16 %v639, %v639
      %v642 = vunpack.c.l.b16 %v640
      %v643 = vpack.c.b16 %v642, %v642
      %v645 = vshll.u32 %v643, 16
      %v647 = vrot.slane %v645, 5
      %v648 = vshrl.u32 %v643, 16
      %v650 = vrot.slane %v648, 4
      %v651 = vor.u32 %v650, %v647
      %v652 = vrot.slane %v651, 4
      %v655 = vld [vmem:[#allocation2 + $0x48] sm:$0x8]
      %v656 = vsel %vm294, %v647, %v655
      %657 = vst [vmem:[#allocation2 + $0x48] sm:$0x8] %v656
      %v658 = vld [vmem:[#allocation2 + $0x4c] sm:$0xf]
      %v659 = vsel %vm300, %v652, %v658
      %660 = vst [vmem:[#allocation2 + $0x4c] sm:$0xf] %v659
      %v661 = vld [vmem:[#allocation2 + $0x48] sm:$0x8]
      %v662 = vsel %vm305, %v647, %v661
      %663 = vst [vmem:[#allocation2 + $0x48] sm:$0x8] %v662
      %v664 = vld [vmem:[#allocation2 + $0x4c] sm:$0xf]
      %v665 = vsel %vm310, %v652, %v664
      %666 = vst [vmem:[#allocation2 + $0x4c] sm:$0xf] %v665
      %s667 = scalar_lea.vmem %s165, 120
      %v668 = vld [vmem:[%s667] sm:$0xff]
      %v669 = vpack.c.bf16 %v668, %v668
      %v671 = vunpack.c.l.b16 %v669
      %v672 = vpack.c.b16 %v671, %v671
      %v674 = vshrl.u32 %v672, 16
      %v676 = vrot.slane %v674, 7
      %v677 = vshll.u32 %v672, 16
      %v679 = vor.u32 %v676, %v677
      %v680 = vrot.slane %v676, 4
      %v683 = vld [vmem:[#allocation2 + $0x50] sm:$0xf]
      %v684 = vsel %vm331, %v679, %v683
      %685 = vst [vmem:[#allocation2 + $0x50] sm:$0xf] %v684
      %v686 = vld [vmem:[#allocation2 + $0x54] sm:$0x1]
      %v687 = vsel %vm337, %v680, %v686
      %688 = vst [vmem:[#allocation2 + $0x54] sm:$0x1] %v687
      %v689 = vld [vmem:[#allocation2 + $0x50] sm:$0xf]
      %v690 = vsel %vm341, %v679, %v689
      %691 = vst [vmem:[#allocation2 + $0x50] sm:$0xf] %v690
      %v692 = vld [vmem:[#allocation2 + $0x54] sm:$0x1]
      %v693 = vsel %vm346, %v680, %v692
      %694 = vst [vmem:[#allocation2 + $0x54] sm:$0x1] %v693
      %v695 = vld [vmem:[#allocation2] sm:$0xf]
      %v696 = vld [vmem:[#allocation2 + $0x4] sm:$0xf]
      %v697 = vld [vmem:[#allocation2 + $0x8] sm:$0xf]
      %v698 = vld [vmem:[#allocation2 + $0xc] sm:$0xf]
      %v699 = vld [vmem:[#allocation2 + $0x10] sm:$0xf]
      %v700 = vld [vmem:[#allocation2 + $0x14] sm:$0xf]
      %v701 = vld [vmem:[#allocation2 + $0x18] sm:$0xf]
      %v702 = vld [vmem:[#allocation2 + $0x1c] sm:$0xf]
      %v703 = vld [vmem:[#allocation2 + $0x20] sm:$0xf]
      %v704 = vld [vmem:[#allocation2 + $0x24] sm:$0xf]
      %v705 = vld [vmem:[#allocation2 + $0x28] sm:$0xf]
      %v706 = vld [vmem:[#allocation2 + $0x2c] sm:$0xf]
      %v707 = vld [vmem:[#allocation2 + $0x30] sm:$0xf]
      %v708 = vld [vmem:[#allocation2 + $0x34] sm:$0xf]
      %v709 = vld [vmem:[#allocation2 + $0x38] sm:$0xf]
      %v710 = vld [vmem:[#allocation2 + $0x3c] sm:$0xf]
      %v711 = vld [vmem:[#allocation2 + $0x40] sm:$0xf]
      %v712 = vld [vmem:[#allocation2 + $0x44] sm:$0xf]
      %v713 = vld [vmem:[#allocation2 + $0x48] sm:$0x7]
      %v714 = vld [vmem:[#allocation2 + $0x48] sm:$0xf]
      %v715 = vld [vmem:[#allocation2] sm:$0xe]
      %v716 = vld [vmem:[#allocation2 + $0x4] sm:$0xe]
      %v717 = vld [vmem:[#allocation2 + $0x4c] sm:$0xf]
      %v718 = vld [vmem:[#allocation2 + $0x50] sm:$0x1]
      %v719 = vld [vmem:[#allocation2 + $0x4] sm:$0xc]
      %v720 = vld [vmem:[#allocation2 + $0x8] sm:$0xc]
      %v721 = vld [vmem:[#allocation2 + $0x50] sm:$0xf]
      %v722 = vld [vmem:[#allocation2 + $0x54] sm:$0x1]
      %v723 = vld [vmem:[#allocation2 + $0x54] sm:$0x3]
      %v724 = vld [vmem:[#allocation2 + $0x8] sm:$0x8]
      %v725 = vld [vmem:[#allocation2 + $0xc] sm:$0x8]
      %v726 = vld [vmem:[#allocation2 + $0x54] sm:$0xf]
      %v727 = vld [vmem:[#allocation2 + $0x58] sm:$0x3]
      %v728 = vld [vmem:[#allocation2 + $0x58] sm:$0x7]
      %v748 = vunpack.c.l.b16 %v695
      %v749 = vunpack.c.l.b16 %v696
      %v750 = vunpack.c.l.b16 %v697
      %v751 = vunpack.c.l.b16 %v698
      %v752 = vunpack.c.l.b16 %v699
      %v753 = vunpack.c.l.b16 %v700
      %v754 = vunpack.c.l.b16 %v701
      %v755 = vunpack.c.l.b16 %v702
      %v756 = vunpack.c.l.b16 %v703
      %v757 = vunpack.c.l.b16 %v704
      %v758 = vunpack.c.l.b16 %v705
      %v759 = vunpack.c.l.b16 %v706
      %v760 = vunpack.c.l.b16 %v707
      %v761 = vunpack.c.l.b16 %v708
      %v762 = vunpack.c.l.b16 %v709
      %v763 = vunpack.c.l.b16 %v710
      %v764 = vunpack.c.l.b16 %v711
      %v765 = vunpack.c.l.b16 %v712
      %v766 = vunpack.c.l.b16 %v713
      %v767 = vpack.c.b16 %v749, %v748
      %v768 = vpack.c.b16 %v751, %v750
      %v769 = vpack.c.b16 %v753, %v752
      %v770 = vpack.c.b16 %v755, %v754
      %v771 = vpack.c.b16 %v757, %v756
      %v772 = vpack.c.b16 %v759, %v758
      %v773 = vpack.c.b16 %v761, %v760
      %v774 = vpack.c.b16 %v763, %v762
      %v775 = vpack.c.b16 %v765, %v764
      %v776 = vpack.c.b16 %v766, %v766
      %777 = vrot.lane.b32.xlu0 %v767, 124
      %v778 = vpop.permute.xlu0 %777
      %779 = vrot.lane.b32.xlu0 %v768, 124
      %v780 = vpop.permute.xlu0 %779
      %781 = vrot.lane.b32.xlu0 %v769, 124
      %v782 = vpop.permute.xlu0 %781
      %783 = vrot.lane.b32.xlu0 %v770, 124
      %v784 = vpop.permute.xlu0 %783
      %785 = vrot.lane.b32.xlu0 %v771, 124
      %v786 = vpop.permute.xlu0 %785
      %787 = vrot.lane.b32.xlu0 %v772, 124
      %v788 = vpop.permute.xlu0 %787
      %789 = vrot.lane.b32.xlu0 %v773, 124
      %v790 = vpop.permute.xlu0 %789
      %791 = vrot.lane.b32.xlu0 %v774, 124
      %v792 = vpop.permute.xlu0 %791
      %793 = vrot.lane.b32.xlu0 %v775, 124
      %v794 = vpop.permute.xlu0 %793
      %795 = vrot.lane.b32.xlu0 %v776, 124
      %v796 = vpop.permute.xlu0 %795
      %v798 = vunpack.c.l.b16 %v714
      %v799 = vpack.c.b16 %v798, %v798
      %vm800 = vsmask.f32 7424
      %v802 = vshrl.u32 %v767, 16
      %v804 = vshll.u32 %v767, 16
      %v806 = vrot.slane %v804, 1
      %v807 = vor.u32 %v802, %v806
      %v809 = vshll.u32 %v768, 16
      %v811 = vrot.slane %v809, 1
      %v812 = vsel %vm800, %v807, %v811
      %v813 = vshrl.u32 %v768, 16
      %v815 = vor.u32 %v813, %v811
      %v817 = vshll.u32 %v769, 16
      %v819 = vrot.slane %v817, 1
      %v820 = vsel %vm800, %v815, %v819
      %v821 = vshrl.u32 %v769, 16
      %v823 = vor.u32 %v821, %v819
      %v825 = vshll.u32 %v770, 16
      %v827 = vrot.slane %v825, 1
      %v828 = vsel %vm800, %v823, %v827
      %v829 = vshrl.u32 %v770, 16
      %v831 = vor.u32 %v829, %v827
      %v833 = vshll.u32 %v771, 16
      %v835 = vrot.slane %v833, 1
      %v836 = vsel %vm800, %v831, %v835
      %v837 = vshrl.u32 %v771, 16
      %v839 = vor.u32 %v837, %v835
      %v841 = vshll.u32 %v772, 16
      %v843 = vrot.slane %v841, 1
      %v844 = vsel %vm800, %v839, %v843
      %v845 = vshrl.u32 %v772, 16
      %v847 = vor.u32 %v845, %v843
      %v849 = vshll.u32 %v773, 16
      %v851 = vrot.slane %v849, 1
      %v852 = vsel %vm800, %v847, %v851
      %v853 = vshrl.u32 %v773, 16
      %v855 = vor.u32 %v853, %v851
      %v857 = vshll.u32 %v774, 16
      %v859 = vrot.slane %v857, 1
      %v860 = vsel %vm800, %v855, %v859
      %v861 = vshrl.u32 %v774, 16
      %v863 = vor.u32 %v861, %v859
      %v865 = vshll.u32 %v775, 16
      %v867 = vrot.slane %v865, 1
      %v868 = vsel %vm800, %v863, %v867
      %v869 = vshrl.u32 %v775, 16
      %v871 = vor.u32 %v869, %v867
      %v873 = vshll.u32 %v799, 16
      %v875 = vrot.slane %v873, 1
      %v876 = vsel %vm800, %v871, %v875
      %v877 = vshrl.u32 %v799, 16
      %v879 = vor.u32 %v877, %v875
      %880 = vrot.lane.b32.xlu0 %v812, 4
      %v881 = vpop.permute.xlu0 %880
      %882 = vrot.lane.b32.xlu0 %v820, 4
      %v883 = vpop.permute.xlu0 %882
      %884 = vrot.lane.b32.xlu0 %v828, 4
      %v885 = vpop.permute.xlu0 %884
      %886 = vrot.lane.b32.xlu0 %v836, 4
      %v887 = vpop.permute.xlu0 %886
      %888 = vrot.lane.b32.xlu0 %v844, 4
      %v889 = vpop.permute.xlu0 %888
      %890 = vrot.lane.b32.xlu0 %v852, 4
      %v891 = vpop.permute.xlu0 %890
      %892 = vrot.lane.b32.xlu0 %v860, 4
      %v893 = vpop.permute.xlu0 %892
      %894 = vrot.lane.b32.xlu0 %v868, 4
      %v895 = vpop.permute.xlu0 %894
      %896 = vrot.lane.b32.xlu0 %v876, 4
      %v897 = vpop.permute.xlu0 %896
      %898 = vrot.lane.b32.xlu0 %v879, 4
      %v899 = vpop.permute.xlu0 %898
      %v901 = vunpack.c.l.b16 %v715
      %v902 = vpack.c.b16 %v749, %v901
      %vm903 = vcmask 1046528
      %v904 = vrot.slane %v902, 1
      %v905 = vrot.slane %v768, 1
      %v906 = vsel %vm903, %v904, %v905
      %v907 = vrot.slane %v769, 1
      %v908 = vsel %vm903, %v905, %v907
      %v909 = vrot.slane %v770, 1
      %v910 = vsel %vm903, %v907, %v909
      %v911 = vrot.slane %v771, 1
      %v912 = vsel %vm903, %v909, %v911
      %v913 = vrot.slane %v772, 1
      %v914 = vsel %vm903, %v911, %v913
      %v915 = vrot.slane %v773, 1
      %v916 = vsel %vm903, %v913, %v915
      %v917 = vrot.slane %v774, 1
      %v918 = vsel %vm903, %v915, %v917
      %v919 = vrot.slane %v775, 1
      %v920 = vsel %vm903, %v917, %v919
      %v921 = vrot.slane %v799, 1
      %v922 = vsel %vm903, %v919, %v921
      %923 = vrot.lane.b32.xlu0 %v906, 12
      %v924 = vpop.permute.xlu0 %923
      %925 = vrot.lane.b32.xlu0 %v908, 12
      %v926 = vpop.permute.xlu0 %925
      %927 = vrot.lane.b32.xlu0 %v910, 12
      %v928 = vpop.permute.xlu0 %927
      %929 = vrot.lane.b32.xlu0 %v912, 12
      %v930 = vpop.permute.xlu0 %929
      %931 = vrot.lane.b32.xlu0 %v914, 12
      %v932 = vpop.permute.xlu0 %931
      %933 = vrot.lane.b32.xlu0 %v916, 12
      %v934 = vpop.permute.xlu0 %933
      %935 = vrot.lane.b32.xlu0 %v918, 12
      %v936 = vpop.permute.xlu0 %935
      %937 = vrot.lane.b32.xlu0 %v920, 12
      %v938 = vpop.permute.xlu0 %937
      %939 = vrot.lane.b32.xlu0 %v922, 12
      %v940 = vpop.permute.xlu0 %939
      %941 = vrot.lane.b32.xlu0 %v921, 12
      %v942 = vpop.permute.xlu0 %941
      %v945 = vunpack.c.l.b16 %v716
      %v946 = vunpack.c.l.b16 %v717
      %v947 = vpack.c.b16 %v750, %v945
      %v948 = vpack.c.b16 %v752, %v751
      %v949 = vpack.c.b16 %v754, %v753
      %v950 = vpack.c.b16 %v756, %v755
      %v951 = vpack.c.b16 %v758, %v757
      %v952 = vpack.c.b16 %v760, %v759
      %v953 = vpack.c.b16 %v762, %v761
      %v954 = vpack.c.b16 %v764, %v763
      %v955 = vpack.c.b16 %v798, %v765
      %v956 = vpack.c.b16 %v946, %v946
      %v957 = vrot.slane %v947, 1
      %v958 = vrot.slane %v948, 1
      %v959 = vsel %vm903, %v957, %v958
      %v960 = vrot.slane %v949, 1
      %v961 = vsel %vm903, %v958, %v960
      %v962 = vrot.slane %v950, 1
      %v963 = vsel %vm903, %v960, %v962
      %v964 = vrot.slane %v951, 1
      %v965 = vsel %vm903, %v962, %v964
      %v966 = vrot.slane %v952, 1
      %v967 = vsel %vm903, %v964, %v966
      %v968 = vrot.slane %v953, 1
      %v969 = vsel %vm903, %v966, %v968
      %v970 = vrot.slane %v954, 1
      %v971 = vsel %vm903, %v968, %v970
      %v972 = vrot.slane %v955, 1
      %v973 = vsel %vm903, %v970, %v972
      %v974 = vrot.slane %v956, 1
      %v975 = vsel %vm903, %v972, %v974
      %976 = vrot.lane.b32.xlu0 %v959, 12
      %v977 = vpop.permute.xlu0 %976
      %978 = vrot.lane.b32.xlu0 %v961, 12
      %v979 = vpop.permute.xlu0 %978
      %980 = vrot.lane.b32.xlu0 %v963, 12
      %v981 = vpop.permute.xlu0 %980
      %982 = vrot.lane.b32.xlu0 %v965, 12
      %v983 = vpop.permute.xlu0 %982
      %984 = vrot.lane.b32.xlu0 %v967, 12
      %v985 = vpop.permute.xlu0 %984
      %986 = vrot.lane.b32.xlu0 %v969, 12
      %v987 = vpop.permute.xlu0 %986
      %988 = vrot.lane.b32.xlu0 %v971, 12
      %v989 = vpop.permute.xlu0 %988
      %990 = vrot.lane.b32.xlu0 %v973, 12
      %v991 = vpop.permute.xlu0 %990
      %992 = vrot.lane.b32.xlu0 %v975, 12
      %v993 = vpop.permute.xlu0 %992
      %994 = vrot.lane.b32.xlu0 %v974, 12
      %v995 = vpop.permute.xlu0 %994
      %v997 = vunpack.c.l.b16 %v718
      %v998 = vpack.c.b16 %v997, %v946
      %vm999 = vsmask.f32 6400
      %v1001 = vshrl.u32 %v947, 16
      %v1003 = vrot.slane %v1001, 1
      %v1004 = vshll.u32 %v947, 16
      %v1006 = vrot.slane %v1004, 2
      %v1007 = vor.u32 %v1003, %v1006
      %v1009 = vshrl.u32 %v948, 16
      %v1011 = vrot.slane %v1009, 1
      %v1012 = vshll.u32 %v948, 16
      %v1014 = vrot.slane %v1012, 2
      %v1015 = vor.u32 %v1011, %v1014
      %v1016 = vsel %vm999, %v1007, %v1015
      %v1018 = vshrl.u32 %v949, 16
      %v1020 = vrot.slane %v1018, 1
      %v1021 = vshll.u32 %v949, 16
      %v1023 = vrot.slane %v1021, 2
      %v1024 = vor.u32 %v1020, %v1023
      %v1025 = vsel %vm999, %v1015, %v1024
      %v1027 = vshrl.u32 %v950, 16
      %v1029 = vrot.slane %v1027, 1
      %v1030 = vshll.u32 %v950, 16
      %v1032 = vrot.slane %v1030, 2
      %v1033 = vor.u32 %v1029, %v1032
      %v1034 = vsel %vm999, %v1024, %v1033
      %v1036 = vshrl.u32 %v951, 16
      %v1038 = vrot.slane %v1036, 1
      %v1039 = vshll.u32 %v951, 16
      %v1041 = vrot.slane %v1039, 2
      %v1042 = vor.u32 %v1038, %v1041
      %v1043 = vsel %vm999, %v1033, %v1042
      %v1045 = vshrl.u32 %v952, 16
      %v1047 = vrot.slane %v1045, 1
      %v1048 = vshll.u32 %v952, 16
      %v1050 = vrot.slane %v1048, 2
      %v1051 = vor.u32 %v1047, %v1050
      %v1052 = vsel %vm999, %v1042, %v1051
      %v1054 = vshrl.u32 %v953, 16
      %v1056 = vrot.slane %v1054, 1
      %v1057 = vshll.u32 %v953, 16
      %v1059 = vrot.slane %v1057, 2
      %v1060 = vor.u32 %v1056, %v1059
      %v1061 = vsel %vm999, %v1051, %v1060
      %v1063 = vshrl.u32 %v954, 16
      %v1065 = vrot.slane %v1063, 1
      %v1066 = vshll.u32 %v954, 16
      %v1068 = vrot.slane %v1066, 2
      %v1069 = vor.u32 %v1065, %v1068
      %v1070 = vsel %vm999, %v1060, %v1069
      %v1072 = vshrl.u32 %v955, 16
      %v1074 = vrot.slane %v1072, 1
      %v1075 = vshll.u32 %v955, 16
      %v1077 = vrot.slane %v1075, 2
      %v1078 = vor.u32 %v1074, %v1077
      %v1079 = vsel %vm999, %v1069, %v1078
      %v1081 = vshrl.u32 %v998, 16
      %v1083 = vrot.slane %v1081, 1
      %v1084 = vshll.u32 %v998, 16
      %v1086 = vrot.slane %v1084, 2
      %v1087 = vor.u32 %v1083, %v1086
      %v1088 = vsel %vm999, %v1078, %v1087
      %1089 = vrot.lane.b32.xlu0 %v1016, 20
      %v1090 = vpop.permute.xlu0 %1089
      %1091 = vrot.lane.b32.xlu0 %v1025, 20
      %v1092 = vpop.permute.xlu0 %1091
      %1093 = vrot.lane.b32.xlu0 %v1034, 20
      %v1094 = vpop.permute.xlu0 %1093
      %1095 = vrot.lane.b32.xlu0 %v1043, 20
      %v1096 = vpop.permute.xlu0 %1095
      %1097 = vrot.lane.b32.xlu0 %v1052, 20
      %v1098 = vpop.permute.xlu0 %1097
      %1099 = vrot.lane.b32.xlu0 %v1061, 20
      %v1100 = vpop.permute.xlu0 %1099
      %1101 = vrot.lane.b32.xlu0 %v1070, 20
      %v1102 = vpop.permute.xlu0 %1101
      %1103 = vrot.lane.b32.xlu0 %v1079, 20
      %v1104 = vpop.permute.xlu0 %1103
      %1105 = vrot.lane.b32.xlu0 %v1088, 20
      %v1106 = vpop.permute.xlu0 %1105
      %1107 = vrot.lane.b32.xlu0 %v1087, 20
      %v1108 = vpop.permute.xlu0 %1107
      %v1110 = vunpack.c.l.b16 %v719
      %v1111 = vpack.c.b16 %v750, %v1110
      %vm1112 = vcmask 1045504
      %v1113 = vrot.slane %v1111, 2
      %v1114 = vrot.slane %v948, 2
      %v1115 = vsel %vm1112, %v1113, %v1114
      %v1116 = vrot.slane %v949, 2
      %v1117 = vsel %vm1112, %v1114, %v1116
      %v1118 = vrot.slane %v950, 2
      %v1119 = vsel %vm1112, %v1116, %v1118
      %v1120 = vrot.slane %v951, 2
      %v1121 = vsel %vm1112, %v1118, %v1120
      %v1122 = vrot.slane %v952, 2
      %v1123 = vsel %vm1112, %v1120, %v1122
      %v1124 = vrot.slane %v953, 2
      %v1125 = vsel %vm1112, %v1122, %v1124
      %v1126 = vrot.slane %v954, 2
      %v1127 = vsel %vm1112, %v1124, %v1126
      %v1128 = vrot.slane %v955, 2
      %v1129 = vsel %vm1112, %v1126, %v1128
      %v1130 = vrot.slane %v998, 2
      %v1131 = vsel %vm1112, %v1128, %v1130
      %1132 = vrot.lane.b32.xlu0 %v1115, 28
      %v1133 = vpop.permute.xlu0 %1132
      %1134 = vrot.lane.b32.xlu0 %v1117, 28
      %v1135 = vpop.permute.xlu0 %1134
      %1136 = vrot.lane.b32.xlu0 %v1119, 28
      %v1137 = vpop.permute.xlu0 %1136
      %1138 = vrot.lane.b32.xlu0 %v1121, 28
      %v1139 = vpop.permute.xlu0 %1138
      %1140 = vrot.lane.b32.xlu0 %v1123, 28
      %v1141 = vpop.permute.xlu0 %1140
      %1142 = vrot.lane.b32.xlu0 %v1125, 28
      %v1143 = vpop.permute.xlu0 %1142
      %1144 = vrot.lane.b32.xlu0 %v1127, 28
      %v1145 = vpop.permute.xlu0 %1144
      %1146 = vrot.lane.b32.xlu0 %v1129, 28
      %v1147 = vpop.permute.xlu0 %1146
      %1148 = vrot.lane.b32.xlu0 %v1131, 28
      %v1149 = vpop.permute.xlu0 %1148
      %1150 = vrot.lane.b32.xlu0 %v1130, 28
      %v1151 = vpop.permute.xlu0 %1150
      %v1155 = vunpack.c.l.b16 %v720
      %v1156 = vunpack.c.l.b16 %v721
      %v1157 = vunpack.c.l.b16 %v722
      %v1158 = vpack.c.b16 %v751, %v1155
      %v1159 = vpack.c.b16 %v946, %v798
      %v1160 = vpack.c.b16 %v1157, %v1156
      %v1161 = vrot.slane %v1158, 2
      %v1162 = vrot.slane %v769, 2
      %v1163 = vsel %vm1112, %v1161, %v1162
      %v1164 = vrot.slane %v770, 2
      %v1165 = vsel %vm1112, %v1162, %v1164
      %v1166 = vrot.slane %v771, 2
      %v1167 = vsel %vm1112, %v1164, %v1166
      %v1168 = vrot.slane %v772, 2
      %v1169 = vsel %vm1112, %v1166, %v1168
      %v1170 = vrot.slane %v773, 2
      %v1171 = vsel %vm1112, %v1168, %v1170
      %v1172 = vrot.slane %v774, 2
      %v1173 = vsel %vm1112, %v1170, %v1172
      %v1174 = vrot.slane %v775, 2
      %v1175 = vsel %vm1112, %v1172, %v1174
      %v1176 = vrot.slane %v1159, 2
      %v1177 = vsel %vm1112, %v1174, %v1176
      %v1178 = vrot.slane %v1160, 2
      %v1179 = vsel %vm1112, %v1176, %v1178
      %1180 = vrot.lane.b32.xlu0 %v1163, 28
      %v1181 = vpop.permute.xlu0 %1180
      %1182 = vrot.lane.b32.xlu0 %v1165, 28
      %v1183 = vpop.permute.xlu0 %1182
      %1184 = vrot.lane.b32.xlu0 %v1167, 28
      %v1185 = vpop.permute.xlu0 %1184
      %1186 = vrot.lane.b32.xlu0 %v1169, 28
      %v1187 = vpop.permute.xlu0 %1186
      %1188 = vrot.lane.b32.xlu0 %v1171, 28
      %v1189 = vpop.permute.xlu0 %1188
      %1190 = vrot.lane.b32.xlu0 %v1173, 28
      %v1191 = vpop.permute.xlu0 %1190
      %1192 = vrot.lane.b32.xlu0 %v1175, 28
      %v1193 = vpop.permute.xlu0 %1192
      %1194 = vrot.lane.b32.xlu0 %v1177, 28
      %v1195 = vpop.permute.xlu0 %1194
      %1196 = vrot.lane.b32.xlu0 %v1179, 28
      %v1197 = vpop.permute.xlu0 %1196
      %1198 = vrot.lane.b32.xlu0 %v1178, 28
      %v1199 = vpop.permute.xlu0 %1198
      %v1201 = vunpack.c.l.b16 %v723
      %v1202 = vpack.c.b16 %v1201, %v1156
      %vm1203 = vsmask.f32 5376
      %v1205 = vshrl.u32 %v1158, 16
      %v1207 = vrot.slane %v1205, 2
      %v1208 = vshll.u32 %v1158, 16
      %v1210 = vrot.slane %v1208, 3
      %v1211 = vor.u32 %v1207, %v1210
      %v1212 = vrot.slane %v821, 2
      %v1213 = vrot.slane %v817, 3
      %v1214 = vor.u32 %v1212, %v1213
      %v1215 = vsel %vm1203, %v1211, %v1214
      %v1216 = vrot.slane %v829, 2
      %v1217 = vrot.slane %v825, 3
      %v1218 = vor.u32 %v1216, %v1217
      %v1219 = vsel %vm1203, %v1214, %v1218
      %v1220 = vrot.slane %v837, 2
      %v1221 = vrot.slane %v833, 3
      %v1222 = vor.u32 %v1220, %v1221
      %v1223 = vsel %vm1203, %v1218, %v1222
      %v1224 = vrot.slane %v845, 2
      %v1225 = vrot.slane %v841, 3
      %v1226 = vor.u32 %v1224, %v1225
      %v1227 = vsel %vm1203, %v1222, %v1226
      %v1228 = vrot.slane %v853, 2
      %v1229 = vrot.slane %v849, 3
      %v1230 = vor.u32 %v1228, %v1229
      %v1231 = vsel %vm1203, %v1226, %v1230
      %v1232 = vrot.slane %v861, 2
      %v1233 = vrot.slane %v857, 3
      %v1234 = vor.u32 %v1232, %v1233
      %v1235 = vsel %vm1203, %v1230, %v1234
      %v1236 = vrot.slane %v869, 2
      %v1237 = vrot.slane %v865, 3
      %v1238 = vor.u32 %v1236, %v1237
      %v1239 = vsel %vm1203, %v1234, %v1238
      %v1241 = vshrl.u32 %v1159, 16
      %v1243 = vrot.slane %v1241, 2
      %v1244 = vshll.u32 %v1159, 16
      %v1246 = vrot.slane %v1244, 3
      %v1247 = vor.u32 %v1243, %v1246
      %v1248 = vsel %vm1203, %v1238, %v1247
      %v1250 = vshrl.u32 %v1202, 16
      %v1252 = vrot.slane %v1250, 2
      %v1253 = vshll.u32 %v1202, 16
      %v1255 = vrot.slane %v1253, 3
      %v1256 = vor.u32 %v1252, %v1255
      %v1257 = vsel %vm1203, %v1247, %v1256
      %1258 = vrot.lane.b32.xlu0 %v1215, 36
      %v1259 = vpop.permute.xlu0 %1258
      %1260 = vrot.lane.b32.xlu0 %v1219, 36
      %v1261 = vpop.permute.xlu0 %1260
      %1262 = vrot.lane.b32.xlu0 %v1223, 36
      %v1263 = vpop.permute.xlu0 %1262
      %1264 = vrot.lane.b32.xlu0 %v1227, 36
      %v1265 = vpop.permute.xlu0 %1264
      %1266 = vrot.lane.b32.xlu0 %v1231, 36
      %v1267 = vpop.permute.xlu0 %1266
      %1268 = vrot.lane.b32.xlu0 %v1235, 36
      %v1269 = vpop.permute.xlu0 %1268
      %1270 = vrot.lane.b32.xlu0 %v1239, 36
      %v1271 = vpop.permute.xlu0 %1270
      %1272 = vrot.lane.b32.xlu0 %v1248, 36
      %v1273 = vpop.permute.xlu0 %1272
      %1274 = vrot.lane.b32.xlu0 %v1257, 36
      %v1275 = vpop.permute.xlu0 %1274
      %1276 = vrot.lane.b32.xlu0 %v1256, 36
      %v1277 = vpop.permute.xlu0 %1276
      %v1279 = vunpack.c.l.b16 %v724
      %v1280 = vpack.c.b16 %v751, %v1279
      %vm1281 = vcmask 1044480
      %v1282 = vrot.slane %v1280, 3
      %v1283 = vrot.slane %v769, 3
      %v1284 = vsel %vm1281, %v1282, %v1283
      %v1285 = vrot.slane %v770, 3
      %v1286 = vsel %vm1281, %v1283, %v1285
      %v1287 = vrot.slane %v771, 3
      %v1288 = vsel %vm1281, %v1285, %v1287
      %v1289 = vrot.slane %v772, 3
      %v1290 = vsel %vm1281, %v1287, %v1289
      %v1291 = vrot.slane %v773, 3
      %v1292 = vsel %vm1281, %v1289, %v1291
      %v1293 = vrot.slane %v774, 3
      %v1294 = vsel %vm1281, %v1291, %v1293
      %v1295 = vrot.slane %v775, 3
      %v1296 = vsel %vm1281, %v1293, %v1295
      %v1297 = vrot.slane %v1159, 3
      %v1298 = vsel %vm1281, %v1295, %v1297
      %v1299 = vrot.slane %v1202, 3
      %v1300 = vsel %vm1281, %v1297, %v1299
      %1301 = vrot.lane.b32.xlu0 %v1284, 44
      %v1302 = vpop.permute.xlu0 %1301
      %1303 = vrot.lane.b32.xlu0 %v1286, 44
      %v1304 = vpop.permute.xlu0 %1303
      %1305 = vrot.lane.b32.xlu0 %v1288, 44
      %v1306 = vpop.permute.xlu0 %1305
      %1307 = vrot.lane.b32.xlu0 %v1290, 44
      %v1308 = vpop.permute.xlu0 %1307
      %1309 = vrot.lane.b32.xlu0 %v1292, 44
      %v1310 = vpop.permute.xlu0 %1309
      %1311 = vrot.lane.b32.xlu0 %v1294, 44
      %v1312 = vpop.permute.xlu0 %1311
      %1313 = vrot.lane.b32.xlu0 %v1296, 44
      %v1314 = vpop.permute.xlu0 %1313
      %1315 = vrot.lane.b32.xlu0 %v1298, 44
      %v1316 = vpop.permute.xlu0 %1315
      %1317 = vrot.lane.b32.xlu0 %v1300, 44
      %v1318 = vpop.permute.xlu0 %1317
      %1319 = vrot.lane.b32.xlu0 %v1299, 44
      %v1320 = vpop.permute.xlu0 %1319
      %v1324 = vunpack.c.l.b16 %v725
      %v1325 = vunpack.c.l.b16 %v726
      %v1326 = vunpack.c.l.b16 %v727
      %v1327 = vpack.c.b16 %v752, %v1324
      %v1328 = vpack.c.b16 %v1156, %v946
      %v1329 = vpack.c.b16 %v1326, %v1325
      %v1330 = vrot.slane %v1327, 3
      %v1331 = vrot.slane %v949, 3
      %v1332 = vsel %vm1281, %v1330, %v1331
      %v1333 = vrot.slane %v950, 3
      %v1334 = vsel %vm1281, %v1331, %v1333
      %v1335 = vrot.slane %v951, 3
      %v1336 = vsel %vm1281, %v1333, %v1335
      %v1337 = vrot.slane %v952, 3
      %v1338 = vsel %vm1281, %v1335, %v1337
      %v1339 = vrot.slane %v953, 3
      %v1340 = vsel %vm1281, %v1337, %v1339
      %v1341 = vrot.slane %v954, 3
      %v1342 = vsel %vm1281, %v1339, %v1341
      %v1343 = vrot.slane %v955, 3
      %v1344 = vsel %vm1281, %v1341, %v1343
      %v1345 = vrot.slane %v1328, 3
      %v1346 = vsel %vm1281, %v1343, %v1345
      %v1347 = vrot.slane %v1329, 3
      %v1348 = vsel %vm1281, %v1345, %v1347
      %1349 = vrot.lane.b32.xlu0 %v1332, 44
      %v1350 = vpop.permute.xlu0 %1349
      %1351 = vrot.lane.b32.xlu0 %v1334, 44
      %v1352 = vpop.permute.xlu0 %1351
      %1353 = vrot.lane.b32.xlu0 %v1336, 44
      %v1354 = vpop.permute.xlu0 %1353
      %1355 = vrot.lane.b32.xlu0 %v1338, 44
      %v1356 = vpop.permute.xlu0 %1355
      %1357 = vrot.lane.b32.xlu0 %v1340, 44
      %v1358 = vpop.permute.xlu0 %1357
      %1359 = vrot.lane.b32.xlu0 %v1342, 44
      %v1360 = vpop.permute.xlu0 %1359
      %1361 = vrot.lane.b32.xlu0 %v1344, 44
      %v1362 = vpop.permute.xlu0 %1361
      %1363 = vrot.lane.b32.xlu0 %v1346, 44
      %v1364 = vpop.permute.xlu0 %1363
      %1365 = vrot.lane.b32.xlu0 %v1348, 44
      %v1366 = vpop.permute.xlu0 %1365
      %1367 = vrot.lane.b32.xlu0 %v1347, 44
      %v1368 = vpop.permute.xlu0 %1367
      %v1370 = vunpack.c.l.b16 %v728
      %v1371 = vpack.c.b16 %v1370, %v1325
      %vm1372 = vsmask.f32 4352
      %v1374 = vshrl.u32 %v1327, 16
      %v1376 = vrot.slane %v1374, 3
      %v1377 = vshll.u32 %v1327, 16
      %v1379 = vrot.slane %v1377, 4
      %v1380 = vor.u32 %v1376, %v1379
      %v1381 = vrot.slane %v1018, 3
      %v1382 = vrot.slane %v1021, 4
      %v1383 = vor.u32 %v1381, %v1382
      %v1384 = vsel %vm1372, %v1380, %v1383
      %v1385 = vrot.slane %v1027, 3
      %v1386 = vrot.slane %v1030, 4
      %v1387 = vor.u32 %v1385, %v1386
      %v1388 = vsel %vm1372, %v1383, %v1387
      %v1389 = vrot.slane %v1036, 3
      %v1390 = vrot.slane %v1039, 4
      %v1391 = vor.u32 %v1389, %v1390
      %v1392 = vsel %vm1372, %v1387, %v1391
      %v1393 = vrot.slane %v1045, 3
      %v1394 = vrot.slane %v1048, 4
      %v1395 = vor.u32 %v1393, %v1394
      %v1396 = vsel %vm1372, %v1391, %v1395
      %v1397 = vrot.slane %v1054, 3
      %v1398 = vrot.slane %v1057, 4
      %v1399 = vor.u32 %v1397, %v1398
      %v1400 = vsel %vm1372, %v1395, %v1399
      %v1401 = vrot.slane %v1063, 3
      %v1402 = vrot.slane %v1066, 4
      %v1403 = vor.u32 %v1401, %v1402
      %v1404 = vsel %vm1372, %v1399, %v1403
      %v1405 = vrot.slane %v1072, 3
      %v1406 = vrot.slane %v1075, 4
      %v1407 = vor.u32 %v1405, %v1406
      %v1408 = vsel %vm1372, %v1403, %v1407
      %v1410 = vshrl.u32 %v1328, 16
      %v1412 = vrot.slane %v1410, 3
      %v1413 = vshll.u32 %v1328, 16
      %v1415 = vrot.slane %v1413, 4
      %v1416 = vor.u32 %v1412, %v1415
      %v1417 = vsel %vm1372, %v1407, %v1416
      %v1419 = vshrl.u32 %v1371, 16
      %v1421 = vrot.slane %v1419, 3
      %v1422 = vshll.u32 %v1371, 16
      %v1424 = vrot.slane %v1422, 4
      %v1425 = vor.u32 %v1421, %v1424
      %v1426 = vsel %vm1372, %v1416, %v1425
      %1427 = vrot.lane.b32.xlu0 %v1384, 52
      %v1428 = vpop.permute.xlu0 %1427
      %1429 = vrot.lane.b32.xlu0 %v1388, 52
      %v1430 = vpop.permute.xlu0 %1429
      %1431 = vrot.lane.b32.xlu0 %v1392, 52
      %v1432 = vpop.permute.xlu0 %1431
      %1433 = vrot.lane.b32.xlu0 %v1396, 52
      %v1434 = vpop.permute.xlu0 %1433
      %1435 = vrot.lane.b32.xlu0 %v1400, 52
      %v1436 = vpop.permute.xlu0 %1435
      %1437 = vrot.lane.b32.xlu0 %v1404, 52
      %v1438 = vpop.permute.xlu0 %1437
      %1439 = vrot.lane.b32.xlu0 %v1408, 52
      %v1440 = vpop.permute.xlu0 %1439
      %1441 = vrot.lane.b32.xlu0 %v1417, 52
      %v1442 = vpop.permute.xlu0 %1441
      %1443 = vrot.lane.b32.xlu0 %v1426, 52
      %v1444 = vpop.permute.xlu0 %1443
      %1445 = vrot.lane.b32.xlu0 %v1425, 52
      %v1446 = vpop.permute.xlu0 %1445
      %v1447 = vpack.c.b16 %v1325, %v1156
      %v1448 = vpack.c.b16 %v1370, %v1370
      %1449 = vrot.lane.b32.xlu0 %v769, 60
      %v1450 = vpop.permute.xlu0 %1449
      %1451 = vrot.lane.b32.xlu0 %v770, 60
      %v1452 = vpop.permute.xlu0 %1451
      %1453 = vrot.lane.b32.xlu0 %v771, 60
      %v1454 = vpop.permute.xlu0 %1453
      %1455 = vrot.lane.b32.xlu0 %v772, 60
      %v1456 = vpop.permute.xlu0 %1455
      %1457 = vrot.lane.b32.xlu0 %v773, 60
      %v1458 = vpop.permute.xlu0 %1457
      %1459 = vrot.lane.b32.xlu0 %v774, 60
      %v1460 = vpop.permute.xlu0 %1459
      %1461 = vrot.lane.b32.xlu0 %v775, 60
      %v1462 = vpop.permute.xlu0 %1461
      %1463 = vrot.lane.b32.xlu0 %v1159, 60
      %v1464 = vpop.permute.xlu0 %1463
      %1465 = vrot.lane.b32.xlu0 %v1447, 60
      %v1466 = vpop.permute.xlu0 %1465
      %1467 = vrot.lane.b32.xlu0 %v1448, 60
      %v1468 = vpop.permute.xlu0 %1467
      %vm1469 = vcmask 31744
      %v1472 = vsel %vm1469, %v778, %v881
      %v1475 = vsel %vm1469, %v780, %v883
      %v1478 = vsel %vm1469, %v782, %v885
      %v1481 = vsel %vm1469, %v784, %v887
      %v1484 = vsel %vm1469, %v786, %v889
      %v1487 = vsel %vm1469, %v788, %v891
      %v1490 = vsel %vm1469, %v790, %v893
      %v1493 = vsel %vm1469, %v792, %v895
      %v1496 = vsel %vm1469, %v794, %v897
      %v1499 = vsel %vm1469, %v796, %v899
      %vm1500 = vcmask 64512
      %v1501 = vsel %vm1500, %v1472, %v881
      %v1502 = vsel %vm1500, %v1475, %v883
      %v1503 = vsel %vm1500, %v1478, %v885
      %v1504 = vsel %vm1500, %v1481, %v887
      %v1505 = vsel %vm1500, %v1484, %v889
      %v1506 = vsel %vm1500, %v1487, %v891
      %v1507 = vsel %vm1500, %v1490, %v893
      %v1508 = vsel %vm1500, %v1493, %v895
      %v1509 = vsel %vm1500, %v1496, %v897
      %v1510 = vsel %vm1500, %v1499, %v899
      %vm1511 = vcmask 97280
      %v1513 = vsel %vm1511, %v1501, %v924
      %v1515 = vsel %vm1511, %v1502, %v926
      %v1517 = vsel %vm1511, %v1503, %v928
      %v1519 = vsel %vm1511, %v1504, %v930
      %v1521 = vsel %vm1511, %v1505, %v932
      %v1523 = vsel %vm1511, %v1506, %v934
      %v1525 = vsel %vm1511, %v1507, %v936
      %v1527 = vsel %vm1511, %v1508, %v938
      %v1529 = vsel %vm1511, %v1509, %v940
      %v1531 = vsel %vm1511, %v1510, %v942
      %vm1532 = vcmask 130048
      %v1534 = vsel %vm1532, %v1513, %v977
      %v1536 = vsel %vm1532, %v1515, %v979
      %v1538 = vsel %vm1532, %v1517, %v981
      %v1540 = vsel %vm1532, %v1519, %v983
      %v1542 = vsel %vm1532, %v1521, %v985
      %v1544 = vsel %vm1532, %v1523, %v987
      %v1546 = vsel %vm1532, %v1525, %v989
      %v1548 = vsel %vm1532, %v1527, %v991
      %v1550 = vsel %vm1532, %v1529, %v993
      %v1552 = vsel %vm1532, %v1531, %v995
      %vm1553 = vcmask 162816
      %v1555 = vsel %vm1553, %v1534, %v1090
      %v1557 = vsel %vm1553, %v1536, %v1092
      %v1559 = vsel %vm1553, %v1538, %v1094
      %v1561 = vsel %vm1553, %v1540, %v1096
      %v1563 = vsel %vm1553, %v1542, %v1098
      %v1565 = vsel %vm1553, %v1544, %v1100
      %v1567 = vsel %vm1553, %v1546, %v1102
      %v1569 = vsel %vm1553, %v1548, %v1104
      %v1571 = vsel %vm1553, %v1550, %v1106
      %v1573 = vsel %vm1553, %v1552, %v1108
      %vm1574 = vcmask 195584
      %v1575 = vsel %vm1574, %v1555, %v1090
      %v1576 = vsel %vm1574, %v1557, %v1092
      %v1577 = vsel %vm1574, %v1559, %v1094
      %v1578 = vsel %vm1574, %v1561, %v1096
      %v1579 = vsel %vm1574, %v1563, %v1098
      %v1580 = vsel %vm1574, %v1565, %v1100
      %v1581 = vsel %vm1574, %v1567, %v1102
      %v1582 = vsel %vm1574, %v1569, %v1104
      %v1583 = vsel %vm1574, %v1571, %v1106
      %v1584 = vsel %vm1574, %v1573, %v1108
      %vm1585 = vcmask 228352
      %v1587 = vsel %vm1585, %v1575, %v1133
      %v1589 = vsel %vm1585, %v1576, %v1135
      %v1591 = vsel %vm1585, %v1577, %v1137
      %v1593 = vsel %vm1585, %v1578, %v1139
      %v1595 = vsel %vm1585, %v1579, %v1141
      %v1597 = vsel %vm1585, %v1580, %v1143
      %v1599 = vsel %vm1585, %v1581, %v1145
      %v1601 = vsel %vm1585, %v1582, %v1147
      %v1603 = vsel %vm1585, %v1583, %v1149
      %v1605 = vsel %vm1585, %v1584, %v1151
      %vm1606 = vcmask 261120
      %v1608 = vsel %vm1606, %v1587, %v1181
      %v1610 = vsel %vm1606, %v1589, %v1183
      %v1612 = vsel %vm1606, %v1591, %v1185
      %v1614 = vsel %vm1606, %v1593, %v1187
      %v1616 = vsel %vm1606, %v1595, %v1189
      %v1618 = vsel %vm1606, %v1597, %v1191
      %v1620 = vsel %vm1606, %v1599, %v1193
      %v1622 = vsel %vm1606, %v1601, %v1195
      %v1624 = vsel %vm1606, %v1603, %v1197
      %v1626 = vsel %vm1606, %v1605, %v1199
      %vm1627 = vcmask 293888
      %v1629 = vsel %vm1627, %v1608, %v1259
      %v1631 = vsel %vm1627, %v1610, %v1261
      %v1633 = vsel %vm1627, %v1612, %v1263
      %v1635 = vsel %vm1627, %v1614, %v1265
      %v1637 = vsel %vm1627, %v1616, %v1267
      %v1639 = vsel %vm1627, %v1618, %v1269
      %v1641 = vsel %vm1627, %v1620, %v1271
      %v1643 = vsel %vm1627, %v1622, %v1273
      %v1645 = vsel %vm1627, %v1624, %v1275
      %v1647 = vsel %vm1627, %v1626, %v1277
      %vm1648 = vcmask 326656
      %v1649 = vsel %vm1648, %v1629, %v1259
      %v1650 = vsel %vm1648, %v1631, %v1261
      %v1651 = vsel %vm1648, %v1633, %v1263
      %v1652 = vsel %vm1648, %v1635, %v1265
      %v1653 = vsel %vm1648, %v1637, %v1267
      %v1654 = vsel %vm1648, %v1639, %v1269
      %v1655 = vsel %vm1648, %v1641, %v1271
      %v1656 = vsel %vm1648, %v1643, %v1273
      %v1657 = vsel %vm1648, %v1645, %v1275
      %v1658 = vsel %vm1648, %v1647, %v1277
      %vm1659 = vcmask 359424
      %v1661 = vsel %vm1659, %v1649, %v1302
      %v1663 = vsel %vm1659, %v1650, %v1304
      %v1665 = vsel %vm1659, %v1651, %v1306
      %v1667 = vsel %vm1659, %v1652, %v1308
      %v1669 = vsel %vm1659, %v1653, %v1310
      %v1671 = vsel %vm1659, %v1654, %v1312
      %v1673 = vsel %vm1659, %v1655, %v1314
      %v1675 = vsel %vm1659, %v1656, %v1316
      %v1677 = vsel %vm1659, %v1657, %v1318
      %v1679 = vsel %vm1659, %v1658, %v1320
      %vm1680 = vcmask 392192
      %v1682 = vsel %vm1680, %v1661, %v1350
      %v1684 = vsel %vm1680, %v1663, %v1352
      %v1686 = vsel %vm1680, %v1665, %v1354
      %v1688 = vsel %vm1680, %v1667, %v1356
      %v1690 = vsel %vm1680, %v1669, %v1358
      %v1692 = vsel %vm1680, %v1671, %v1360
      %v1694 = vsel %vm1680, %v1673, %v1362
      %v1696 = vsel %vm1680, %v1675, %v1364
      %v1698 = vsel %vm1680, %v1677, %v1366
      %v1700 = vsel %vm1680, %v1679, %v1368
      %vm1701 = vcmask 424960
      %v1703 = vsel %vm1701, %v1682, %v1428
      %v1705 = vsel %vm1701, %v1684, %v1430
      %v1707 = vsel %vm1701, %v1686, %v1432
      %v1709 = vsel %vm1701, %v1688, %v1434
      %v1711 = vsel %vm1701, %v1690, %v1436
      %v1713 = vsel %vm1701, %v1692, %v1438
      %v1715 = vsel %vm1701, %v1694, %v1440
      %v1717 = vsel %vm1701, %v1696, %v1442
      %v1719 = vsel %vm1701, %v1698, %v1444
      %v1721 = vsel %vm1701, %v1700, %v1446
      %vm1722 = vcmask 457728
      %v1723 = vsel %vm1722, %v1703, %v1428
      %v1724 = vsel %vm1722, %v1705, %v1430
      %v1725 = vsel %vm1722, %v1707, %v1432
      %v1726 = vsel %vm1722, %v1709, %v1434
      %v1727 = vsel %vm1722, %v1711, %v1436
      %v1728 = vsel %vm1722, %v1713, %v1438
      %v1729 = vsel %vm1722, %v1715, %v1440
      %v1730 = vsel %vm1722, %v1717, %v1442
      %v1731 = vsel %vm1722, %v1719, %v1444
      %v1732 = vsel %vm1722, %v1721, %v1446
      %vm1733 = vcmask 490496
      %v1735 = vsel %vm1733, %v1723, %v1450
      %v1737 = vsel %vm1733, %v1724, %v1452
      %v1739 = vsel %vm1733, %v1725, %v1454
      %v1741 = vsel %vm1733, %v1726, %v1456
      %v1743 = vsel %vm1733, %v1727, %v1458
      %v1745 = vsel %vm1733, %v1728, %v1460
      %v1747 = vsel %vm1733, %v1729, %v1462
      %v1749 = vsel %vm1733, %v1730, %v1464
      %v1751 = vsel %vm1733, %v1731, %v1466
      %v1753 = vsel %vm1733, %v1732, %v1468
      %vm1754 = vcmask 523264
      %v1756 = vsel %vm1754, %v1735, 0
      %v1758 = vsel %vm1754, %v1737, 0
      %v1760 = vsel %vm1754, %v1739, 0
      %v1762 = vsel %vm1754, %v1741, 0
      %v1764 = vsel %vm1754, %v1743, 0
      %v1766 = vsel %vm1754, %v1745, 0
      %v1768 = vsel %vm1754, %v1747, 0
      %v1770 = vsel %vm1754, %v1749, 0
      %v1772 = vsel %vm1754, %v1751, 0
      %v1774 = vsel %vm1754, %v1753, 0
      %v1776 = vld [vmem:[%s1] sm:$0xf]
      %v1777 = vld [vmem:[%s1 + $0x4] sm:$0xf]
      %v1778 = vld [vmem:[%s1 + $0x8] sm:$0xf]
      %v1779 = vld [vmem:[%s1 + $0xc] sm:$0xf]
      %v1780 = vld [vmem:[%s1 + $0x10] sm:$0xf]
      %v1781 = vld [vmem:[%s1 + $0x14] sm:$0xf]
      %v1782 = vld [vmem:[%s1 + $0x18] sm:$0xf]
      %v1783 = vld [vmem:[%s1 + $0x1c] sm:$0xf]
      %v1784 = vld [vmem:[%s1 + $0x20] sm:$0xf]
      %v1785 = vld [vmem:[%s1 + $0x24] sm:$0xf]
      %v1786 = vld [vmem:[%s1 + $0x28] sm:$0xf]
      %v1787 = vld [vmem:[%s1 + $0x2c] sm:$0xf]
      %v1788 = vld [vmem:[%s1 + $0x30] sm:$0xf]
      %v1789 = vld [vmem:[%s1 + $0x34] sm:$0xf]
      %v1790 = vld [vmem:[%s1 + $0x38] sm:$0xf]
      %v1791 = vld [vmem:[%s1 + $0x3c] sm:$0xf]
      %v1792 = vld [vmem:[%s2] sm:$0x1]
      %v1794 = vlaneseq
      %v1795 = vshrl.u32 %v1794, 7
      %v1796 = vsub.s32 0, %v1795
      %v1797 = vrot.slane %v1792, %v1796
      %v1815 = vunpack.c.l.b16 %v1776
      %v1816 = vunpack.c.l.b16 %v1777
      %v1817 = vunpack.c.l.b16 %v1778
      %v1818 = vunpack.c.l.b16 %v1779
      %v1819 = vunpack.c.l.b16 %v1780
      %v1820 = vunpack.c.l.b16 %v1781
      %v1821 = vunpack.c.l.b16 %v1782
      %v1822 = vunpack.c.l.b16 %v1783
      %v1823 = vunpack.c.l.b16 %v1784
      %v1824 = vunpack.c.l.b16 %v1785
      %v1825 = vunpack.c.l.b16 %v1786
      %v1826 = vunpack.c.l.b16 %v1787
      %v1827 = vunpack.c.l.b16 %v1788
      %v1828 = vunpack.c.l.b16 %v1789
      %v1829 = vunpack.c.l.b16 %v1790
      %v1830 = vunpack.c.l.b16 %v1791
      %v1831 = vpack.c.b16 %v1816, %v1815
      %v1832 = vpack.c.b16 %v1818, %v1817
      %v1833 = vpack.c.b16 %v1820, %v1819
      %v1834 = vpack.c.b16 %v1822, %v1821
      %v1835 = vpack.c.b16 %v1824, %v1823
      %v1836 = vpack.c.b16 %v1826, %v1825
      %v1837 = vpack.c.b16 %v1828, %v1827
      %v1838 = vpack.c.b16 %v1830, %v1829
      %1847 = vmatprep.subr.bf16.mxu0 0
      %1848 = vmatpush1.bf16.msra.mxu0 %v1838
      %1849 = vmatprep.subr.bf16.mxu0 0
      %1850 = vmatpush1.bf16.msra.mxu0 %v1837
      %1851 = vmatprep.subr.bf16.mxu0 0
      %1852 = vmatpush1.bf16.msra.mxu0 %v1836
      %1853 = vmatprep.subr.bf16.mxu0 0
      %1854 = vmatpush1.bf16.msra.mxu0 %v1835
      %1855 = vmatprep.subr.bf16.mxu0 0
      %1856 = vmatpush1.bf16.msra.mxu0 %v1834
      %1857 = vmatprep.subr.bf16.mxu0 0
      %1858 = vmatpush1.bf16.msra.mxu0 %v1833
      %1859 = vmatprep.subr.bf16.mxu0 0
      %1860 = vmatpush1.bf16.msra.mxu0 %v1832
      %1861 = vmatprep.subr.bf16.mxu0 0
      %1862 = vmatpush1.bf16.msra.mxu0 %v1831
      %1863 = vmatprep.subr.bf16.mxu0 0
      %1864 = vmatpush2.bf16.msra.mxu0 0
      %1865 = vmatprep.subr.bf16.mxu0 0
      %1866 = vmatpush2.bf16.msra.mxu0 0
      %1867 = vmatprep.subr.bf16.mxu0 0
      %1868 = vmatpush2.bf16.msra.mxu0 0
      %1869 = vmatprep.subr.bf16.mxu0 0
      %1870 = vmatpush2.bf16.msra.mxu0 0
      %1871 = vmatprep.subr.bf16.mxu0 0
      %1872 = vmatpush2.bf16.msra.mxu0 0
      %1873 = vmatprep.subr.bf16.mxu0 0
      %1874 = vmatpush2.bf16.msra.mxu0 0
      %1875 = vmatprep.subr.bf16.mxu0 0
      %1876 = vmatpush2.bf16.msra.mxu0 0
      %1877 = vmatprep.subr.bf16.mxu0 0
      %1878 = vmatpush2.bf16.msra.mxu0 0
      %1879 = vmatprep.mubr.bf16.mxu0 0
      %1880 = vmatmul.mubr.bf16.gmra.mxu0 %v1756
      %v1881 = vpop.f32.mrf.mxu0
      %v1882 = vadd.f32 %v1797, %v1881
      %v1883 = vpop.f32.mrf.mxu0
      %v1884 = vpop.f32.mrf.mxu0
      %v1885 = vadd.f32 %v1797, %v1884
      %v1886 = vpop.f32.mrf.mxu0
      %1887 = vmatprep.mubr.bf16.mxu0 0
      %1888 = vmatmul.mubr.bf16.gmra.mxu0 %v1758
      %v1889 = vpop.f32.mrf.mxu0
      %v1890 = vadd.f32 %v1797, %v1889
      %v1891 = vpop.f32.mrf.mxu0
      %v1892 = vpop.f32.mrf.mxu0
      %v1893 = vadd.f32 %v1797, %v1892
      %v1894 = vpop.f32.mrf.mxu0
      %1895 = vmatprep.mubr.bf16.mxu0 0
      %1896 = vmatmul.mubr.bf16.gmra.mxu0 %v1760
      %v1897 = vpop.f32.mrf.mxu0
      %v1898 = vadd.f32 %v1797, %v1897
      %v1899 = vpop.f32.mrf.mxu0
      %v1900 = vpop.f32.mrf.mxu0
      %v1901 = vadd.f32 %v1797, %v1900
      %v1902 = vpop.f32.mrf.mxu0
      %1903 = vmatprep.mubr.bf16.mxu0 0
      %1904 = vmatmul.mubr.bf16.gmra.mxu0 %v1762
      %v1905 = vpop.f32.mrf.mxu0
      %v1906 = vadd.f32 %v1797, %v1905
      %v1907 = vpop.f32.mrf.mxu0
      %v1908 = vpop.f32.mrf.mxu0
      %v1909 = vadd.f32 %v1797, %v1908
      %v1910 = vpop.f32.mrf.mxu0
      %1911 = vmatprep.mubr.bf16.mxu0 0
      %1912 = vmatmul.mubr.bf16.gmra.mxu0 %v1764
      %v1913 = vpop.f32.mrf.mxu0
      %v1914 = vadd.f32 %v1797, %v1913
      %v1915 = vpop.f32.mrf.mxu0
      %v1916 = vpop.f32.mrf.mxu0
      %v1917 = vadd.f32 %v1797, %v1916
      %v1918 = vpop.f32.mrf.mxu0
      %1919 = vmatprep.mubr.bf16.mxu0 0
      %1920 = vmatmul.mubr.bf16.gmra.mxu0 %v1766
      %v1921 = vpop.f32.mrf.mxu0
      %v1922 = vadd.f32 %v1797, %v1921
      %v1923 = vpop.f32.mrf.mxu0
      %v1924 = vpop.f32.mrf.mxu0
      %v1925 = vadd.f32 %v1797, %v1924
      %v1926 = vpop.f32.mrf.mxu0
      %1927 = vmatprep.mubr.bf16.mxu0 0
      %1928 = vmatmul.mubr.bf16.gmra.mxu0 %v1768
      %v1929 = vpop.f32.mrf.mxu0
      %v1930 = vadd.f32 %v1797, %v1929
      %v1931 = vpop.f32.mrf.mxu0
      %v1932 = vpop.f32.mrf.mxu0
      %v1933 = vadd.f32 %v1797, %v1932
      %v1934 = vpop.f32.mrf.mxu0
      %1935 = vmatprep.mubr.bf16.mxu0 0
      %1936 = vmatmul.mubr.bf16.gmra.mxu0 %v1770
      %v1937 = vpop.f32.mrf.mxu0
      %v1938 = vadd.f32 %v1797, %v1937
      %v1939 = vpop.f32.mrf.mxu0
      %v1940 = vpop.f32.mrf.mxu0
      %v1941 = vadd.f32 %v1797, %v1940
      %v1942 = vpop.f32.mrf.mxu0
      %1943 = vmatprep.mubr.bf16.mxu0 0
      %1944 = vmatmul.mubr.bf16.gmra.mxu0 %v1772
      %v1945 = vpop.f32.mrf.mxu0
      %v1946 = vadd.f32 %v1797, %v1945
      %v1947 = vpop.f32.mrf.mxu0
      %v1948 = vpop.f32.mrf.mxu0
      %v1949 = vadd.f32 %v1797, %v1948
      %v1950 = vpop.f32.mrf.mxu0
      %1951 = vmatprep.mubr.bf16.mxu0 0
      %1952 = vmatmul.mubr.bf16.gmra.mxu0 %v1774
      %v1953 = vpop.f32.mrf.mxu0
      %v1954 = vadd.f32 %v1797, %v1953
      %v1955 = vpop.f32.mrf.mxu0
      %v1956 = vpop.f32.mrf.mxu0
      %v1957 = vpop.f32.mrf.mxu0
      %1958 = vdwg.mxu0
      %1959 = vst [vmem:[%s170] sm:$0xff] %v1882
      %1960 = vst [vmem:[%s170 + $0x8] sm:$0xff] %v1885
      %1961 = vst [vmem:[%s170 + $0x10] sm:$0xff] %v1890
      %1962 = vst [vmem:[%s170 + $0x18] sm:$0xff] %v1893
      %1963 = vst [vmem:[%s170 + $0x20] sm:$0xff] %v1898
      %1964 = vst [vmem:[%s170 + $0x28] sm:$0xff] %v1901
      %1965 = vst [vmem:[%s170 + $0x30] sm:$0xff] %v1906
      %1966 = vst [vmem:[%s170 + $0x38] sm:$0xff] %v1909
      %1967 = vst [vmem:[%s170 + $0x40] sm:$0xff] %v1914
      %1968 = vst [vmem:[%s170 + $0x48] sm:$0xff] %v1917
      %1969 = vst [vmem:[%s170 + $0x50] sm:$0xff] %v1922
      %1970 = vst [vmem:[%s170 + $0x58] sm:$0xff] %v1925
      %1971 = vst [vmem:[%s170 + $0x60] sm:$0xff] %v1930
      %1972 = vst [vmem:[%s170 + $0x68] sm:$0xff] %v1933
      %1973 = vst [vmem:[%s170 + $0x70] sm:$0xff] %v1938
      %1974 = vst [vmem:[%s170 + $0x78] sm:$0xff] %v1941
      %1975 = vst [vmem:[%s170 + $0x80] sm:$0xff] %v1946
      %1976 = vst [vmem:[%s170 + $0x88] sm:$0xff] %v1949
      %1977 = vst [vmem:[%s170 + $0x90] sm:$0x3f] %v1954
      %p1978 = scmp.lt.s32.totalorder %s14, 1
      %s1979 = scalar_select %p1978, %s14, 1
      %s1980 = smul.addr %s1979, 19
      %s1981 = smul.addr %s1980, 8
      %s1982 = scalar_lea.vmem %s3, %s1981
      // Predicated region
      $region33: #{forward.3} parent=31 // pred_check
        %p1983 = pneg %p100
      $region34: #{forward.3} parent=31 // pred_check_branch
        %1985 = sbr.rel (%p1983) target = $region36
      $region35: #{forward.3} parent=31 // pred_region
        _
      $region36: #{forward.3} parent=31 // pred_fallthru
        _
    $region32: #{forward.3} parent=5 // pred_fallthru
      _
    %p1986 = scmp.le.s32.totalorder 2, %s9
    // Predicated region
    $region37: #{forward.3} parent=5 // pred_check
      %p1987 = pneg %p1986
    $region38: #{forward.3} parent=5 // pred_check_branch
      %1989 = sbr.rel (%p1987) target = $region40
    $region39: #{forward.3} parent=5 // pred_region
      %s1990 = ssub.s32 %s9, 2
      // Predicated region
      $region41: #{forward.3} parent=39 // pred_check
        %p1991 = pneg %p106
      $region42: #{forward.3} parent=39 // pred_check_branch
        %1993 = sbr.rel (%p1991) target = $region44
      $region43: #{forward.3} parent=39 // pred_region
        %p1994 = scmp.lt.s32.totalorder %s15, 1
        %s1995 = scalar_select %p1994, %s15, 1
        %s1996 = smul.addr %s1995, 19
        %s1997 = smul.addr %s1996, 8
        %s1998 = scalar_lea.vmem %s3, %s1997
      $region44: #{forward.3} parent=39 // pred_fallthru
        _
    $region40: #{forward.3} parent=5 // pred_fallthru
      _
  $region6: #{forward.3} parent=0 // loop_footer
    %s13 = sadd.s32 1, %s9
  $region7: #{forward.3} parent=0 // loop_footer_branch
    %8 = sbr.rel target = $region3
  $region8: #{forward.3} parent=0 // loop_exit
    _

</llo_original>
